<compile_context>
chip_gen: v7x
topology: tpu7x:2x2x1
jax: 0.10.0
libtpu: 0.0.40
codegen_flags: <defaults>
</compile_context>

<pallas_src>
import math
import functools

import jax
import jax.numpy as jnp
from jax.experimental import pallas as pl
from jax.experimental.pallas import tpu as pltpu


# ----------------------------- in-kernel helpers -----------------------------

def _layernorm(h, eps=1e-5):
    """LayerNorm over the last dim, no affine params (matches F.layer_norm)."""
    mu = jnp.mean(h, axis=-1, keepdims=True)
    var = jnp.mean((h - mu) ** 2, axis=-1, keepdims=True)
    return (h - mu) * jax.lax.rsqrt(var + eps)


def _erf(x):
    # Abramowitz & Stegun 7.1.26 polynomial erf (|err| < 1.5e-7); exp and the approx
    # reciprocal both run on the EUP slot, keeping the VALU free.
    sgn = jnp.where(x >= 0.0, 1.0, -1.0)
    a = jnp.abs(x)
    t = pl.reciprocal(1.0 + 0.3275911 * a, approx=True)
    poly = t * (0.254829592 + t * (-0.284496736 + t * (1.421413741
               + t * (-1.453152027 + t * 1.061405429))))
    return sgn * (1.0 - poly * jnp.exp(-a * a))


def _gelu_exact(x):
    # PyTorch nn.GELU() default (erf-based, not tanh approximation).
    return 0.5 * x * (1.0 + _erf(x * (1.0 / math.sqrt(2.0))))


# --------------------------------- kernel ------------------------------------

def transformer_block_kernel(x_ref,
                             wq_ref, bq_ref, wk_ref, bk_ref, wv_ref, bv_ref,
                             wo_ref, bo_ref, w1_ref, b1_ref, w2_ref, b2_ref,
                             out_ref, *, batch, seq, num_heads, hidden_channels):
    B, S, NH, H = batch, seq, num_heads, hidden_channels
    x = x_ref[...]                                        # (B*S, C)  batch rows merged

    # ---- sub-block 1: LayerNorm -> multi-query self-attention -> residual ----
    h = _layernorm(x)
    # The 1/sqrt(H) softmax scale is pre-folded into wq/bq by the wrapper.
    q = jnp.dot(h, wq_ref[...], preferred_element_type=jnp.float32) + bq_ref[...]   # (B*S, NH*H)
    k = jnp.dot(h, wk_ref[...], preferred_element_type=jnp.float32) + bk_ref[...]   # (B*S, H)
    v = jnp.dot(h, wv_ref[...], preferred_element_type=jnp.float32) + bv_ref[...]   # (B*S, H)

    # Per-batch views: split only the leading (row) dim, lane layout untouched.
    q3 = q.reshape(B, S, NH * H)
    k3 = k.reshape(B, S, H)
    v3 = v.reshape(B, S, H)

    y = x + bo_ref[...]                                   # residual + out-projection bias
    for n in range(NH):                                   # static unroll over heads (MQA: shared k/v)
        qn = q3[:, :, n * H:(n + 1) * H]                  # (B, S, H) head slice (head-major columns)
        s = jnp.einsum('bsh,bth->bst', qn, k3,
                       preferred_element_type=jnp.float32)             # (B, S, S)
        s = s - jnp.max(s, axis=-1, keepdims=True)
        p = jnp.exp(s)
        p = p * pl.reciprocal(jnp.sum(p, axis=-1, keepdims=True), approx=True)
        ctx = jnp.einsum('bst,bth->bsh', p, v3,
                         preferred_element_type=jnp.float32)           # (B, S, H)
        # Fused per-head output projection: accumulate straight into the residual,
        # no lane-axis concat and no separate (NH*H, C) matmul afterwards.
        y = y + jnp.dot(ctx.reshape(B * S, H), wo_ref[n],
                        preferred_element_type=jnp.float32)            # (B*S, C)

    # ---- sub-block 2: LayerNorm -> MLP (Linear, GELU, Linear) -> residual ----
    h2 = _layernorm(y)
    m = jnp.dot(h2, w1_ref[...], preferred_element_type=jnp.float32) + b1_ref[...]  # (B*S, 2C)
    m = _gelu_exact(m)
    m = jnp.dot(m, w2_ref[...], preferred_element_type=jnp.float32) + b2_ref[...]   # (B*S, C)
    out_ref[...] = y + m


# --------------------------------- wrapper ------------------------------------

def baseline_transformer_block(x, params, num_heads, hidden_channels):
    """x: (B, S, C) float32.  params in PyTorch-semantics layout (see main)."""
    (wq, bq, wk, bk, wv, bv, wo, bo, w1, b1, w2, b2) = params
    B, S, C = x.shape
    NH, H = num_heads, hidden_channels

    # --- host-side weight preprocessing (trace-time constant folds, free at runtime) ---
    # (1) permute q columns from the einops '(hidden_channels num_heads)' grouping to
    #     head-major (head*H + hc) so per-head slices are lane-contiguous;
    # (2) fold the 1/sqrt(H) attention scale into wq/bq;
    # (3) expose wo as per-head (NH, H, C) slices (its rows are already head-major).
    scale = 1.0 / math.sqrt(H)
    wq_k = wq.reshape(C, H, NH).transpose(0, 2, 1).reshape(C, NH * H) * scale
    bq_k = bq.reshape(1, H, NH).transpose(0, 2, 1).reshape(1, NH * H) * scale
    wo_k = wo.reshape(NH, H, C)

    kernel_params = (wq_k, bq_k, wk, bk, wv, bv, wo_k, bo, w1, b1, w2, b2)

    # Merge batch into rows: one block, one grid step.
    x2 = x.reshape(B * S, C)

    def full_block(a):
        nd = a.ndim
        return pl.BlockSpec(a.shape, lambda i, _nd=nd: (0,) * _nd)

    kernel = functools.partial(transformer_block_kernel,
                               batch=B, seq=S, num_heads=NH, hidden_channels=H)

    out2 = pl.pallas_call(
        kernel,
        out_shape=jax.ShapeDtypeStruct((B * S, C), jnp.float32),
        grid=(1,),
        in_specs=[full_block(x2)] + [full_block(p) for p in kernel_params],
        out_specs=full_block(x2),
        compiler_params=pltpu.CompilerParams(dimension_semantics=("arbitrary",)),
    )(x2, *kernel_params)
    return out2.reshape(B, S, C)


# ------------------------------ pure-JAX reference ----------------------------

def reference(x, params, num_heads, hidden_channels):
    (wq, bq, wk, bk, wv, bv, wo, bo, w1, b1, w2, b2) = params
    B, S, C = x.shape
    NH, H = num_heads, hidden_channels

    def ln(h):
        mu = h.mean(-1, keepdims=True)
        var = ((h - mu) ** 2).mean(-1, keepdims=True)
        return (h - mu) / jnp.sqrt(var + 1e-5)

    h = ln(x)
    q = h @ wq + bq[0]                                   # (B, S, H*NH), (hc, head) grouping
    k = h @ wk + bk[0]                                   # (B, S, H)
    v = h @ wv + bv[0]                                   # (B, S, H)
    q = q.reshape(B, S, H, NH).transpose(0, 3, 1, 2)     # (B, NH, S, H)  (einops grouping)
    scores = jnp.einsum("bnsh,bth->bnst", q, k) / math.sqrt(H)
    p = jax.nn.softmax(scores, axis=-1)
    attn = jnp.einsum("bnst,bth->bnsh", p, v)            # (B, NH, S, H)
    attn = attn.transpose(0, 2, 1, 3).reshape(B, S, NH * H)  # (num_heads hidden) grouping
    y = x + attn @ wo + bo[0]

    h2 = ln(y)
    m = jax.nn.gelu(h2 @ w1 + b1[0], approximate=False)
    return y + m @ w2 + b2[0]


# ----------------------------------- main --------------------------------------

if __name__ == "__main__":
    B, S, C, NH = 2, 16, 32, 8
    H = C // NH                       # hidden_channels = channels // num_heads (defaults)

    key = jax.random.PRNGKey(0)
    ks = jax.random.split(key, 13)

    def w(k, shape, scale=0.05):
        return (scale * jax.random.normal(k, shape)).astype(jnp.float32)

    x = jax.random.normal(ks[0], (B, S, C), dtype=jnp.float32)

    # Deterministic synthetic parameters (biases kept 2D (1, N) for TPU layout).
    wq = w(ks[1], (C, NH * H)); bq = w(ks[2], (1, NH * H), 0.01)   # q_linear
    wk = w(ks[3], (C, H));      bk = w(ks[4], (1, H), 0.01)        # k_linear (multi-query)
    wv = w(ks[5], (C, H));      bv = w(ks[6], (1, H), 0.01)        # v_linear (multi-query)
    wo = w(ks[7], (NH * H, C)); bo = w(ks[8], (1, C), 0.01)        # out_linear
    w1 = w(ks[9], (C, 2 * C));  b1 = w(ks[10], (1, 2 * C), 0.01)   # mlp[0]
    w2 = w(ks[11], (2 * C, C)); b2 = w(ks[12], (1, C), 0.01)       # mlp[3]

    params = (wq, bq, wk, bk, wv, bv, wo, bo, w1, b1, w2, b2)

    out = baseline_transformer_block(x, params, NH, H)
    out = jax.block_until_ready(out)

    ref = reference(x, params, NH, H)
    assert out.shape == (B, S, C) and out.dtype == jnp.float32
    # Tolerance covers the approximate EUP reciprocal used in softmax / erf
    # (~2e-4 relative per element, <1e-3 after accumulation); everything else is f32.
    assert jnp.allclose(out, ref, atol=2e-3, rtol=2e-3), "kernel/reference mismatch"

    print("KERNEL_OK")
</pallas_src>

<mosaic_0001>
module attributes {stable_mosaic.version = 11 : i64} {
  func.func @transformer_block_kernel(%arg0: i32, %arg1: memref<32x32xf32, #tpu.memory_space<vmem>>, %arg2: memref<32x32xf32, #tpu.memory_space<vmem>>, %arg3: memref<1x32xf32, #tpu.memory_space<vmem>>, %arg4: memref<32x4xf32, #tpu.memory_space<vmem>>, %arg5: memref<1x4xf32, #tpu.memory_space<vmem>>, %arg6: memref<32x4xf32, #tpu.memory_space<vmem>>, %arg7: memref<1x4xf32, #tpu.memory_space<vmem>>, %arg8: memref<8x4x32xf32, #tpu.memory_space<vmem>>, %arg9: memref<1x32xf32, #tpu.memory_space<vmem>>, %arg10: memref<32x64xf32, #tpu.memory_space<vmem>>, %arg11: memref<1x64xf32, #tpu.memory_space<vmem>>, %arg12: memref<64x32xf32, #tpu.memory_space<vmem>>, %arg13: memref<1x32xf32, #tpu.memory_space<vmem>>, %arg14: memref<32x32xf32, #tpu.memory_space<vmem>>) attributes {dimension_semantics = [#tpu.dimension_semantics<arbitrary>], iteration_bounds = array<i64: 1>, scalar_prefetch = 0 : i64, scratch_operands = 0 : i64, tpu.core_type = #tpu.core_type<tc>, window_params = [{pipeline_mode = #tpu.pipeline_mode<synchronous>, transform_indices = @transform_0, window_bounds = array<i64: 32, 32>}, {pipeline_mode = #tpu.pipeline_mode<synchronous>, transform_indices = @transform_1, window_bounds = array<i64: 32, 32>}, {pipeline_mode = #tpu.pipeline_mode<synchronous>, transform_indices = @transform_2, window_bounds = array<i64: 1, 32>}, {pipeline_mode = #tpu.pipeline_mode<synchronous>, transform_indices = @transform_3, window_bounds = array<i64: 32, 4>}, {pipeline_mode = #tpu.pipeline_mode<synchronous>, transform_indices = @transform_4, window_bounds = array<i64: 1, 4>}, {pipeline_mode = #tpu.pipeline_mode<synchronous>, transform_indices = @transform_5, window_bounds = array<i64: 32, 4>}, {pipeline_mode = #tpu.pipeline_mode<synchronous>, transform_indices = @transform_6, window_bounds = array<i64: 1, 4>}, {pipeline_mode = #tpu.pipeline_mode<synchronous>, transform_indices = @transform_7, window_bounds = array<i64: 8, 4, 32>}, {pipeline_mode = #tpu.pipeline_mode<synchronous>, transform_indices = @transform_8, window_bounds = array<i64: 1, 32>}, {pipeline_mode = #tpu.pipeline_mode<synchronous>, transform_indices = @transform_9, window_bounds = array<i64: 32, 64>}, {pipeline_mode = #tpu.pipeline_mode<synchronous>, transform_indices = @transform_10, window_bounds = array<i64: 1, 64>}, {pipeline_mode = #tpu.pipeline_mode<synchronous>, transform_indices = @transform_11, window_bounds = array<i64: 64, 32>}, {pipeline_mode = #tpu.pipeline_mode<synchronous>, transform_indices = @transform_12, window_bounds = array<i64: 1, 32>}, {pipeline_mode = #tpu.pipeline_mode<synchronous>, transform_indices = @transform_13, window_bounds = array<i64: 32, 32>}]} {
    %c0 = arith.constant 0 : index
    %c0_0 = arith.constant 0 : index
    %0 = vector.load %arg1[%c0, %c0_0] : memref<32x32xf32, #tpu.memory_space<vmem>>, vector<32x32xf32>
    %cst = arith.constant dense<0.000000e+00> : vector<32xf32>
    %1 = vector.multi_reduction <add>, %0, %cst [1] : vector<32x32xf32> to vector<32xf32>
    %2 = vector.shape_cast %1 : vector<32xf32> to vector<32x1xf32>
    %cst_1 = arith.constant 3.200000e+01 : f32
    %3 = vector.broadcast %cst_1 : f32 to vector<32x1xf32>
    %4 = arith.divf %2, %3 : vector<32x1xf32>
    %5 = vector.broadcast %4 : vector<32x1xf32> to vector<32x32xf32>
    %6 = arith.subf %0, %5 : vector<32x32xf32>
    %7 = arith.mulf %6, %6 : vector<32x32xf32>
    %cst_2 = arith.constant dense<0.000000e+00> : vector<32xf32>
    %8 = vector.multi_reduction <add>, %7, %cst_2 [1] : vector<32x32xf32> to vector<32xf32>
    %9 = vector.shape_cast %8 : vector<32xf32> to vector<32x1xf32>
    %cst_3 = arith.constant 3.200000e+01 : f32
    %10 = vector.broadcast %cst_3 : f32 to vector<32x1xf32>
    %11 = arith.divf %9, %10 : vector<32x1xf32>
    %12 = vector.broadcast %4 : vector<32x1xf32> to vector<32x32xf32>
    %13 = arith.subf %0, %12 : vector<32x32xf32>
    %cst_4 = arith.constant 9.99999974E-6 : f32
    %14 = vector.broadcast %cst_4 : f32 to vector<32x1xf32>
    %15 = arith.addf %11, %14 : vector<32x1xf32>
    %16 = math.rsqrt %15 : vector<32x1xf32>
    %17 = vector.broadcast %16 : vector<32x1xf32> to vector<32x32xf32>
    %18 = arith.mulf %13, %17 : vector<32x32xf32>
    %c0_5 = arith.constant 0 : index
    %c0_6 = arith.constant 0 : index
    %19 = vector.load %arg2[%c0_5, %c0_6] : memref<32x32xf32, #tpu.memory_space<vmem>>, vector<32x32xf32>
    %cst_7 = arith.constant dense<0.000000e+00> : vector<32x32xf32>
    %20 = tpu.matmul %18, %19, %cst_7 {dimension_numbers = #tpu.dot_dimension_numbers<[1], [0], [0], [1], [0, 0, 1, 1], [], []>} : vector<32x32xf32>, vector<32x32xf32>, vector<32x32xf32> -> vector<32x32xf32>
    %c0_8 = arith.constant 0 : index
    %c0_9 = arith.constant 0 : index
    %21 = vector.load %arg3[%c0_8, %c0_9] : memref<1x32xf32, #tpu.memory_space<vmem>>, vector<1x32xf32>
    %22 = vector.broadcast %21 : vector<1x32xf32> to vector<32x32xf32>
    %23 = arith.addf %20, %22 : vector<32x32xf32>
    %c0_10 = arith.constant 0 : index
    %c0_11 = arith.constant 0 : index
    %24 = vector.load %arg4[%c0_10, %c0_11] : memref<32x4xf32, #tpu.memory_space<vmem>>, vector<32x4xf32>
    %cst_12 = arith.constant dense<0.000000e+00> : vector<32x4xf32>
    %25 = tpu.matmul %18, %24, %cst_12 {dimension_numbers = #tpu.dot_dimension_numbers<[1], [0], [0], [1], [0, 0, 1, 1], [], []>} : vector<32x32xf32>, vector<32x4xf32>, vector<32x4xf32> -> vector<32x4xf32>
    %c0_13 = arith.constant 0 : index
    %c0_14 = arith.constant 0 : index
    %26 = vector.load %arg5[%c0_13, %c0_14] : memref<1x4xf32, #tpu.memory_space<vmem>>, vector<1x4xf32>
    %27 = vector.broadcast %26 : vector<1x4xf32> to vector<32x4xf32>
    %28 = arith.addf %25, %27 : vector<32x4xf32>
    %c0_15 = arith.constant 0 : index
    %c0_16 = arith.constant 0 : index
    %29 = vector.load %arg6[%c0_15, %c0_16] : memref<32x4xf32, #tpu.memory_space<vmem>>, vector<32x4xf32>
    %cst_17 = arith.constant dense<0.000000e+00> : vector<32x4xf32>
    %30 = tpu.matmul %18, %29, %cst_17 {dimension_numbers = #tpu.dot_dimension_numbers<[1], [0], [0], [1], [0, 0, 1, 1], [], []>} : vector<32x32xf32>, vector<32x4xf32>, vector<32x4xf32> -> vector<32x4xf32>
    %c0_18 = arith.constant 0 : index
    %c0_19 = arith.constant 0 : index
    %31 = vector.load %arg7[%c0_18, %c0_19] : memref<1x4xf32, #tpu.memory_space<vmem>>, vector<1x4xf32>
    %32 = vector.broadcast %31 : vector<1x4xf32> to vector<32x4xf32>
    %33 = arith.addf %30, %32 : vector<32x4xf32>
    %34 = vector.shape_cast %23 : vector<32x32xf32> to vector<2x16x32xf32>
    %35 = vector.shape_cast %28 : vector<32x4xf32> to vector<2x16x4xf32>
    %36 = vector.shape_cast %33 : vector<32x4xf32> to vector<2x16x4xf32>
    %c0_20 = arith.constant 0 : index
    %c0_21 = arith.constant 0 : index
    %37 = vector.load %arg9[%c0_20, %c0_21] : memref<1x32xf32, #tpu.memory_space<vmem>>, vector<1x32xf32>
    %38 = vector.broadcast %37 : vector<1x32xf32> to vector<32x32xf32>
    %39 = arith.addf %0, %38 : vector<32x32xf32>
    %40 = vector.extract_strided_slice %34 {offsets = [0, 0, 0], sizes = [2, 16, 4], strides = [1, 1, 1]} : vector<2x16x32xf32> to vector<2x16x4xf32>
    "tpu.trace_start"() <{level = 10 : i32, message = "bsh,bth->bst"}> : () -> ()
    %cst_22 = arith.constant dense<0.000000e+00> : vector<2x16x16xf32>
    %41 = tpu.matmul %40, %35, %cst_22 {dimension_numbers = #tpu.dot_dimension_numbers<[2], [2], [1], [1], [0, 0, 0, 1, 1, 1], [0], [0]>} : vector<2x16x4xf32>, vector<2x16x4xf32>, vector<2x16x16xf32> -> vector<2x16x16xf32>
    "tpu.trace_stop"() : () -> ()
    %cst_23 = arith.constant dense<0xFF800000> : vector<2x16xf32>
    %42 = vector.multi_reduction <maximumf>, %41, %cst_23 [2] : vector<2x16x16xf32> to vector<2x16xf32>
    %43 = vector.shape_cast %42 : vector<2x16xf32> to vector<2x16x1xf32>
    %44 = vector.broadcast %43 : vector<2x16x1xf32> to vector<2x16x16xf32>
    %45 = arith.subf %41, %44 : vector<2x16x16xf32>
    %46 = math.exp %45 : vector<2x16x16xf32>
    %cst_24 = arith.constant dense<0.000000e+00> : vector<2x16xf32>
    %47 = vector.multi_reduction <add>, %46, %cst_24 [2] : vector<2x16x16xf32> to vector<2x16xf32>
    %48 = vector.shape_cast %47 : vector<2x16xf32> to vector<2x16x1xf32>
    %49 = tpu.reciprocal %48 {approx = true} : vector<2x16x1xf32> -> vector<2x16x1xf32>
    %50 = vector.broadcast %49 : vector<2x16x1xf32> to vector<2x16x16xf32>
    %51 = arith.mulf %46, %50 : vector<2x16x16xf32>
    "tpu.trace_start"() <{level = 10 : i32, message = "bst,bth->bsh"}> : () -> ()
    %cst_25 = arith.constant dense<0.000000e+00> : vector<2x16x4xf32>
    %52 = tpu.matmul %51, %36, %cst_25 {dimension_numbers = #tpu.dot_dimension_numbers<[2], [1], [1], [2], [0, 0, 0, 1, 1, 2], [0], [0]>} : vector<2x16x16xf32>, vector<2x16x4xf32>, vector<2x16x4xf32> -> vector<2x16x4xf32>
    "tpu.trace_stop"() : () -> ()
    %53 = vector.shape_cast %52 : vector<2x16x4xf32> to vector<32x4xf32>
    %c0_26 = arith.constant 0 : index
    %c0_27 = arith.constant 0 : index
    %c0_28 = arith.constant 0 : index
    %54 = vector.load %arg8[%c0_26, %c0_27, %c0_28] : memref<8x4x32xf32, #tpu.memory_space<vmem>>, vector<1x4x32xf32>
    %55 = vector.shape_cast %54 : vector<1x4x32xf32> to vector<4x32xf32>
    %cst_29 = arith.constant dense<0.000000e+00> : vector<32x32xf32>
    %56 = tpu.matmul %53, %55, %cst_29 {dimension_numbers = #tpu.dot_dimension_numbers<[1], [0], [0], [1], [0, 0, 1, 1], [], []>} : vector<32x4xf32>, vector<4x32xf32>, vector<32x32xf32> -> vector<32x32xf32>
    %57 = arith.addf %39, %56 : vector<32x32xf32>
    %58 = vector.extract_strided_slice %34 {offsets = [0, 0, 4], sizes = [2, 16, 4], strides = [1, 1, 1]} : vector<2x16x32xf32> to vector<2x16x4xf32>
    "tpu.trace_start"() <{level = 10 : i32, message = "bsh,bth->bst"}> : () -> ()
    %cst_30 = arith.constant dense<0.000000e+00> : vector<2x16x16xf32>
    %59 = tpu.matmul %58, %35, %cst_30 {dimension_numbers = #tpu.dot_dimension_numbers<[2], [2], [1], [1], [0, 0, 0, 1, 1, 1], [0], [0]>} : vector<2x16x4xf32>, vector<2x16x4xf32>, vector<2x16x16xf32> -> vector<2x16x16xf32>
    "tpu.trace_stop"() : () -> ()
    %cst_31 = arith.constant dense<0xFF800000> : vector<2x16xf32>
    %60 = vector.multi_reduction <maximumf>, %59, %cst_31 [2] : vector<2x16x16xf32> to vector<2x16xf32>
    %61 = vector.shape_cast %60 : vector<2x16xf32> to vector<2x16x1xf32>
    %62 = vector.broadcast %61 : vector<2x16x1xf32> to vector<2x16x16xf32>
    %63 = arith.subf %59, %62 : vector<2x16x16xf32>
    %64 = math.exp %63 : vector<2x16x16xf32>
    %cst_32 = arith.constant dense<0.000000e+00> : vector<2x16xf32>
    %65 = vector.multi_reduction <add>, %64, %cst_32 [2] : vector<2x16x16xf32> to vector<2x16xf32>
    %66 = vector.shape_cast %65 : vector<2x16xf32> to vector<2x16x1xf32>
    %67 = tpu.reciprocal %66 {approx = true} : vector<2x16x1xf32> -> vector<2x16x1xf32>
    %68 = vector.broadcast %67 : vector<2x16x1xf32> to vector<2x16x16xf32>
    %69 = arith.mulf %64, %68 : vector<2x16x16xf32>
    "tpu.trace_start"() <{level = 10 : i32, message = "bst,bth->bsh"}> : () -> ()
    %cst_33 = arith.constant dense<0.000000e+00> : vector<2x16x4xf32>
    %70 = tpu.matmul %69, %36, %cst_33 {dimension_numbers = #tpu.dot_dimension_numbers<[2], [1], [1], [2], [0, 0, 0, 1, 1, 2], [0], [0]>} : vector<2x16x16xf32>, vector<2x16x4xf32>, vector<2x16x4xf32> -> vector<2x16x4xf32>
    "tpu.trace_stop"() : () -> ()
    %71 = vector.shape_cast %70 : vector<2x16x4xf32> to vector<32x4xf32>
    %c1 = arith.constant 1 : index
    %c0_34 = arith.constant 0 : index
    %c0_35 = arith.constant 0 : index
    %72 = vector.load %arg8[%c1, %c0_34, %c0_35] : memref<8x4x32xf32, #tpu.memory_space<vmem>>, vector<1x4x32xf32>
    %73 = vector.shape_cast %72 : vector<1x4x32xf32> to vector<4x32xf32>
    %cst_36 = arith.constant dense<0.000000e+00> : vector<32x32xf32>
    %74 = tpu.matmul %71, %73, %cst_36 {dimension_numbers = #tpu.dot_dimension_numbers<[1], [0], [0], [1], [0, 0, 1, 1], [], []>} : vector<32x4xf32>, vector<4x32xf32>, vector<32x32xf32> -> vector<32x32xf32>
    %75 = arith.addf %57, %74 : vector<32x32xf32>
    %76 = vector.extract_strided_slice %34 {offsets = [0, 0, 8], sizes = [2, 16, 4], strides = [1, 1, 1]} : vector<2x16x32xf32> to vector<2x16x4xf32>
    "tpu.trace_start"() <{level = 10 : i32, message = "bsh,bth->bst"}> : () -> ()
    %cst_37 = arith.constant dense<0.000000e+00> : vector<2x16x16xf32>
    %77 = tpu.matmul %76, %35, %cst_37 {dimension_numbers = #tpu.dot_dimension_numbers<[2], [2], [1], [1], [0, 0, 0, 1, 1, 1], [0], [0]>} : vector<2x16x4xf32>, vector<2x16x4xf32>, vector<2x16x16xf32> -> vector<2x16x16xf32>
    "tpu.trace_stop"() : () -> ()
    %cst_38 = arith.constant dense<0xFF800000> : vector<2x16xf32>
    %78 = vector.multi_reduction <maximumf>, %77, %cst_38 [2] : vector<2x16x16xf32> to vector<2x16xf32>
    %79 = vector.shape_cast %78 : vector<2x16xf32> to vector<2x16x1xf32>
    %80 = vector.broadcast %79 : vector<2x16x1xf32> to vector<2x16x16xf32>
    %81 = arith.subf %77, %80 : vector<2x16x16xf32>
    %82 = math.exp %81 : vector<2x16x16xf32>
    %cst_39 = arith.constant dense<0.000000e+00> : vector<2x16xf32>
    %83 = vector.multi_reduction <add>, %82, %cst_39 [2] : vector<2x16x16xf32> to vector<2x16xf32>
    %84 = vector.shape_cast %83 : vector<2x16xf32> to vector<2x16x1xf32>
    %85 = tpu.reciprocal %84 {approx = true} : vector<2x16x1xf32> -> vector<2x16x1xf32>
    %86 = vector.broadcast %85 : vector<2x16x1xf32> to vector<2x16x16xf32>
    %87 = arith.mulf %82, %86 : vector<2x16x16xf32>
    "tpu.trace_start"() <{level = 10 : i32, message = "bst,bth->bsh"}> : () -> ()
    %cst_40 = arith.constant dense<0.000000e+00> : vector<2x16x4xf32>
    %88 = tpu.matmul %87, %36, %cst_40 {dimension_numbers = #tpu.dot_dimension_numbers<[2], [1], [1], [2], [0, 0, 0, 1, 1, 2], [0], [0]>} : vector<2x16x16xf32>, vector<2x16x4xf32>, vector<2x16x4xf32> -> vector<2x16x4xf32>
    "tpu.trace_stop"() : () -> ()
    %89 = vector.shape_cast %88 : vector<2x16x4xf32> to vector<32x4xf32>
    %c2 = arith.constant 2 : index
    %c0_41 = arith.constant 0 : index
    %c0_42 = arith.constant 0 : index
    %90 = vector.load %arg8[%c2, %c0_41, %c0_42] : memref<8x4x32xf32, #tpu.memory_space<vmem>>, vector<1x4x32xf32>
    %91 = vector.shape_cast %90 : vector<1x4x32xf32> to vector<4x32xf32>
    %cst_43 = arith.constant dense<0.000000e+00> : vector<32x32xf32>
    %92 = tpu.matmul %89, %91, %cst_43 {dimension_numbers = #tpu.dot_dimension_numbers<[1], [0], [0], [1], [0, 0, 1, 1], [], []>} : vector<32x4xf32>, vector<4x32xf32>, vector<32x32xf32> -> vector<32x32xf32>
    %93 = arith.addf %75, %92 : vector<32x32xf32>
    %94 = vector.extract_strided_slice %34 {offsets = [0, 0, 12], sizes = [2, 16, 4], strides = [1, 1, 1]} : vector<2x16x32xf32> to vector<2x16x4xf32>
    "tpu.trace_start"() <{level = 10 : i32, message = "bsh,bth->bst"}> : () -> ()
    %cst_44 = arith.constant dense<0.000000e+00> : vector<2x16x16xf32>
    %95 = tpu.matmul %94, %35, %cst_44 {dimension_numbers = #tpu.dot_dimension_numbers<[2], [2], [1], [1], [0, 0, 0, 1, 1, 1], [0], [0]>} : vector<2x16x4xf32>, vector<2x16x4xf32>, vector<2x16x16xf32> -> vector<2x16x16xf32>
    "tpu.trace_stop"() : () -> ()
    %cst_45 = arith.constant dense<0xFF800000> : vector<2x16xf32>
    %96 = vector.multi_reduction <maximumf>, %95, %cst_45 [2] : vector<2x16x16xf32> to vector<2x16xf32>
    %97 = vector.shape_cast %96 : vector<2x16xf32> to vector<2x16x1xf32>
    %98 = vector.broadcast %97 : vector<2x16x1xf32> to vector<2x16x16xf32>
    %99 = arith.subf %95, %98 : vector<2x16x16xf32>
    %100 = math.exp %99 : vector<2x16x16xf32>
    %cst_46 = arith.constant dense<0.000000e+00> : vector<2x16xf32>
    %101 = vector.multi_reduction <add>, %100, %cst_46 [2] : vector<2x16x16xf32> to vector<2x16xf32>
    %102 = vector.shape_cast %101 : vector<2x16xf32> to vector<2x16x1xf32>
    %103 = tpu.reciprocal %102 {approx = true} : vector<2x16x1xf32> -> vector<2x16x1xf32>
    %104 = vector.broadcast %103 : vector<2x16x1xf32> to vector<2x16x16xf32>
    %105 = arith.mulf %100, %104 : vector<2x16x16xf32>
    "tpu.trace_start"() <{level = 10 : i32, message = "bst,bth->bsh"}> : () -> ()
    %cst_47 = arith.constant dense<0.000000e+00> : vector<2x16x4xf32>
    %106 = tpu.matmul %105, %36, %cst_47 {dimension_numbers = #tpu.dot_dimension_numbers<[2], [1], [1], [2], [0, 0, 0, 1, 1, 2], [0], [0]>} : vector<2x16x16xf32>, vector<2x16x4xf32>, vector<2x16x4xf32> -> vector<2x16x4xf32>
    "tpu.trace_stop"() : () -> ()
    %107 = vector.shape_cast %106 : vector<2x16x4xf32> to vector<32x4xf32>
    %c3 = arith.constant 3 : index
    %c0_48 = arith.constant 0 : index
    %c0_49 = arith.constant 0 : index
    %108 = vector.load %arg8[%c3, %c0_48, %c0_49] : memref<8x4x32xf32, #tpu.memory_space<vmem>>, vector<1x4x32xf32>
    %109 = vector.shape_cast %108 : vector<1x4x32xf32> to vector<4x32xf32>
    %cst_50 = arith.constant dense<0.000000e+00> : vector<32x32xf32>
    %110 = tpu.matmul %107, %109, %cst_50 {dimension_numbers = #tpu.dot_dimension_numbers<[1], [0], [0], [1], [0, 0, 1, 1], [], []>} : vector<32x4xf32>, vector<4x32xf32>, vector<32x32xf32> -> vector<32x32xf32>
    %111 = arith.addf %93, %110 : vector<32x32xf32>
    %112 = vector.extract_strided_slice %34 {offsets = [0, 0, 16], sizes = [2, 16, 4], strides = [1, 1, 1]} : vector<2x16x32xf32> to vector<2x16x4xf32>
    "tpu.trace_start"() <{level = 10 : i32, message = "bsh,bth->bst"}> : () -> ()
    %cst_51 = arith.constant dense<0.000000e+00> : vector<2x16x16xf32>
    %113 = tpu.matmul %112, %35, %cst_51 {dimension_numbers = #tpu.dot_dimension_numbers<[2], [2], [1], [1], [0, 0, 0, 1, 1, 1], [0], [0]>} : vector<2x16x4xf32>, vector<2x16x4xf32>, vector<2x16x16xf32> -> vector<2x16x16xf32>
    "tpu.trace_stop"() : () -> ()
    %cst_52 = arith.constant dense<0xFF800000> : vector<2x16xf32>
    %114 = vector.multi_reduction <maximumf>, %113, %cst_52 [2] : vector<2x16x16xf32> to vector<2x16xf32>
    %115 = vector.shape_cast %114 : vector<2x16xf32> to vector<2x16x1xf32>
    %116 = vector.broadcast %115 : vector<2x16x1xf32> to vector<2x16x16xf32>
    %117 = arith.subf %113, %116 : vector<2x16x16xf32>
    %118 = math.exp %117 : vector<2x16x16xf32>
    %cst_53 = arith.constant dense<0.000000e+00> : vector<2x16xf32>
    %119 = vector.multi_reduction <add>, %118, %cst_53 [2] : vector<2x16x16xf32> to vector<2x16xf32>
    %120 = vector.shape_cast %119 : vector<2x16xf32> to vector<2x16x1xf32>
    %121 = tpu.reciprocal %120 {approx = true} : vector<2x16x1xf32> -> vector<2x16x1xf32>
    %122 = vector.broadcast %121 : vector<2x16x1xf32> to vector<2x16x16xf32>
    %123 = arith.mulf %118, %122 : vector<2x16x16xf32>
    "tpu.trace_start"() <{level = 10 : i32, message = "bst,bth->bsh"}> : () -> ()
    %cst_54 = arith.constant dense<0.000000e+00> : vector<2x16x4xf32>
    %124 = tpu.matmul %123, %36, %cst_54 {dimension_numbers = #tpu.dot_dimension_numbers<[2], [1], [1], [2], [0, 0, 0, 1, 1, 2], [0], [0]>} : vector<2x16x16xf32>, vector<2x16x4xf32>, vector<2x16x4xf32> -> vector<2x16x4xf32>
    "tpu.trace_stop"() : () -> ()
    %125 = vector.shape_cast %124 : vector<2x16x4xf32> to vector<32x4xf32>
    %c4 = arith.constant 4 : index
    %c0_55 = arith.constant 0 : index
    %c0_56 = arith.constant 0 : index
    %126 = vector.load %arg8[%c4, %c0_55, %c0_56] : memref<8x4x32xf32, #tpu.memory_space<vmem>>, vector<1x4x32xf32>
    %127 = vector.shape_cast %126 : vector<1x4x32xf32> to vector<4x32xf32>
    %cst_57 = arith.constant dense<0.000000e+00> : vector<32x32xf32>
    %128 = tpu.matmul %125, %127, %cst_57 {dimension_numbers = #tpu.dot_dimension_numbers<[1], [0], [0], [1], [0, 0, 1, 1], [], []>} : vector<32x4xf32>, vector<4x32xf32>, vector<32x32xf32> -> vector<32x32xf32>
    %129 = arith.addf %111, %128 : vector<32x32xf32>
    %130 = vector.extract_strided_slice %34 {offsets = [0, 0, 20], sizes = [2, 16, 4], strides = [1, 1, 1]} : vector<2x16x32xf32> to vector<2x16x4xf32>
    "tpu.trace_start"() <{level = 10 : i32, message = "bsh,bth->bst"}> : () -> ()
    %cst_58 = arith.constant dense<0.000000e+00> : vector<2x16x16xf32>
    %131 = tpu.matmul %130, %35, %cst_58 {dimension_numbers = #tpu.dot_dimension_numbers<[2], [2], [1], [1], [0, 0, 0, 1, 1, 1], [0], [0]>} : vector<2x16x4xf32>, vector<2x16x4xf32>, vector<2x16x16xf32> -> vector<2x16x16xf32>
    "tpu.trace_stop"() : () -> ()
    %cst_59 = arith.constant dense<0xFF800000> : vector<2x16xf32>
    %132 = vector.multi_reduction <maximumf>, %131, %cst_59 [2] : vector<2x16x16xf32> to vector<2x16xf32>
    %133 = vector.shape_cast %132 : vector<2x16xf32> to vector<2x16x1xf32>
    %134 = vector.broadcast %133 : vector<2x16x1xf32> to vector<2x16x16xf32>
    %135 = arith.subf %131, %134 : vector<2x16x16xf32>
    %136 = math.exp %135 : vector<2x16x16xf32>
    %cst_60 = arith.constant dense<0.000000e+00> : vector<2x16xf32>
    %137 = vector.multi_reduction <add>, %136, %cst_60 [2] : vector<2x16x16xf32> to vector<2x16xf32>
    %138 = vector.shape_cast %137 : vector<2x16xf32> to vector<2x16x1xf32>
    %139 = tpu.reciprocal %138 {approx = true} : vector<2x16x1xf32> -> vector<2x16x1xf32>
    %140 = vector.broadcast %139 : vector<2x16x1xf32> to vector<2x16x16xf32>
    %141 = arith.mulf %136, %140 : vector<2x16x16xf32>
    "tpu.trace_start"() <{level = 10 : i32, message = "bst,bth->bsh"}> : () -> ()
    %cst_61 = arith.constant dense<0.000000e+00> : vector<2x16x4xf32>
    %142 = tpu.matmul %141, %36, %cst_61 {dimension_numbers = #tpu.dot_dimension_numbers<[2], [1], [1], [2], [0, 0, 0, 1, 1, 2], [0], [0]>} : vector<2x16x16xf32>, vector<2x16x4xf32>, vector<2x16x4xf32> -> vector<2x16x4xf32>
    "tpu.trace_stop"() : () -> ()
    %143 = vector.shape_cast %142 : vector<2x16x4xf32> to vector<32x4xf32>
    %c5 = arith.constant 5 : index
    %c0_62 = arith.constant 0 : index
    %c0_63 = arith.constant 0 : index
    %144 = vector.load %arg8[%c5, %c0_62, %c0_63] : memref<8x4x32xf32, #tpu.memory_space<vmem>>, vector<1x4x32xf32>
    %145 = vector.shape_cast %144 : vector<1x4x32xf32> to vector<4x32xf32>
    %cst_64 = arith.constant dense<0.000000e+00> : vector<32x32xf32>
    %146 = tpu.matmul %143, %145, %cst_64 {dimension_numbers = #tpu.dot_dimension_numbers<[1], [0], [0], [1], [0, 0, 1, 1], [], []>} : vector<32x4xf32>, vector<4x32xf32>, vector<32x32xf32> -> vector<32x32xf32>
    %147 = arith.addf %129, %146 : vector<32x32xf32>
    %148 = vector.extract_strided_slice %34 {offsets = [0, 0, 24], sizes = [2, 16, 4], strides = [1, 1, 1]} : vector<2x16x32xf32> to vector<2x16x4xf32>
    "tpu.trace_start"() <{level = 10 : i32, message = "bsh,bth->bst"}> : () -> ()
    %cst_65 = arith.constant dense<0.000000e+00> : vector<2x16x16xf32>
    %149 = tpu.matmul %148, %35, %cst_65 {dimension_numbers = #tpu.dot_dimension_numbers<[2], [2], [1], [1], [0, 0, 0, 1, 1, 1], [0], [0]>} : vector<2x16x4xf32>, vector<2x16x4xf32>, vector<2x16x16xf32> -> vector<2x16x16xf32>
    "tpu.trace_stop"() : () -> ()
    %cst_66 = arith.constant dense<0xFF800000> : vector<2x16xf32>
    %150 = vector.multi_reduction <maximumf>, %149, %cst_66 [2] : vector<2x16x16xf32> to vector<2x16xf32>
    %151 = vector.shape_cast %150 : vector<2x16xf32> to vector<2x16x1xf32>
    %152 = vector.broadcast %151 : vector<2x16x1xf32> to vector<2x16x16xf32>
    %153 = arith.subf %149, %152 : vector<2x16x16xf32>
    %154 = math.exp %153 : vector<2x16x16xf32>
    %cst_67 = arith.constant dense<0.000000e+00> : vector<2x16xf32>
    %155 = vector.multi_reduction <add>, %154, %cst_67 [2] : vector<2x16x16xf32> to vector<2x16xf32>
    %156 = vector.shape_cast %155 : vector<2x16xf32> to vector<2x16x1xf32>
    %157 = tpu.reciprocal %156 {approx = true} : vector<2x16x1xf32> -> vector<2x16x1xf32>
    %158 = vector.broadcast %157 : vector<2x16x1xf32> to vector<2x16x16xf32>
    %159 = arith.mulf %154, %158 : vector<2x16x16xf32>
    "tpu.trace_start"() <{level = 10 : i32, message = "bst,bth->bsh"}> : () -> ()
    %cst_68 = arith.constant dense<0.000000e+00> : vector<2x16x4xf32>
    %160 = tpu.matmul %159, %36, %cst_68 {dimension_numbers = #tpu.dot_dimension_numbers<[2], [1], [1], [2], [0, 0, 0, 1, 1, 2], [0], [0]>} : vector<2x16x16xf32>, vector<2x16x4xf32>, vector<2x16x4xf32> -> vector<2x16x4xf32>
    "tpu.trace_stop"() : () -> ()
    %161 = vector.shape_cast %160 : vector<2x16x4xf32> to vector<32x4xf32>
    %c6 = arith.constant 6 : index
    %c0_69 = arith.constant 0 : index
    %c0_70 = arith.constant 0 : index
    %162 = vector.load %arg8[%c6, %c0_69, %c0_70] : memref<8x4x32xf32, #tpu.memory_space<vmem>>, vector<1x4x32xf32>
    %163 = vector.shape_cast %162 : vector<1x4x32xf32> to vector<4x32xf32>
    %cst_71 = arith.constant dense<0.000000e+00> : vector<32x32xf32>
    %164 = tpu.matmul %161, %163, %cst_71 {dimension_numbers = #tpu.dot_dimension_numbers<[1], [0], [0], [1], [0, 0, 1, 1], [], []>} : vector<32x4xf32>, vector<4x32xf32>, vector<32x32xf32> -> vector<32x32xf32>
    %165 = arith.addf %147, %164 : vector<32x32xf32>
    %166 = vector.extract_strided_slice %34 {offsets = [0, 0, 28], sizes = [2, 16, 4], strides = [1, 1, 1]} : vector<2x16x32xf32> to vector<2x16x4xf32>
    "tpu.trace_start"() <{level = 10 : i32, message = "bsh,bth->bst"}> : () -> ()
    %cst_72 = arith.constant dense<0.000000e+00> : vector<2x16x16xf32>
    %167 = tpu.matmul %166, %35, %cst_72 {dimension_numbers = #tpu.dot_dimension_numbers<[2], [2], [1], [1], [0, 0, 0, 1, 1, 1], [0], [0]>} : vector<2x16x4xf32>, vector<2x16x4xf32>, vector<2x16x16xf32> -> vector<2x16x16xf32>
    "tpu.trace_stop"() : () -> ()
    %cst_73 = arith.constant dense<0xFF800000> : vector<2x16xf32>
    %168 = vector.multi_reduction <maximumf>, %167, %cst_73 [2] : vector<2x16x16xf32> to vector<2x16xf32>
    %169 = vector.shape_cast %168 : vector<2x16xf32> to vector<2x16x1xf32>
    %170 = vector.broadcast %169 : vector<2x16x1xf32> to vector<2x16x16xf32>
    %171 = arith.subf %167, %170 : vector<2x16x16xf32>
    %172 = math.exp %171 : vector<2x16x16xf32>
    %cst_74 = arith.constant dense<0.000000e+00> : vector<2x16xf32>
    %173 = vector.multi_reduction <add>, %172, %cst_74 [2] : vector<2x16x16xf32> to vector<2x16xf32>
    %174 = vector.shape_cast %173 : vector<2x16xf32> to vector<2x16x1xf32>
    %175 = tpu.reciprocal %174 {approx = true} : vector<2x16x1xf32> -> vector<2x16x1xf32>
    %176 = vector.broadcast %175 : vector<2x16x1xf32> to vector<2x16x16xf32>
    %177 = arith.mulf %172, %176 : vector<2x16x16xf32>
    "tpu.trace_start"() <{level = 10 : i32, message = "bst,bth->bsh"}> : () -> ()
    %cst_75 = arith.constant dense<0.000000e+00> : vector<2x16x4xf32>
    %178 = tpu.matmul %177, %36, %cst_75 {dimension_numbers = #tpu.dot_dimension_numbers<[2], [1], [1], [2], [0, 0, 0, 1, 1, 2], [0], [0]>} : vector<2x16x16xf32>, vector<2x16x4xf32>, vector<2x16x4xf32> -> vector<2x16x4xf32>
    "tpu.trace_stop"() : () -> ()
    %179 = vector.shape_cast %178 : vector<2x16x4xf32> to vector<32x4xf32>
    %c7 = arith.constant 7 : index
    %c0_76 = arith.constant 0 : index
    %c0_77 = arith.constant 0 : index
    %180 = vector.load %arg8[%c7, %c0_76, %c0_77] : memref<8x4x32xf32, #tpu.memory_space<vmem>>, vector<1x4x32xf32>
    %181 = vector.shape_cast %180 : vector<1x4x32xf32> to vector<4x32xf32>
    %cst_78 = arith.constant dense<0.000000e+00> : vector<32x32xf32>
    %182 = tpu.matmul %179, %181, %cst_78 {dimension_numbers = #tpu.dot_dimension_numbers<[1], [0], [0], [1], [0, 0, 1, 1], [], []>} : vector<32x4xf32>, vector<4x32xf32>, vector<32x32xf32> -> vector<32x32xf32>
    %183 = arith.addf %165, %182 : vector<32x32xf32>
    %cst_79 = arith.constant dense<0.000000e+00> : vector<32xf32>
    %184 = vector.multi_reduction <add>, %183, %cst_79 [1] : vector<32x32xf32> to vector<32xf32>
    %185 = vector.shape_cast %184 : vector<32xf32> to vector<32x1xf32>
    %cst_80 = arith.constant 3.200000e+01 : f32
    %186 = vector.broadcast %cst_80 : f32 to vector<32x1xf32>
    %187 = arith.divf %185, %186 : vector<32x1xf32>
    %188 = vector.broadcast %187 : vector<32x1xf32> to vector<32x32xf32>
    %189 = arith.subf %183, %188 : vector<32x32xf32>
    %190 = arith.mulf %189, %189 : vector<32x32xf32>
    %cst_81 = arith.constant dense<0.000000e+00> : vector<32xf32>
    %191 = vector.multi_reduction <add>, %190, %cst_81 [1] : vector<32x32xf32> to vector<32xf32>
    %192 = vector.shape_cast %191 : vector<32xf32> to vector<32x1xf32>
    %cst_82 = arith.constant 3.200000e+01 : f32
    %193 = vector.broadcast %cst_82 : f32 to vector<32x1xf32>
    %194 = arith.divf %192, %193 : vector<32x1xf32>
    %195 = vector.broadcast %187 : vector<32x1xf32> to vector<32x32xf32>
    %196 = arith.subf %183, %195 : vector<32x32xf32>
    %cst_83 = arith.constant 9.99999974E-6 : f32
    %197 = vector.broadcast %cst_83 : f32 to vector<32x1xf32>
    %198 = arith.addf %194, %197 : vector<32x1xf32>
    %199 = math.rsqrt %198 : vector<32x1xf32>
    %200 = vector.broadcast %199 : vector<32x1xf32> to vector<32x32xf32>
    %201 = arith.mulf %196, %200 : vector<32x32xf32>
    %c0_84 = arith.constant 0 : index
    %c0_85 = arith.constant 0 : index
    %202 = vector.load %arg10[%c0_84, %c0_85] : memref<32x64xf32, #tpu.memory_space<vmem>>, vector<32x64xf32>
    %cst_86 = arith.constant dense<0.000000e+00> : vector<32x64xf32>
    %203 = tpu.matmul %201, %202, %cst_86 {dimension_numbers = #tpu.dot_dimension_numbers<[1], [0], [0], [1], [0, 0, 1, 1], [], []>} : vector<32x32xf32>, vector<32x64xf32>, vector<32x64xf32> -> vector<32x64xf32>
    %c0_87 = arith.constant 0 : index
    %c0_88 = arith.constant 0 : index
    %204 = vector.load %arg11[%c0_87, %c0_88] : memref<1x64xf32, #tpu.memory_space<vmem>>, vector<1x64xf32>
    %205 = vector.broadcast %204 : vector<1x64xf32> to vector<32x64xf32>
    %206 = arith.addf %203, %205 : vector<32x64xf32>
    %cst_89 = arith.constant 5.000000e-01 : f32
    %207 = vector.broadcast %cst_89 : f32 to vector<32x64xf32>
    %208 = arith.mulf %207, %206 : vector<32x64xf32>
    %cst_90 = arith.constant 0.707106769 : f32
    %209 = vector.broadcast %cst_90 : f32 to vector<32x64xf32>
    %210 = arith.mulf %206, %209 : vector<32x64xf32>
    %cst_91 = arith.constant 0.000000e+00 : f32
    %211 = vector.broadcast %cst_91 : f32 to vector<32x64xf32>
    %212 = arith.cmpf oge, %210, %211 : vector<32x64xf32>
    %cst_92 = arith.constant 1.000000e+00 : f32
    %cst_93 = arith.constant -1.000000e+00 : f32
    %213 = vector.broadcast %cst_92 : f32 to vector<32x64xf32>
    %214 = vector.broadcast %cst_93 : f32 to vector<32x64xf32>
    %215 = arith.select %212, %213, %214 : vector<32x64xi1>, vector<32x64xf32>
    %216 = math.absf %210 : vector<32x64xf32>
    %cst_94 = arith.constant 0.327591091 : f32
    %217 = vector.broadcast %cst_94 : f32 to vector<32x64xf32>
    %218 = arith.mulf %217, %216 : vector<32x64xf32>
    %cst_95 = arith.constant 1.000000e+00 : f32
    %219 = vector.broadcast %cst_95 : f32 to vector<32x64xf32>
    %220 = arith.addf %219, %218 : vector<32x64xf32>
    %221 = tpu.reciprocal %220 {approx = true} : vector<32x64xf32> -> vector<32x64xf32>
    %cst_96 = arith.constant 1.06140542 : f32
    %222 = vector.broadcast %cst_96 : f32 to vector<32x64xf32>
    %223 = arith.mulf %221, %222 : vector<32x64xf32>
    %cst_97 = arith.constant -1.45315206 : f32
    %224 = vector.broadcast %cst_97 : f32 to vector<32x64xf32>
    %225 = arith.addf %224, %223 : vector<32x64xf32>
    %226 = arith.mulf %221, %225 : vector<32x64xf32>
    %cst_98 = arith.constant 1.42141378 : f32
    %227 = vector.broadcast %cst_98 : f32 to vector<32x64xf32>
    %228 = arith.addf %227, %226 : vector<32x64xf32>
    %229 = arith.mulf %221, %228 : vector<32x64xf32>
    %cst_99 = arith.constant -0.284496725 : f32
    %230 = vector.broadcast %cst_99 : f32 to vector<32x64xf32>
    %231 = arith.addf %230, %229 : vector<32x64xf32>
    %232 = arith.mulf %221, %231 : vector<32x64xf32>
    %cst_100 = arith.constant 0.254829586 : f32
    %233 = vector.broadcast %cst_100 : f32 to vector<32x64xf32>
    %234 = arith.addf %233, %232 : vector<32x64xf32>
    %235 = arith.mulf %221, %234 : vector<32x64xf32>
    %cst_101 = arith.constant 0.000000e+00 : f32
    %236 = vector.broadcast %cst_101 : f32 to vector<32x64xf32>
    %237 = arith.subf %236, %216 : vector<32x64xf32>
    %238 = arith.mulf %237, %216 : vector<32x64xf32>
    %239 = math.exp %238 : vector<32x64xf32>
    %240 = arith.mulf %235, %239 : vector<32x64xf32>
    %cst_102 = arith.constant 1.000000e+00 : f32
    %241 = vector.broadcast %cst_102 : f32 to vector<32x64xf32>
    %242 = arith.subf %241, %240 : vector<32x64xf32>
    %243 = arith.mulf %215, %242 : vector<32x64xf32>
    %cst_103 = arith.constant 1.000000e+00 : f32
    %244 = vector.broadcast %cst_103 : f32 to vector<32x64xf32>
    %245 = arith.addf %244, %243 : vector<32x64xf32>
    %246 = arith.mulf %208, %245 : vector<32x64xf32>
    %c0_104 = arith.constant 0 : index
    %c0_105 = arith.constant 0 : index
    %247 = vector.load %arg12[%c0_104, %c0_105] : memref<64x32xf32, #tpu.memory_space<vmem>>, vector<64x32xf32>
    %cst_106 = arith.constant dense<0.000000e+00> : vector<32x32xf32>
    %248 = tpu.matmul %246, %247, %cst_106 {dimension_numbers = #tpu.dot_dimension_numbers<[1], [0], [0], [1], [0, 0, 1, 1], [], []>} : vector<32x64xf32>, vector<64x32xf32>, vector<32x32xf32> -> vector<32x32xf32>
    %c0_107 = arith.constant 0 : index
    %c0_108 = arith.constant 0 : index
    %249 = vector.load %arg13[%c0_107, %c0_108] : memref<1x32xf32, #tpu.memory_space<vmem>>, vector<1x32xf32>
    %250 = vector.broadcast %249 : vector<1x32xf32> to vector<32x32xf32>
    %251 = arith.addf %248, %250 : vector<32x32xf32>
    %252 = arith.addf %183, %251 : vector<32x32xf32>
    %c0_109 = arith.constant 0 : index
    %c0_110 = arith.constant 0 : index
    %253 = vector.load %arg14[%c0_109, %c0_110] : memref<32x32xf32, #tpu.memory_space<vmem>>, vector<32x32xf32>
    tpu.vector_store %arg14[%c0_109, %c0_110], %252 {strides = array<i32>} : memref<32x32xf32, #tpu.memory_space<vmem>>, vector<32x32xf32>,
    return
  }
  func.func @transform_0(%arg0: i32) -> (i32, i32) {
    %c0_i32 = arith.constant 0 : i32
    %c0_i32_0 = arith.constant 0 : i32
    %c0_i32_1 = arith.constant 0 : i32
    return %c0_i32, %c0_i32_0 : i32, i32
  }
  func.func @transform_1(%arg0: i32) -> (i32, i32) {
    %c0_i32 = arith.constant 0 : i32
    %c0_i32_0 = arith.constant 0 : i32
    %c0_i32_1 = arith.constant 0 : i32
    return %c0_i32, %c0_i32_0 : i32, i32
  }
  func.func @transform_2(%arg0: i32) -> (i32, i32) {
    %c0_i32 = arith.constant 0 : i32
    %c0_i32_0 = arith.constant 0 : i32
    %c0_i32_1 = arith.constant 0 : i32
    return %c0_i32, %c0_i32_0 : i32, i32
  }
  func.func @transform_3(%arg0: i32) -> (i32, i32) {
    %c0_i32 = arith.constant 0 : i32
    %c0_i32_0 = arith.constant 0 : i32
    %c0_i32_1 = arith.constant 0 : i32
    return %c0_i32, %c0_i32_0 : i32, i32
  }
  func.func @transform_4(%arg0: i32) -> (i32, i32) {
    %c0_i32 = arith.constant 0 : i32
    %c0_i32_0 = arith.constant 0 : i32
    %c0_i32_1 = arith.constant 0 : i32
    return %c0_i32, %c0_i32_0 : i32, i32
  }
  func.func @transform_5(%arg0: i32) -> (i32, i32) {
    %c0_i32 = arith.constant 0 : i32
    %c0_i32_0 = arith.constant 0 : i32
    %c0_i32_1 = arith.constant 0 : i32
    return %c0_i32, %c0_i32_0 : i32, i32
  }
  func.func @transform_6(%arg0: i32) -> (i32, i32) {
    %c0_i32 = arith.constant 0 : i32
    %c0_i32_0 = arith.constant 0 : i32
    %c0_i32_1 = arith.constant 0 : i32
    return %c0_i32, %c0_i32_0 : i32, i32
  }
  func.func @transform_7(%arg0: i32) -> (i32, i32, i32) {
    %c0_i32 = arith.constant 0 : i32
    %c0_i32_0 = arith.constant 0 : i32
    %c0_i32_1 = arith.constant 0 : i32
    %c0_i32_2 = arith.constant 0 : i32
    return %c0_i32, %c0_i32_0, %c0_i32_1 : i32, i32, i32
  }
  func.func @transform_8(%arg0: i32) -> (i32, i32) {
    %c0_i32 = arith.constant 0 : i32
    %c0_i32_0 = arith.constant 0 : i32
    %c0_i32_1 = arith.constant 0 : i32
    return %c0_i32, %c0_i32_0 : i32, i32
  }
  func.func @transform_9(%arg0: i32) -> (i32, i32) {
    %c0_i32 = arith.constant 0 : i32
    %c0_i32_0 = arith.constant 0 : i32
    %c0_i32_1 = arith.constant 0 : i32
    return %c0_i32, %c0_i32_0 : i32, i32
  }
  func.func @transform_10(%arg0: i32) -> (i32, i32) {
    %c0_i32 = arith.constant 0 : i32
    %c0_i32_0 = arith.constant 0 : i32
    %c0_i32_1 = arith.constant 0 : i32
    return %c0_i32, %c0_i32_0 : i32, i32
  }
  func.func @transform_11(%arg0: i32) -> (i32, i32) {
    %c0_i32 = arith.constant 0 : i32
    %c0_i32_0 = arith.constant 0 : i32
    %c0_i32_1 = arith.constant 0 : i32
    return %c0_i32, %c0_i32_0 : i32, i32
  }
  func.func @transform_12(%arg0: i32) -> (i32, i32) {
    %c0_i32 = arith.constant 0 : i32
    %c0_i32_0 = arith.constant 0 : i32
    %c0_i32_1 = arith.constant 0 : i32
    return %c0_i32, %c0_i32_0 : i32, i32
  }
  func.func @transform_13(%arg0: i32) -> (i32, i32) {
    %c0_i32 = arith.constant 0 : i32
    %c0_i32_0 = arith.constant 0 : i32
    %c0_i32_1 = arith.constant 0 : i32
    return %c0_i32, %c0_i32_0 : i32, i32
  }
}

</mosaic_0001>

<llo_original>
// kernel: tpu_custom_call.1
$region0: #{tpu_custom_call.1}
  #allocation0 [shape = 'u32[]', space=smem, size = 0x4, offset = 0x4, fixed_abs, tag = 'smem constant byte address 0x4 - core index']
  #allocation1 [shape = 'u32[144,128]{1,0:T(1,128)}', space=vmem, size = 0x12000, scoped, tag = 'internal scratch']
  %s0 = inlined_call_operand.vmem [shape: f32[32,32], index: 0, kind: input, shape index: {}]
  %s1 = inlined_call_operand.vmem [shape: f32[32,32], index: 1, kind: input, shape index: {}]
  %s2 = inlined_call_operand.vmem [shape: f32[1,32], index: 2, kind: input, shape index: {}]
  %s3 = inlined_call_operand.vmem [shape: f32[32,4], index: 3, kind: input, shape index: {}]
  %s4 = inlined_call_operand.vmem [shape: f32[1,4], index: 4, kind: input, shape index: {}]
  %s5 = inlined_call_operand.vmem [shape: f32[32,4], index: 5, kind: input, shape index: {}]
  %s6 = inlined_call_operand.vmem [shape: f32[1,4], index: 6, kind: input, shape index: {}]
  %s7 = inlined_call_operand.vmem [shape: f32[8,4,32], index: 7, kind: input, shape index: {}]
  %s8 = inlined_call_operand.vmem [shape: f32[1,32], index: 8, kind: input, shape index: {}]
  %s9 = inlined_call_operand.vmem [shape: f32[32,64], index: 9, kind: input, shape index: {}]
  %s10 = inlined_call_operand.vmem [shape: f32[1,64], index: 10, kind: input, shape index: {}]
  %s11 = inlined_call_operand.vmem [shape: f32[64,32], index: 11, kind: input, shape index: {}]
  %s12 = inlined_call_operand.vmem [shape: f32[1,32], index: 12, kind: input, shape index: {}]
  %s13 = inlined_call_operand.hbm [shape: f32[32,32], index: 13, kind: output, shape index: {}]
  %s14 = sld [smem:[#allocation0]]
  $region62: #{tpu_custom_call.1} parent=0
    _
  %s16 = ssub.s32 1, %s14
  %s17 = scalar_select 0, %s16, %s14
  $region1: #{tpu_custom_call.1} parent=0
    #allocation2 [shape = 'u8[16384]{0}', space=vmem, size = 0x4000, scoped, tag = 'output window, operand 0, single buffered']
    #allocation3 [shape = 's32[1]{0}', space=sflag, size = 0x4, scoped, tag = 'scoped memory for tpu_custom_call.1']
    %18 = vsyncpa [#allocation3], 0
    // Predicated region
    $region2: #{tpu_custom_call.1} parent=1 // pred_check
      _
    $region3: #{tpu_custom_call.1} parent=1 // pred_check_branch
      %20 = sbr.rel (0) target = $region5
    $region4: #{tpu_custom_call.1} parent=1 // pred_region
      _
    $region5: #{tpu_custom_call.1} parent=1 // pred_fallthru
      _
    // Predicated region
    $region6: #{tpu_custom_call.1} parent=1 // pred_check
      _
    $region7: #{tpu_custom_call.1} parent=1 // pred_check_branch
      %22 = sbr.rel (0) target = $region9
    $region8: #{tpu_custom_call.1} parent=1 // pred_region
      _
    $region9: #{tpu_custom_call.1} parent=1 // pred_fallthru
      _
    // Predicated region
    $region10: #{tpu_custom_call.1} parent=1 // pred_check
      _
    $region11: #{tpu_custom_call.1} parent=1 // pred_check_branch
      %24 = sbr.rel (0) target = $region13
    $region12: #{tpu_custom_call.1} parent=1 // pred_region
      _
    $region13: #{tpu_custom_call.1} parent=1 // pred_fallthru
      _
    // Predicated region
    $region14: #{tpu_custom_call.1} parent=1 // pred_check
      _
    $region15: #{tpu_custom_call.1} parent=1 // pred_check_branch
      %26 = sbr.rel (0) target = $region17
    $region16: #{tpu_custom_call.1} parent=1 // pred_region
      _
    $region17: #{tpu_custom_call.1} parent=1 // pred_fallthru
      _
    // Predicated region
    $region18: #{tpu_custom_call.1} parent=1 // pred_check
      _
    $region19: #{tpu_custom_call.1} parent=1 // pred_check_branch
      %28 = sbr.rel (0) target = $region21
    $region20: #{tpu_custom_call.1} parent=1 // pred_region
      _
    $region21: #{tpu_custom_call.1} parent=1 // pred_fallthru
      _
    // Predicated region
    $region22: #{tpu_custom_call.1} parent=1 // pred_check
      _
    $region23: #{tpu_custom_call.1} parent=1 // pred_check_branch
      %30 = sbr.rel (0) target = $region25
    $region24: #{tpu_custom_call.1} parent=1 // pred_region
      _
    $region25: #{tpu_custom_call.1} parent=1 // pred_fallthru
      _
    // Predicated region
    $region26: #{tpu_custom_call.1} parent=1 // pred_check
      _
    $region27: #{tpu_custom_call.1} parent=1 // pred_check_branch
      %32 = sbr.rel (0) target = $region29
    $region28: #{tpu_custom_call.1} parent=1 // pred_region
      _
    $region29: #{tpu_custom_call.1} parent=1 // pred_fallthru
      _
    // Predicated region
    $region30: #{tpu_custom_call.1} parent=1 // pred_check
      _
    $region31: #{tpu_custom_call.1} parent=1 // pred_check_branch
      %34 = sbr.rel (0) target = $region33
    $region32: #{tpu_custom_call.1} parent=1 // pred_region
      _
    $region33: #{tpu_custom_call.1} parent=1 // pred_fallthru
      _
    // Predicated region
    $region34: #{tpu_custom_call.1} parent=1 // pred_check
      _
    $region35: #{tpu_custom_call.1} parent=1 // pred_check_branch
      %36 = sbr.rel (0) target = $region37
    $region36: #{tpu_custom_call.1} parent=1 // pred_region
      _
    $region37: #{tpu_custom_call.1} parent=1 // pred_fallthru
      _
    // Predicated region
    $region38: #{tpu_custom_call.1} parent=1 // pred_check
      _
    $region39: #{tpu_custom_call.1} parent=1 // pred_check_branch
      %38 = sbr.rel (0) target = $region41
    $region40: #{tpu_custom_call.1} parent=1 // pred_region
      _
    $region41: #{tpu_custom_call.1} parent=1 // pred_fallthru
      _
    // Predicated region
    $region42: #{tpu_custom_call.1} parent=1 // pred_check
      _
    $region43: #{tpu_custom_call.1} parent=1 // pred_check_branch
      %40 = sbr.rel (0) target = $region45
    $region44: #{tpu_custom_call.1} parent=1 // pred_region
      _
    $region45: #{tpu_custom_call.1} parent=1 // pred_fallthru
      _
    // Predicated region
    $region46: #{tpu_custom_call.1} parent=1 // pred_check
      _
    $region47: #{tpu_custom_call.1} parent=1 // pred_check_branch
      %42 = sbr.rel (0) target = $region49
    $region48: #{tpu_custom_call.1} parent=1 // pred_region
      _
    $region49: #{tpu_custom_call.1} parent=1 // pred_fallthru
      _
    // Predicated region
    $region50: #{tpu_custom_call.1} parent=1 // pred_check
      _
    $region51: #{tpu_custom_call.1} parent=1 // pred_check_branch
      %44 = sbr.rel (0) target = $region53
    $region52: #{tpu_custom_call.1} parent=1 // pred_region
      _
    $region53: #{tpu_custom_call.1} parent=1 // pred_fallthru
      _
    %v45 = vld [vmem:[%s0] sm:$0xff]
    %v46 = vld [vmem:[%s0 + $0x8] sm:$0xff]
    %v47 = vld [vmem:[%s0 + $0x10] sm:$0xff]
    %v48 = vld [vmem:[%s0 + $0x18] sm:$0xff]
    %vm49 = vcmask 261120
    %v50 = vsel %vm49, %v45, 0.0
    %51 = vadd.xlane.f32.xlu0 %v50
    %v52 = vpop.xlane.xlu0 %51
    %v53 = vsel %vm49, %v46, 0.0
    %54 = vadd.xlane.f32.xlu0 %v53
    %v55 = vpop.xlane.xlu0 %54
    %v56 = vsel %vm49, %v47, 0.0
    %57 = vadd.xlane.f32.xlu0 %v56
    %v58 = vpop.xlane.xlu0 %57
    %v59 = vsel %vm49, %v48, 0.0
    %60 = vadd.xlane.f32.xlu0 %v59
    %v61 = vpop.xlane.xlu0 %60
    %v62 = vrcp.pop 32.0
    %v63 = vmul.f32 %v52, %v62
    %v64 = vmul.f32 %v55, %v62
    %v65 = vmul.f32 %v58, %v62
    %v66 = vmul.f32 %v61, %v62
    %v67 = vsub.f32 %v45, %v63
    %v68 = vsub.f32 %v46, %v64
    %v69 = vsub.f32 %v47, %v65
    %v70 = vsub.f32 %v48, %v66
    %v71 = vmul.f32 %v67, %v67
    %v72 = vmul.f32 %v68, %v68
    %v73 = vmul.f32 %v69, %v69
    %v74 = vmul.f32 %v70, %v70
    %v75 = vsel %vm49, %v71, 0.0
    %76 = vadd.xlane.f32.xlu0 %v75
    %v77 = vpop.xlane.xlu0 %76
    %v78 = vsel %vm49, %v72, 0.0
    %79 = vadd.xlane.f32.xlu0 %v78
    %v80 = vpop.xlane.xlu0 %79
    %v81 = vsel %vm49, %v73, 0.0
    %82 = vadd.xlane.f32.xlu0 %v81
    %v83 = vpop.xlane.xlu0 %82
    %v84 = vsel %vm49, %v74, 0.0
    %85 = vadd.xlane.f32.xlu0 %v84
    %v86 = vpop.xlane.xlu0 %85
    %v87 = vmul.f32 %v77, %v62
    %v88 = vmul.f32 %v80, %v62
    %v89 = vmul.f32 %v83, %v62
    %v90 = vmul.f32 %v86, %v62
    %v91 = vadd.f32 %v87, 1e-05
    %v92 = vadd.f32 %v88, 1e-05
    %v93 = vadd.f32 %v89, 1e-05
    %v94 = vadd.f32 %v90, 1e-05
    %v95 = vrsqrt.pop %v91
    %v96 = vrsqrt.pop %v92
    %v97 = vrsqrt.pop %v93
    %v98 = vrsqrt.pop %v94
    %v99 = vmul.f32 %v67, %v95
    %v100 = vmul.f32 %v68, %v96
    %v101 = vmul.f32 %v69, %v97
    %v102 = vmul.f32 %v70, %v98
    %v103 = vld [vmem:[%s1] sm:$0xff]
    %v104 = vld [vmem:[%s1 + $0x8] sm:$0xff]
    %v105 = vld [vmem:[%s1 + $0x10] sm:$0xff]
    %v106 = vld [vmem:[%s1 + $0x18] sm:$0xff]
    %v107 = vld [vmem:[%s2] sm:$0x1]
    %v109 = vlaneseq
    %v110 = vshrl.u32 %v109, 7
    %v111 = vsub.s32 0, %v110
    %v112 = vrot.slane %v107, %v111
    %v115 = vsel %vm49, %v99, 0
    %v118 = vsel %vm49, %v100, 0
    %v121 = vsel %vm49, %v101, 0
    %v124 = vsel %vm49, %v102, 0
    %126 = vmatprep.subr.mxu0 0.0
    %127 = vmatpush1.msra.mxu0 %v103
    %128 = vmatprep.subr.mxu0 0.0
    %129 = vmatpush1.msra.mxu0 %v104
    %130 = vmatprep.subr.mxu0 0.0
    %131 = vmatpush1.msra.mxu0 %v105
    %132 = vmatprep.subr.mxu0 0.0
    %133 = vmatpush1.msra.mxu0 %v106
    %134 = vmatprep.subr.mxu0 0.0
    %135 = vmatpush1.msra.mxu0 0.0
    %136 = vmatprep.subr.mxu0 0.0
    %137 = vmatpush1.msra.mxu0 0.0
    %138 = vmatprep.subr.mxu0 0.0
    %139 = vmatpush1.msra.mxu0 0.0
    %140 = vmatprep.subr.mxu0 0.0
    %141 = vmatpush1.msra.mxu0 0.0
    %142 = vmatprep.subr.mxu0 0.0
    %143 = vmatpush1.msra.mxu0 0.0
    %144 = vmatprep.subr.mxu0 0.0
    %145 = vmatpush1.msra.mxu0 0.0
    %146 = vmatprep.subr.mxu0 0.0
    %147 = vmatpush1.msra.mxu0 0.0
    %148 = vmatprep.subr.mxu0 0.0
    %149 = vmatpush1.msra.mxu0 0.0
    %150 = vmatprep.subr.mxu0 0.0
    %151 = vmatpush1.msra.mxu0 0.0
    %152 = vmatprep.subr.mxu0 0.0
    %153 = vmatpush1.msra.mxu0 0.0
    %154 = vmatprep.subr.mxu0 0.0
    %155 = vmatpush1.msra.mxu0 0.0
    %156 = vmatprep.subr.mxu0 0.0
    %157 = vmatpush1.msra.mxu0 0.0
    %158 = vmatprep.subr.mxu0 0.0
    %159 = vmatpush1.msra.mxu0 0.0
    %160 = vmatprep.subr.mxu0 0.0
    %161 = vmatpush1.msra.mxu0 0.0
    %162 = vmatprep.subr.mxu0 0.0
    %163 = vmatpush1.msra.mxu0 0.0
    %164 = vmatprep.subr.mxu0 0.0
    %165 = vmatpush1.msra.mxu0 0.0
    %166 = vmatprep.subr.mxu0 0.0
    %167 = vmatpush1.msra.mxu0 0.0
    %168 = vmatprep.subr.mxu0 0.0
    %169 = vmatpush1.msra.mxu0 0.0
    %170 = vmatprep.subr.mxu0 0.0
    %171 = vmatpush1.msra.mxu0 0.0
    %172 = vmatprep.subr.mxu0 0.0
    %173 = vmatpush1.msra.mxu0 0.0
    %174 = vmatprep.subr.mxu0 0.0
    %175 = vmatpush1.msra.mxu0 0.0
    %176 = vmatprep.subr.mxu0 0.0
    %177 = vmatpush1.msra.mxu0 0.0
    %178 = vmatprep.subr.mxu0 0.0
    %179 = vmatpush1.msra.mxu0 0.0
    %180 = vmatprep.subr.mxu0 0.0
    %181 = vmatpush1.msra.mxu0 0.0
    %182 = vmatprep.subr.mxu0 0.0
    %183 = vmatpush1.msra.mxu0 0.0
    %184 = vmatprep.subr.mxu0 0.0
    %185 = vmatpush1.msra.mxu0 0.0
    %186 = vmatprep.subr.mxu0 0.0
    %187 = vmatpush1.msra.mxu0 0.0
    %188 = vmatprep.subr.mxu0 0.0
    %189 = vmatpush1.msra.mxu0 0.0
    %190 = vmatprep.mubr.f32.mxu0 0.0
    %191 = vmatmul.mubr.f32.gmra.mrb[0].mxu0 %v115
    %v192 = vpop.f32.mrb[0].mxu0
    %v193 = vadd.f32 %v112, %v192
    %v194 = vpop.f32.mrb[0].mxu0
    %195 = vmatprep.mubr.f32.mxu0 0.0
    %196 = vmatmul.mubr.f32.gmra.mrb[0].mxu0 %v118
    %v197 = vpop.f32.mrb[0].mxu0
    %v198 = vadd.f32 %v112, %v197
    %v199 = vpop.f32.mrb[0].mxu0
    %200 = vmatprep.mubr.f32.mxu0 0.0
    %201 = vmatmul.mubr.f32.gmra.mrb[0].mxu0 %v121
    %v202 = vpop.f32.mrb[0].mxu0
    %v203 = vadd.f32 %v112, %v202
    %v204 = vpop.f32.mrb[0].mxu0
    %205 = vmatprep.mubr.f32.mxu0 0.0
    %206 = vmatmul.mubr.f32.gmra.mrb[0].mxu0 %v124
    %v207 = vpop.f32.mrb[0].mxu0
    %v208 = vadd.f32 %v112, %v207
    %v209 = vpop.f32.mrb[0].mxu0
    %210 = vdwg.mxu0
    %v211 = vld [vmem:[%s3] sm:$0xff]
    %v212 = vld [vmem:[%s3 + $0x8] sm:$0xff]
    %v213 = vld [vmem:[%s3 + $0x10] sm:$0xff]
    %v214 = vld [vmem:[%s3 + $0x18] sm:$0xff]
    %v215 = vld [vmem:[%s4] sm:$0x1]
    %v217 = vlaneseq
    %v218 = vshrl.u32 %v217, 7
    %v219 = vsub.s32 0, %v218
    %v220 = vrot.slane %v215, %v219
    %222 = vmatprep.subr.mxu0 0.0
    %223 = vmatpush1.msra.mxu0 %v211
    %224 = vmatprep.subr.mxu0 0.0
    %225 = vmatpush1.msra.mxu0 %v212
    %226 = vmatprep.subr.mxu0 0.0
    %227 = vmatpush1.msra.mxu0 %v213
    %228 = vmatprep.subr.mxu0 0.0
    %229 = vmatpush1.msra.mxu0 %v214
    %230 = vmatprep.subr.mxu0 0.0
    %231 = vmatpush1.msra.mxu0 0.0
    %232 = vmatprep.subr.mxu0 0.0
    %233 = vmatpush1.msra.mxu0 0.0
    %234 = vmatprep.subr.mxu0 0.0
    %235 = vmatpush1.msra.mxu0 0.0
    %236 = vmatprep.subr.mxu0 0.0
    %237 = vmatpush1.msra.mxu0 0.0
    %238 = vmatprep.subr.mxu0 0.0
    %239 = vmatpush1.msra.mxu0 0.0
    %240 = vmatprep.subr.mxu0 0.0
    %241 = vmatpush1.msra.mxu0 0.0
    %242 = vmatprep.subr.mxu0 0.0
    %243 = vmatpush1.msra.mxu0 0.0
    %244 = vmatprep.subr.mxu0 0.0
    %245 = vmatpush1.msra.mxu0 0.0
    %246 = vmatprep.subr.mxu0 0.0
    %247 = vmatpush1.msra.mxu0 0.0
    %248 = vmatprep.subr.mxu0 0.0
    %249 = vmatpush1.msra.mxu0 0.0
    %250 = vmatprep.subr.mxu0 0.0
    %251 = vmatpush1.msra.mxu0 0.0
    %252 = vmatprep.subr.mxu0 0.0
    %253 = vmatpush1.msra.mxu0 0.0
    %254 = vmatprep.subr.mxu0 0.0
    %255 = vmatpush1.msra.mxu0 0.0
    %256 = vmatprep.subr.mxu0 0.0
    %257 = vmatpush1.msra.mxu0 0.0
    %258 = vmatprep.subr.mxu0 0.0
    %259 = vmatpush1.msra.mxu0 0.0
    %260 = vmatprep.subr.mxu0 0.0
    %261 = vmatpush1.msra.mxu0 0.0
    %262 = vmatprep.subr.mxu0 0.0
    %263 = vmatpush1.msra.mxu0 0.0
    %264 = vmatprep.subr.mxu0 0.0
    %265 = vmatpush1.msra.mxu0 0.0
    %266 = vmatprep.subr.mxu0 0.0
    %267 = vmatpush1.msra.mxu0 0.0
    %268 = vmatprep.subr.mxu0 0.0
    %269 = vmatpush1.msra.mxu0 0.0
    %270 = vmatprep.subr.mxu0 0.0
    %271 = vmatpush1.msra.mxu0 0.0
    %272 = vmatprep.subr.mxu0 0.0
    %273 = vmatpush1.msra.mxu0 0.0
    %274 = vmatprep.subr.mxu0 0.0
    %275 = vmatpush1.msra.mxu0 0.0
    %276 = vmatprep.subr.mxu0 0.0
    %277 = vmatpush1.msra.mxu0 0.0
    %278 = vmatprep.subr.mxu0 0.0
    %279 = vmatpush1.msra.mxu0 0.0
    %280 = vmatprep.subr.mxu0 0.0
    %281 = vmatpush1.msra.mxu0 0.0
    %282 = vmatprep.subr.mxu0 0.0
    %283 = vmatpush1.msra.mxu0 0.0
    %284 = vmatprep.subr.mxu0 0.0
    %285 = vmatpush1.msra.mxu0 0.0
    %286 = vmatprep.mubr.f32.mxu0 0.0
    %287 = vmatmul.mubr.f32.gmra.mrb[0].mxu0 %v115
    %v288 = vpop.f32.mrb[0].mxu0
    %v289 = vadd.f32 %v220, %v288
    %v290 = vpop.f32.mrb[0].mxu0
    %291 = vmatprep.mubr.f32.mxu0 0.0
    %292 = vmatmul.mubr.f32.gmra.mrb[0].mxu0 %v118
    %v293 = vpop.f32.mrb[0].mxu0
    %v294 = vadd.f32 %v220, %v293
    %v295 = vpop.f32.mrb[0].mxu0
    %296 = vmatprep.mubr.f32.mxu0 0.0
    %297 = vmatmul.mubr.f32.gmra.mrb[0].mxu0 %v121
    %v298 = vpop.f32.mrb[0].mxu0
    %v299 = vadd.f32 %v220, %v298
    %v300 = vpop.f32.mrb[0].mxu0
    %301 = vmatprep.mubr.f32.mxu0 0.0
    %302 = vmatmul.mubr.f32.gmra.mrb[0].mxu0 %v124
    %v303 = vpop.f32.mrb[0].mxu0
    %v304 = vadd.f32 %v220, %v303
    %v305 = vpop.f32.mrb[0].mxu0
    %306 = vdwg.mxu0
    %v307 = vld [vmem:[%s5] sm:$0xff]
    %v308 = vld [vmem:[%s5 + $0x8] sm:$0xff]
    %v309 = vld [vmem:[%s5 + $0x10] sm:$0xff]
    %v310 = vld [vmem:[%s5 + $0x18] sm:$0xff]
    %v311 = vld [vmem:[%s6] sm:$0x1]
    %v313 = vlaneseq
    %v314 = vshrl.u32 %v313, 7
    %v315 = vsub.s32 0, %v314
    %v316 = vrot.slane %v311, %v315
    %318 = vmatprep.subr.mxu0 0.0
    %319 = vmatpush1.msra.mxu0 %v307
    %320 = vmatprep.subr.mxu0 0.0
    %321 = vmatpush1.msra.mxu0 %v308
    %322 = vmatprep.subr.mxu0 0.0
    %323 = vmatpush1.msra.mxu0 %v309
    %324 = vmatprep.subr.mxu0 0.0
    %325 = vmatpush1.msra.mxu0 %v310
    %326 = vmatprep.subr.mxu0 0.0
    %327 = vmatpush1.msra.mxu0 0.0
    %328 = vmatprep.subr.mxu0 0.0
    %329 = vmatpush1.msra.mxu0 0.0
    %330 = vmatprep.subr.mxu0 0.0
    %331 = vmatpush1.msra.mxu0 0.0
    %332 = vmatprep.subr.mxu0 0.0
    %333 = vmatpush1.msra.mxu0 0.0
    %334 = vmatprep.subr.mxu0 0.0
    %335 = vmatpush1.msra.mxu0 0.0
    %336 = vmatprep.subr.mxu0 0.0
    %337 = vmatpush1.msra.mxu0 0.0
    %338 = vmatprep.subr.mxu0 0.0
    %339 = vmatpush1.msra.mxu0 0.0
    %340 = vmatprep.subr.mxu0 0.0
    %341 = vmatpush1.msra.mxu0 0.0
    %342 = vmatprep.subr.mxu0 0.0
    %343 = vmatpush1.msra.mxu0 0.0
    %344 = vmatprep.subr.mxu0 0.0
    %345 = vmatpush1.msra.mxu0 0.0
    %346 = vmatprep.subr.mxu0 0.0
    %347 = vmatpush1.msra.mxu0 0.0
    %348 = vmatprep.subr.mxu0 0.0
    %349 = vmatpush1.msra.mxu0 0.0
    %350 = vmatprep.subr.mxu0 0.0
    %351 = vmatpush1.msra.mxu0 0.0
    %352 = vmatprep.subr.mxu0 0.0
    %353 = vmatpush1.msra.mxu0 0.0
    %354 = vmatprep.subr.mxu0 0.0
    %355 = vmatpush1.msra.mxu0 0.0
    %356 = vmatprep.subr.mxu0 0.0
    %357 = vmatpush1.msra.mxu0 0.0
    %358 = vmatprep.subr.mxu0 0.0
    %359 = vmatpush1.msra.mxu0 0.0
    %360 = vmatprep.subr.mxu0 0.0
    %361 = vmatpush1.msra.mxu0 0.0
    %362 = vmatprep.subr.mxu0 0.0
    %363 = vmatpush1.msra.mxu0 0.0
    %364 = vmatprep.subr.mxu0 0.0
    %365 = vmatpush1.msra.mxu0 0.0
    %366 = vmatprep.subr.mxu0 0.0
    %367 = vmatpush1.msra.mxu0 0.0
    %368 = vmatprep.subr.mxu0 0.0
    %369 = vmatpush1.msra.mxu0 0.0
    %370 = vmatprep.subr.mxu0 0.0
    %371 = vmatpush1.msra.mxu0 0.0
    %372 = vmatprep.subr.mxu0 0.0
    %373 = vmatpush1.msra.mxu0 0.0
    %374 = vmatprep.subr.mxu0 0.0
    %375 = vmatpush1.msra.mxu0 0.0
    %376 = vmatprep.subr.mxu0 0.0
    %377 = vmatpush1.msra.mxu0 0.0
    %378 = vmatprep.subr.mxu0 0.0
    %379 = vmatpush1.msra.mxu0 0.0
    %380 = vmatprep.subr.mxu0 0.0
    %381 = vmatpush1.msra.mxu0 0.0
    %382 = vmatprep.mubr.f32.mxu0 0.0
    %383 = vmatmul.mubr.f32.gmra.mrb[0].mxu0 %v115
    %v384 = vpop.f32.mrb[0].mxu0
    %v385 = vadd.f32 %v316, %v384
    %v386 = vpop.f32.mrb[0].mxu0
    %387 = vmatprep.mubr.f32.mxu0 0.0
    %388 = vmatmul.mubr.f32.gmra.mrb[0].mxu0 %v118
    %v389 = vpop.f32.mrb[0].mxu0
    %v390 = vadd.f32 %v316, %v389
    %v391 = vpop.f32.mrb[0].mxu0
    %392 = vmatprep.mubr.f32.mxu0 0.0
    %393 = vmatmul.mubr.f32.gmra.mrb[0].mxu0 %v121
    %v394 = vpop.f32.mrb[0].mxu0
    %v395 = vadd.f32 %v316, %v394
    %v396 = vpop.f32.mrb[0].mxu0
    %397 = vmatprep.mubr.f32.mxu0 0.0
    %398 = vmatmul.mubr.f32.gmra.mrb[0].mxu0 %v124
    %v399 = vpop.f32.mrb[0].mxu0
    %v400 = vadd.f32 %v316, %v399
    %v401 = vpop.f32.mrb[0].mxu0
    %402 = vdwg.mxu0
    %v403 = vld [vmem:[%s8] sm:$0x1]
    %v405 = vlaneseq
    %v406 = vshrl.u32 %v405, 7
    %v407 = vsub.s32 0, %v406
    %v408 = vrot.slane %v403, %v407
    %v410 = vadd.f32 %v45, %v408
    %v411 = vadd.f32 %v46, %v408
    %v412 = vadd.f32 %v47, %v408
    %v413 = vadd.f32 %v48, %v408
    %vm414 = vcmask 31744
    %v416 = vsel %vm414, %v193, 0
    %v419 = vsel %vm414, %v198, 0
    %v422 = vsel %vm414, %v289, 0
    %v425 = vsel %vm414, %v294, 0
    %427 = vmatprep.subr.mxu0 0.0
    %428 = vmatpush1.xpose.msra.mxu0 %v422
    %429 = vmatprep.subr.mxu0 0.0
    %430 = vmatpush1.xpose.msra.mxu0 %v425
    %431 = vmatprep.subr.mxu0 0.0
    %432 = vmatpush1.xpose.msra.mxu0 0.0
    %433 = vmatprep.subr.mxu0 0.0
    %434 = vmatpush1.xpose.msra.mxu0 0.0
    %435 = vmatprep.subr.mxu0 0.0
    %436 = vmatpush1.xpose.msra.mxu0 0.0
    %437 = vmatprep.subr.mxu0 0.0
    %438 = vmatpush1.xpose.msra.mxu0 0.0
    %439 = vmatprep.subr.mxu0 0.0
    %440 = vmatpush1.xpose.msra.mxu0 0.0
    %441 = vmatprep.subr.mxu0 0.0
    %442 = vmatpush1.xpose.msra.mxu0 0.0
    %443 = vmatprep.subr.mxu0 0.0
    %444 = vmatpush1.xpose.msra.mxu0 0.0
    %445 = vmatprep.subr.mxu0 0.0
    %446 = vmatpush1.xpose.msra.mxu0 0.0
    %447 = vmatprep.subr.mxu0 0.0
    %448 = vmatpush1.xpose.msra.mxu0 0.0
    %449 = vmatprep.subr.mxu0 0.0
    %450 = vmatpush1.xpose.msra.mxu0 0.0
    %451 = vmatprep.subr.mxu0 0.0
    %452 = vmatpush1.xpose.msra.mxu0 0.0
    %453 = vmatprep.subr.mxu0 0.0
    %454 = vmatpush1.xpose.msra.mxu0 0.0
    %455 = vmatprep.subr.mxu0 0.0
    %456 = vmatpush1.xpose.msra.mxu0 0.0
    %457 = vmatprep.subr.mxu0 0.0
    %458 = vmatpush1.xpose.msra.mxu0 0.0
    %459 = vmatprep.subr.mxu0 0.0
    %460 = vmatpush1.xpose.msra.mxu0 0.0
    %461 = vmatprep.subr.mxu0 0.0
    %462 = vmatpush1.xpose.msra.mxu0 0.0
    %463 = vmatprep.subr.mxu0 0.0
    %464 = vmatpush1.xpose.msra.mxu0 0.0
    %465 = vmatprep.subr.mxu0 0.0
    %466 = vmatpush1.xpose.msra.mxu0 0.0
    %467 = vmatprep.subr.mxu0 0.0
    %468 = vmatpush1.xpose.msra.mxu0 0.0
    %469 = vmatprep.subr.mxu0 0.0
    %470 = vmatpush1.xpose.msra.mxu0 0.0
    %471 = vmatprep.subr.mxu0 0.0
    %472 = vmatpush1.xpose.msra.mxu0 0.0
    %473 = vmatprep.subr.mxu0 0.0
    %474 = vmatpush1.xpose.msra.mxu0 0.0
    %475 = vmatprep.subr.mxu0 0.0
    %476 = vmatpush1.xpose.msra.mxu0 0.0
    %477 = vmatprep.subr.mxu0 0.0
    %478 = vmatpush1.xpose.msra.mxu0 0.0
    %479 = vmatprep.subr.mxu0 0.0
    %480 = vmatpush1.xpose.msra.mxu0 0.0
    %481 = vmatprep.subr.mxu0 0.0
    %482 = vmatpush1.xpose.msra.mxu0 0.0
    %483 = vmatprep.subr.mxu0 0.0
    %484 = vmatpush1.xpose.msra.mxu0 0.0
    %485 = vmatprep.subr.mxu0 0.0
    %486 = vmatpush1.xpose.msra.mxu0 0.0
    %487 = vmatprep.subr.mxu0 0.0
    %488 = vmatpush1.xpose.msra.mxu0 0.0
    %489 = vmatprep.subr.mxu0 0.0
    %490 = vmatpush1.xpose.msra.mxu0 0.0
    %491 = vmatprep.mubr.f32.mxu0 0.0
    %492 = vmatmul.mubr.f32.gmra.mrb[0].mxu0 %v416
    %v493 = vpop.f32.mrb[0].mxu0
    %v494 = vadd.f32 0.0, %v493
    %v495 = vpop.f32.mrb[0].mxu0
    %496 = vmatprep.mubr.f32.mxu0 0.0
    %497 = vmatmul.mubr.f32.gmra.mrb[0].mxu0 %v419
    %v498 = vpop.f32.mrb[0].mxu0
    %v499 = vadd.f32 0.0, %v498
    %v500 = vpop.f32.mrb[0].mxu0
    %501 = vdwg.mxu0
    %v503 = vsel %vm414, %v203, 0
    %v506 = vsel %vm414, %v208, 0
    %v509 = vsel %vm414, %v299, 0
    %v512 = vsel %vm414, %v304, 0
    %514 = vmatprep.subr.mxu0 0.0
    %515 = vmatpush1.xpose.msra.mxu0 %v509
    %516 = vmatprep.subr.mxu0 0.0
    %517 = vmatpush1.xpose.msra.mxu0 %v512
    %518 = vmatprep.subr.mxu0 0.0
    %519 = vmatpush1.xpose.msra.mxu0 0.0
    %520 = vmatprep.subr.mxu0 0.0
    %521 = vmatpush1.xpose.msra.mxu0 0.0
    %522 = vmatprep.subr.mxu0 0.0
    %523 = vmatpush1.xpose.msra.mxu0 0.0
    %524 = vmatprep.subr.mxu0 0.0
    %525 = vmatpush1.xpose.msra.mxu0 0.0
    %526 = vmatprep.subr.mxu0 0.0
    %527 = vmatpush1.xpose.msra.mxu0 0.0
    %528 = vmatprep.subr.mxu0 0.0
    %529 = vmatpush1.xpose.msra.mxu0 0.0
    %530 = vmatprep.subr.mxu0 0.0
    %531 = vmatpush1.xpose.msra.mxu0 0.0
    %532 = vmatprep.subr.mxu0 0.0
    %533 = vmatpush1.xpose.msra.mxu0 0.0
    %534 = vmatprep.subr.mxu0 0.0
    %535 = vmatpush1.xpose.msra.mxu0 0.0
    %536 = vmatprep.subr.mxu0 0.0
    %537 = vmatpush1.xpose.msra.mxu0 0.0
    %538 = vmatprep.subr.mxu0 0.0
    %539 = vmatpush1.xpose.msra.mxu0 0.0
    %540 = vmatprep.subr.mxu0 0.0
    %541 = vmatpush1.xpose.msra.mxu0 0.0
    %542 = vmatprep.subr.mxu0 0.0
    %543 = vmatpush1.xpose.msra.mxu0 0.0
    %544 = vmatprep.subr.mxu0 0.0
    %545 = vmatpush1.xpose.msra.mxu0 0.0
    %546 = vmatprep.subr.mxu0 0.0
    %547 = vmatpush1.xpose.msra.mxu0 0.0
    %548 = vmatprep.subr.mxu0 0.0
    %549 = vmatpush1.xpose.msra.mxu0 0.0
    %550 = vmatprep.subr.mxu0 0.0
    %551 = vmatpush1.xpose.msra.mxu0 0.0
    %552 = vmatprep.subr.mxu0 0.0
    %553 = vmatpush1.xpose.msra.mxu0 0.0
    %554 = vmatprep.subr.mxu0 0.0
    %555 = vmatpush1.xpose.msra.mxu0 0.0
    %556 = vmatprep.subr.mxu0 0.0
    %557 = vmatpush1.xpose.msra.mxu0 0.0
    %558 = vmatprep.subr.mxu0 0.0
    %559 = vmatpush1.xpose.msra.mxu0 0.0
    %560 = vmatprep.subr.mxu0 0.0
    %561 = vmatpush1.xpose.msra.mxu0 0.0
    %562 = vmatprep.subr.mxu0 0.0
    %563 = vmatpush1.xpose.msra.mxu0 0.0
    %564 = vmatprep.subr.mxu0 0.0
    %565 = vmatpush1.xpose.msra.mxu0 0.0
    %566 = vmatprep.subr.mxu0 0.0
    %567 = vmatpush1.xpose.msra.mxu0 0.0
    %568 = vmatprep.subr.mxu0 0.0
    %569 = vmatpush1.xpose.msra.mxu0 0.0
    %570 = vmatprep.subr.mxu0 0.0
    %571 = vmatpush1.xpose.msra.mxu0 0.0
    %572 = vmatprep.subr.mxu0 0.0
    %573 = vmatpush1.xpose.msra.mxu0 0.0
    %574 = vmatprep.subr.mxu0 0.0
    %575 = vmatpush1.xpose.msra.mxu0 0.0
    %576 = vmatprep.subr.mxu0 0.0
    %577 = vmatpush1.xpose.msra.mxu0 0.0
    %578 = vmatprep.mubr.f32.mxu0 0.0
    %579 = vmatmul.mubr.f32.gmra.mrb[0].mxu0 %v503
    %v580 = vpop.f32.mrb[0].mxu0
    %v581 = vadd.f32 0.0, %v580
    %v582 = vpop.f32.mrb[0].mxu0
    %583 = vmatprep.mubr.f32.mxu0 0.0
    %584 = vmatmul.mubr.f32.gmra.mrb[0].mxu0 %v506
    %v585 = vpop.f32.mrb[0].mxu0
    %v586 = vadd.f32 0.0, %v585
    %v587 = vpop.f32.mrb[0].mxu0
    %588 = vdwg.mxu0
    %vm589 = vcmask 130048
    %v590 = vsel %vm589, %v494, -inf
    %591 = vmax.xlane.f32.xlu0 %v590
    %v592 = vpop.xlane.xlu0 %591
    %v593 = vsel %vm589, %v499, -inf
    %594 = vmax.xlane.f32.xlu0 %v593
    %v595 = vpop.xlane.xlu0 %594
    %v596 = vsel %vm589, %v581, -inf
    %597 = vmax.xlane.f32.xlu0 %v596
    %v598 = vpop.xlane.xlu0 %597
    %v599 = vsel %vm589, %v586, -inf
    %600 = vmax.xlane.f32.xlu0 %v599
    %v601 = vpop.xlane.xlu0 %600
    %v602 = vsub.f32 %v494, %v592
    %v603 = vsub.f32 %v499, %v595
    %v604 = vsub.f32 %v581, %v598
    %v605 = vsub.f32 %v586, %v601
    %v606 = vmul.f32 %v602, 1.442695
    %v607 = vpow.pop %v606
    %v608 = vmul.f32 %v603, 1.442695
    %v609 = vpow.pop %v608
    %v610 = vmul.f32 %v604, 1.442695
    %v611 = vpow.pop %v610
    %v612 = vmul.f32 %v605, 1.442695
    %v613 = vpow.pop %v612
    %v614 = vsel %vm589, %v607, 0.0
    %615 = vadd.xlane.f32.xlu0 %v614
    %v616 = vpop.xlane.xlu0 %615
    %v617 = vsel %vm589, %v609, 0.0
    %618 = vadd.xlane.f32.xlu0 %v617
    %v619 = vpop.xlane.xlu0 %618
    %v620 = vsel %vm589, %v611, 0.0
    %621 = vadd.xlane.f32.xlu0 %v620
    %v622 = vpop.xlane.xlu0 %621
    %v623 = vsel %vm589, %v613, 0.0
    %624 = vadd.xlane.f32.xlu0 %v623
    %v625 = vpop.xlane.xlu0 %624
    %v626 = vrcp.pop %v616
    %v627 = vrcp.pop %v619
    %v628 = vrcp.pop %v622
    %v629 = vrcp.pop %v625
    %v630 = vmul.f32 %v607, %v626
    %v631 = vmul.f32 %v609, %v627
    %v632 = vmul.f32 %v611, %v628
    %v633 = vmul.f32 %v613, %v629
    %v635 = vsel %vm589, %v630, 0
    %v638 = vsel %vm589, %v631, 0
    %640 = vmatprep.subr.mxu0 0.0
    %641 = vmatpush1.msra.mxu0 %v385
    %642 = vmatprep.subr.mxu0 0.0
    %643 = vmatpush1.msra.mxu0 %v390
    %644 = vmatprep.subr.mxu0 0.0
    %645 = vmatpush1.msra.mxu0 0.0
    %646 = vmatprep.subr.mxu0 0.0
    %647 = vmatpush1.msra.mxu0 0.0
    %648 = vmatprep.subr.mxu0 0.0
    %649 = vmatpush1.msra.mxu0 0.0
    %650 = vmatprep.subr.mxu0 0.0
    %651 = vmatpush1.msra.mxu0 0.0
    %652 = vmatprep.subr.mxu0 0.0
    %653 = vmatpush1.msra.mxu0 0.0
    %654 = vmatprep.subr.mxu0 0.0
    %655 = vmatpush1.msra.mxu0 0.0
    %656 = vmatprep.subr.mxu0 0.0
    %657 = vmatpush1.msra.mxu0 0.0
    %658 = vmatprep.subr.mxu0 0.0
    %659 = vmatpush1.msra.mxu0 0.0
    %660 = vmatprep.subr.mxu0 0.0
    %661 = vmatpush1.msra.mxu0 0.0
    %662 = vmatprep.subr.mxu0 0.0
    %663 = vmatpush1.msra.mxu0 0.0
    %664 = vmatprep.subr.mxu0 0.0
    %665 = vmatpush1.msra.mxu0 0.0
    %666 = vmatprep.subr.mxu0 0.0
    %667 = vmatpush1.msra.mxu0 0.0
    %668 = vmatprep.subr.mxu0 0.0
    %669 = vmatpush1.msra.mxu0 0.0
    %670 = vmatprep.subr.mxu0 0.0
    %671 = vmatpush1.msra.mxu0 0.0
    %672 = vmatprep.subr.mxu0 0.0
    %673 = vmatpush1.msra.mxu0 0.0
    %674 = vmatprep.subr.mxu0 0.0
    %675 = vmatpush1.msra.mxu0 0.0
    %676 = vmatprep.subr.mxu0 0.0
    %677 = vmatpush1.msra.mxu0 0.0
    %678 = vmatprep.subr.mxu0 0.0
    %679 = vmatpush1.msra.mxu0 0.0
    %680 = vmatprep.subr.mxu0 0.0
    %681 = vmatpush1.msra.mxu0 0.0
    %682 = vmatprep.subr.mxu0 0.0
    %683 = vmatpush1.msra.mxu0 0.0
    %684 = vmatprep.subr.mxu0 0.0
    %685 = vmatpush1.msra.mxu0 0.0
    %686 = vmatprep.subr.mxu0 0.0
    %687 = vmatpush1.msra.mxu0 0.0
    %688 = vmatprep.subr.mxu0 0.0
    %689 = vmatpush1.msra.mxu0 0.0
    %690 = vmatprep.subr.mxu0 0.0
    %691 = vmatpush1.msra.mxu0 0.0
    %692 = vmatprep.subr.mxu0 0.0
    %693 = vmatpush1.msra.mxu0 0.0
    %694 = vmatprep.subr.mxu0 0.0
    %695 = vmatpush1.msra.mxu0 0.0
    %696 = vmatprep.subr.mxu0 0.0
    %697 = vmatpush1.msra.mxu0 0.0
    %698 = vmatprep.subr.mxu0 0.0
    %699 = vmatpush1.msra.mxu0 0.0
    %700 = vmatprep.subr.mxu0 0.0
    %701 = vmatpush1.msra.mxu0 0.0
    %702 = vmatprep.subr.mxu0 0.0
    %703 = vmatpush1.msra.mxu0 0.0
    %704 = vmatprep.mubr.f32.mxu0 0.0
    %705 = vmatmul.mubr.f32.gmra.mrb[0].mxu0 %v635
    %v706 = vpop.f32.mrb[0].mxu0
    %v707 = vadd.f32 0.0, %v706
    %v708 = vpop.f32.mrb[0].mxu0
    %709 = vmatprep.mubr.f32.mxu0 0.0
    %710 = vmatmul.mubr.f32.gmra.mrb[0].mxu0 %v638
    %v711 = vpop.f32.mrb[0].mxu0
    %v712 = vadd.f32 0.0, %v711
    %v713 = vpop.f32.mrb[0].mxu0
    %714 = vdwg.mxu0
    %v716 = vsel %vm589, %v632, 0
    %v719 = vsel %vm589, %v633, 0
    %721 = vmatprep.subr.mxu0 0.0
    %722 = vmatpush1.msra.mxu0 %v395
    %723 = vmatprep.subr.mxu0 0.0
    %724 = vmatpush1.msra.mxu0 %v400
    %725 = vmatprep.subr.mxu0 0.0
    %726 = vmatpush1.msra.mxu0 0.0
    %727 = vmatprep.subr.mxu0 0.0
    %728 = vmatpush1.msra.mxu0 0.0
    %729 = vmatprep.subr.mxu0 0.0
    %730 = vmatpush1.msra.mxu0 0.0
    %731 = vmatprep.subr.mxu0 0.0
    %732 = vmatpush1.msra.mxu0 0.0
    %733 = vmatprep.subr.mxu0 0.0
    %734 = vmatpush1.msra.mxu0 0.0
    %735 = vmatprep.subr.mxu0 0.0
    %736 = vmatpush1.msra.mxu0 0.0
    %737 = vmatprep.subr.mxu0 0.0
    %738 = vmatpush1.msra.mxu0 0.0
    %739 = vmatprep.subr.mxu0 0.0
    %740 = vmatpush1.msra.mxu0 0.0
    %741 = vmatprep.subr.mxu0 0.0
    %742 = vmatpush1.msra.mxu0 0.0
    %743 = vmatprep.subr.mxu0 0.0
    %744 = vmatpush1.msra.mxu0 0.0
    %745 = vmatprep.subr.mxu0 0.0
    %746 = vmatpush1.msra.mxu0 0.0
    %747 = vmatprep.subr.mxu0 0.0
    %748 = vmatpush1.msra.mxu0 0.0
    %749 = vmatprep.subr.mxu0 0.0
    %750 = vmatpush1.msra.mxu0 0.0
    %751 = vmatprep.subr.mxu0 0.0
    %752 = vmatpush1.msra.mxu0 0.0
    %753 = vmatprep.subr.mxu0 0.0
    %754 = vmatpush1.msra.mxu0 0.0
    %755 = vmatprep.subr.mxu0 0.0
    %756 = vmatpush1.msra.mxu0 0.0
    %757 = vmatprep.subr.mxu0 0.0
    %758 = vmatpush1.msra.mxu0 0.0
    %759 = vmatprep.subr.mxu0 0.0
    %760 = vmatpush1.msra.mxu0 0.0
    %761 = vmatprep.subr.mxu0 0.0
    %762 = vmatpush1.msra.mxu0 0.0
    %763 = vmatprep.subr.mxu0 0.0
    %764 = vmatpush1.msra.mxu0 0.0
    %765 = vmatprep.subr.mxu0 0.0
    %766 = vmatpush1.msra.mxu0 0.0
    %767 = vmatprep.subr.mxu0 0.0
    %768 = vmatpush1.msra.mxu0 0.0
    %769 = vmatprep.subr.mxu0 0.0
    %770 = vmatpush1.msra.mxu0 0.0
    %771 = vmatprep.subr.mxu0 0.0
    %772 = vmatpush1.msra.mxu0 0.0
    %773 = vmatprep.subr.mxu0 0.0
    %774 = vmatpush1.msra.mxu0 0.0
    %775 = vmatprep.subr.mxu0 0.0
    %776 = vmatpush1.msra.mxu0 0.0
    %777 = vmatprep.subr.mxu0 0.0
    %778 = vmatpush1.msra.mxu0 0.0
    %779 = vmatprep.subr.mxu0 0.0
    %780 = vmatpush1.msra.mxu0 0.0
    %781 = vmatprep.subr.mxu0 0.0
    %782 = vmatpush1.msra.mxu0 0.0
    %783 = vmatprep.subr.mxu0 0.0
    %784 = vmatpush1.msra.mxu0 0.0
    %785 = vmatprep.mubr.f32.mxu0 0.0
    %786 = vmatmul.mubr.f32.gmra.mrb[0].mxu0 %v716
    %v787 = vpop.f32.mrb[0].mxu0
    %v788 = vadd.f32 0.0, %v787
    %v789 = vpop.f32.mrb[0].mxu0
    %790 = vmatprep.mubr.f32.mxu0 0.0
    %791 = vmatmul.mubr.f32.gmra.mrb[0].mxu0 %v719
    %v792 = vpop.f32.mrb[0].mxu0
    %v793 = vadd.f32 0.0, %v792
    %v794 = vpop.f32.mrb[0].mxu0
    %795 = vdwg.mxu0
    %v796 = vld [vmem:[%s7] sm:$0xf]
    %v798 = vsel %vm414, %v707, 0
    %v801 = vsel %vm414, %v712, 0
    %v804 = vsel %vm414, %v788, 0
    %v807 = vsel %vm414, %v793, 0
    %vm809 = vcmask 1043456
    %v811 = vsel %vm809, %v796, 0
    %813 = vmatprep.subr.mxu0 0.0
    %814 = vmatpush1.msra.mxu0 %v811
    %815 = vmatprep.subr.mxu0 0.0
    %816 = vmatpush1.msra.mxu0 0.0
    %817 = vmatprep.subr.mxu0 0.0
    %818 = vmatpush1.msra.mxu0 0.0
    %819 = vmatprep.subr.mxu0 0.0
    %820 = vmatpush1.msra.mxu0 0.0
    %821 = vmatprep.subr.mxu0 0.0
    %822 = vmatpush1.msra.mxu0 0.0
    %823 = vmatprep.subr.mxu0 0.0
    %824 = vmatpush1.msra.mxu0 0.0
    %825 = vmatprep.subr.mxu0 0.0
    %826 = vmatpush1.msra.mxu0 0.0
    %827 = vmatprep.subr.mxu0 0.0
    %828 = vmatpush1.msra.mxu0 0.0
    %829 = vmatprep.subr.mxu0 0.0
    %830 = vmatpush1.msra.mxu0 0.0
    %831 = vmatprep.subr.mxu0 0.0
    %832 = vmatpush1.msra.mxu0 0.0
    %833 = vmatprep.subr.mxu0 0.0
    %834 = vmatpush1.msra.mxu0 0.0
    %835 = vmatprep.subr.mxu0 0.0
    %836 = vmatpush1.msra.mxu0 0.0
    %837 = vmatprep.subr.mxu0 0.0
    %838 = vmatpush1.msra.mxu0 0.0
    %839 = vmatprep.subr.mxu0 0.0
    %840 = vmatpush1.msra.mxu0 0.0
    %841 = vmatprep.subr.mxu0 0.0
    %842 = vmatpush1.msra.mxu0 0.0
    %843 = vmatprep.subr.mxu0 0.0
    %844 = vmatpush1.msra.mxu0 0.0
    %845 = vmatprep.subr.mxu0 0.0
    %846 = vmatpush1.msra.mxu0 0.0
    %847 = vmatprep.subr.mxu0 0.0
    %848 = vmatpush1.msra.mxu0 0.0
    %849 = vmatprep.subr.mxu0 0.0
    %850 = vmatpush1.msra.mxu0 0.0
    %851 = vmatprep.subr.mxu0 0.0
    %852 = vmatpush1.msra.mxu0 0.0
    %853 = vmatprep.subr.mxu0 0.0
    %854 = vmatpush1.msra.mxu0 0.0
    %855 = vmatprep.subr.mxu0 0.0
    %856 = vmatpush1.msra.mxu0 0.0
    %857 = vmatprep.subr.mxu0 0.0
    %858 = vmatpush1.msra.mxu0 0.0
    %859 = vmatprep.subr.mxu0 0.0
    %860 = vmatpush1.msra.mxu0 0.0
    %861 = vmatprep.subr.mxu0 0.0
    %862 = vmatpush1.msra.mxu0 0.0
    %863 = vmatprep.subr.mxu0 0.0
    %864 = vmatpush1.msra.mxu0 0.0
    %865 = vmatprep.subr.mxu0 0.0
    %866 = vmatpush1.msra.mxu0 0.0
    %867 = vmatprep.subr.mxu0 0.0
    %868 = vmatpush1.msra.mxu0 0.0
    %869 = vmatprep.subr.mxu0 0.0
    %870 = vmatpush1.msra.mxu0 0.0
    %871 = vmatprep.subr.mxu0 0.0
    %872 = vmatpush1.msra.mxu0 0.0
    %873 = vmatprep.subr.mxu0 0.0
    %874 = vmatpush1.msra.mxu0 0.0
    %875 = vmatprep.subr.mxu0 0.0
    %876 = vmatpush1.msra.mxu0 0.0
    %877 = vmatprep.mubr.f32.mxu0 0.0
    %878 = vmatmul.mubr.f32.gmra.mrb[0].mxu0 %v798
    %v879 = vpop.f32.mrb[0].mxu0
    %v880 = vadd.f32 0.0, %v879
    %v881 = vpop.f32.mrb[0].mxu0
    %882 = vmatprep.mubr.f32.mxu0 0.0
    %883 = vmatmul.mubr.f32.gmra.mrb[0].mxu0 %v801
    %v884 = vpop.f32.mrb[0].mxu0
    %v885 = vadd.f32 0.0, %v884
    %v886 = vpop.f32.mrb[0].mxu0
    %887 = vmatprep.mubr.f32.mxu0 0.0
    %888 = vmatmul.mubr.f32.gmra.mrb[0].mxu0 %v804
    %v889 = vpop.f32.mrb[0].mxu0
    %v890 = vadd.f32 0.0, %v889
    %v891 = vpop.f32.mrb[0].mxu0
    %892 = vmatprep.mubr.f32.mxu0 0.0
    %893 = vmatmul.mubr.f32.gmra.mrb[0].mxu0 %v807
    %v894 = vpop.f32.mrb[0].mxu0
    %v895 = vadd.f32 0.0, %v894
    %v896 = vpop.f32.mrb[0].mxu0
    %897 = vdwg.mxu0
    %v898 = vadd.f32 %v410, %v880
    %v899 = vadd.f32 %v411, %v885
    %v900 = vadd.f32 %v412, %v890
    %v901 = vadd.f32 %v413, %v895
    %902 = vrot.lane.b32.xlu0 %v193, 124
    %v903 = vpop.permute.xlu0 %902
    %904 = vrot.lane.b32.xlu0 %v198, 124
    %v905 = vpop.permute.xlu0 %904
    %v906 = vsel %vm414, %v903, 0
    %v908 = vsel %vm414, %v905, 0
    %910 = vmatprep.subr.mxu0 0.0
    %911 = vmatpush1.xpose.msra.mxu0 %v422
    %912 = vmatprep.subr.mxu0 0.0
    %913 = vmatpush1.xpose.msra.mxu0 %v425
    %914 = vmatprep.subr.mxu0 0.0
    %915 = vmatpush1.xpose.msra.mxu0 0.0
    %916 = vmatprep.subr.mxu0 0.0
    %917 = vmatpush1.xpose.msra.mxu0 0.0
    %918 = vmatprep.subr.mxu0 0.0
    %919 = vmatpush1.xpose.msra.mxu0 0.0
    %920 = vmatprep.subr.mxu0 0.0
    %921 = vmatpush1.xpose.msra.mxu0 0.0
    %922 = vmatprep.subr.mxu0 0.0
    %923 = vmatpush1.xpose.msra.mxu0 0.0
    %924 = vmatprep.subr.mxu0 0.0
    %925 = vmatpush1.xpose.msra.mxu0 0.0
    %926 = vmatprep.subr.mxu0 0.0
    %927 = vmatpush1.xpose.msra.mxu0 0.0
    %928 = vmatprep.subr.mxu0 0.0
    %929 = vmatpush1.xpose.msra.mxu0 0.0
    %930 = vmatprep.subr.mxu0 0.0
    %931 = vmatpush1.xpose.msra.mxu0 0.0
    %932 = vmatprep.subr.mxu0 0.0
    %933 = vmatpush1.xpose.msra.mxu0 0.0
    %934 = vmatprep.subr.mxu0 0.0
    %935 = vmatpush1.xpose.msra.mxu0 0.0
    %936 = vmatprep.subr.mxu0 0.0
    %937 = vmatpush1.xpose.msra.mxu0 0.0
    %938 = vmatprep.subr.mxu0 0.0
    %939 = vmatpush1.xpose.msra.mxu0 0.0
    %940 = vmatprep.subr.mxu0 0.0
    %941 = vmatpush1.xpose.msra.mxu0 0.0
    %942 = vmatprep.subr.mxu0 0.0
    %943 = vmatpush1.xpose.msra.mxu0 0.0
    %944 = vmatprep.subr.mxu0 0.0
    %945 = vmatpush1.xpose.msra.mxu0 0.0
    %946 = vmatprep.subr.mxu0 0.0
    %947 = vmatpush1.xpose.msra.mxu0 0.0
    %948 = vmatprep.subr.mxu0 0.0
    %949 = vmatpush1.xpose.msra.mxu0 0.0
    %950 = vmatprep.subr.mxu0 0.0
    %951 = vmatpush1.xpose.msra.mxu0 0.0
    %952 = vmatprep.subr.mxu0 0.0
    %953 = vmatpush1.xpose.msra.mxu0 0.0
    %954 = vmatprep.subr.mxu0 0.0
    %955 = vmatpush1.xpose.msra.mxu0 0.0
    %956 = vmatprep.subr.mxu0 0.0
    %957 = vmatpush1.xpose.msra.mxu0 0.0
    %958 = vmatprep.subr.mxu0 0.0
    %959 = vmatpush1.xpose.msra.mxu0 0.0
    %960 = vmatprep.subr.mxu0 0.0
    %961 = vmatpush1.xpose.msra.mxu0 0.0
    %962 = vmatprep.subr.mxu0 0.0
    %963 = vmatpush1.xpose.msra.mxu0 0.0
    %964 = vmatprep.subr.mxu0 0.0
    %965 = vmatpush1.xpose.msra.mxu0 0.0
    %966 = vmatprep.subr.mxu0 0.0
    %967 = vmatpush1.xpose.msra.mxu0 0.0
    %968 = vmatprep.subr.mxu0 0.0
    %969 = vmatpush1.xpose.msra.mxu0 0.0
    %970 = vmatprep.subr.mxu0 0.0
    %971 = vmatpush1.xpose.msra.mxu0 0.0
    %972 = vmatprep.subr.mxu0 0.0
    %973 = vmatpush1.xpose.msra.mxu0 0.0
    %974 = vmatprep.mubr.f32.mxu0 0.0
    %975 = vmatmul.mubr.f32.gmra.mrb[0].mxu0 %v906
    %v976 = vpop.f32.mrb[0].mxu0
    %v977 = vadd.f32 0.0, %v976
    %v978 = vpop.f32.mrb[0].mxu0
    %979 = vmatprep.mubr.f32.mxu0 0.0
    %980 = vmatmul.mubr.f32.gmra.mrb[0].mxu0 %v908
    %v981 = vpop.f32.mrb[0].mxu0
    %v982 = vadd.f32 0.0, %v981
    %v983 = vpop.f32.mrb[0].mxu0
    %984 = vdwg.mxu0
    %985 = vrot.lane.b32.xlu0 %v203, 124
    %v986 = vpop.permute.xlu0 %985
    %987 = vrot.lane.b32.xlu0 %v208, 124
    %v988 = vpop.permute.xlu0 %987
    %v989 = vsel %vm414, %v986, 0
    %v991 = vsel %vm414, %v988, 0
    %993 = vmatprep.subr.mxu0 0.0
    %994 = vmatpush1.xpose.msra.mxu0 %v509
    %995 = vmatprep.subr.mxu0 0.0
    %996 = vmatpush1.xpose.msra.mxu0 %v512
    %997 = vmatprep.subr.mxu0 0.0
    %998 = vmatpush1.xpose.msra.mxu0 0.0
    %999 = vmatprep.subr.mxu0 0.0
    %1000 = vmatpush1.xpose.msra.mxu0 0.0
    %1001 = vmatprep.subr.mxu0 0.0
    %1002 = vmatpush1.xpose.msra.mxu0 0.0
    %1003 = vmatprep.subr.mxu0 0.0
    %1004 = vmatpush1.xpose.msra.mxu0 0.0
    %1005 = vmatprep.subr.mxu0 0.0
    %1006 = vmatpush1.xpose.msra.mxu0 0.0
    %1007 = vmatprep.subr.mxu0 0.0
    %1008 = vmatpush1.xpose.msra.mxu0 0.0
    %1009 = vmatprep.subr.mxu0 0.0
    %1010 = vmatpush1.xpose.msra.mxu0 0.0
    %1011 = vmatprep.subr.mxu0 0.0
    %1012 = vmatpush1.xpose.msra.mxu0 0.0
    %1013 = vmatprep.subr.mxu0 0.0
    %1014 = vmatpush1.xpose.msra.mxu0 0.0
    %1015 = vmatprep.subr.mxu0 0.0
    %1016 = vmatpush1.xpose.msra.mxu0 0.0
    %1017 = vmatprep.subr.mxu0 0.0
    %1018 = vmatpush1.xpose.msra.mxu0 0.0
    %1019 = vmatprep.subr.mxu0 0.0
    %1020 = vmatpush1.xpose.msra.mxu0 0.0
    %1021 = vmatprep.subr.mxu0 0.0
    %1022 = vmatpush1.xpose.msra.mxu0 0.0
    %1023 = vmatprep.subr.mxu0 0.0
    %1024 = vmatpush1.xpose.msra.mxu0 0.0
    %1025 = vmatprep.subr.mxu0 0.0
    %1026 = vmatpush1.xpose.msra.mxu0 0.0
    %1027 = vmatprep.subr.mxu0 0.0
    %1028 = vmatpush1.xpose.msra.mxu0 0.0
    %1029 = vmatprep.subr.mxu0 0.0
    %1030 = vmatpush1.xpose.msra.mxu0 0.0
    %1031 = vmatprep.subr.mxu0 0.0
    %1032 = vmatpush1.xpose.msra.mxu0 0.0
    %1033 = vmatprep.subr.mxu0 0.0
    %1034 = vmatpush1.xpose.msra.mxu0 0.0
    %1035 = vmatprep.subr.mxu0 0.0
    %1036 = vmatpush1.xpose.msra.mxu0 0.0
    %1037 = vmatprep.subr.mxu0 0.0
    %1038 = vmatpush1.xpose.msra.mxu0 0.0
    %1039 = vmatprep.subr.mxu0 0.0
    %1040 = vmatpush1.xpose.msra.mxu0 0.0
    %1041 = vmatprep.subr.mxu0 0.0
    %1042 = vmatpush1.xpose.msra.mxu0 0.0
    %1043 = vmatprep.subr.mxu0 0.0
    %1044 = vmatpush1.xpose.msra.mxu0 0.0
    %1045 = vmatprep.subr.mxu0 0.0
    %1046 = vmatpush1.xpose.msra.mxu0 0.0
    %1047 = vmatprep.subr.mxu0 0.0
    %1048 = vmatpush1.xpose.msra.mxu0 0.0
    %1049 = vmatprep.subr.mxu0 0.0
    %1050 = vmatpush1.xpose.msra.mxu0 0.0
    %1051 = vmatprep.subr.mxu0 0.0
    %1052 = vmatpush1.xpose.msra.mxu0 0.0
    %1053 = vmatprep.subr.mxu0 0.0
    %1054 = vmatpush1.xpose.msra.mxu0 0.0
    %1055 = vmatprep.subr.mxu0 0.0
    %1056 = vmatpush1.xpose.msra.mxu0 0.0
    %1057 = vmatprep.mubr.f32.mxu0 0.0
    %1058 = vmatmul.mubr.f32.gmra.mrb[0].mxu0 %v989
    %v1059 = vpop.f32.mrb[0].mxu0
    %v1060 = vadd.f32 0.0, %v1059
    %v1061 = vpop.f32.mrb[0].mxu0
    %1062 = vmatprep.mubr.f32.mxu0 0.0
    %1063 = vmatmul.mubr.f32.gmra.mrb[0].mxu0 %v991
    %v1064 = vpop.f32.mrb[0].mxu0
    %v1065 = vadd.f32 0.0, %v1064
    %v1066 = vpop.f32.mrb[0].mxu0
    %1067 = vdwg.mxu0
    %v1068 = vsel %vm589, %v977, -inf
    %1069 = vmax.xlane.f32.xlu0 %v1068
    %v1070 = vpop.xlane.xlu0 %1069
    %v1071 = vsel %vm589, %v982, -inf
    %1072 = vmax.xlane.f32.xlu0 %v1071
    %v1073 = vpop.xlane.xlu0 %1072
    %v1074 = vsel %vm589, %v1060, -inf
    %1075 = vmax.xlane.f32.xlu0 %v1074
    %v1076 = vpop.xlane.xlu0 %1075
    %v1077 = vsel %vm589, %v1065, -inf
    %1078 = vmax.xlane.f32.xlu0 %v1077
    %v1079 = vpop.xlane.xlu0 %1078
    %v1080 = vsub.f32 %v977, %v1070
    %v1081 = vsub.f32 %v982, %v1073
    %v1082 = vsub.f32 %v1060, %v1076
    %v1083 = vsub.f32 %v1065, %v1079
    %v1084 = vmul.f32 %v1080, 1.442695
    %v1085 = vpow.pop %v1084
    %v1086 = vmul.f32 %v1081, 1.442695
    %v1087 = vpow.pop %v1086
    %v1088 = vmul.f32 %v1082, 1.442695
    %v1089 = vpow.pop %v1088
    %v1090 = vmul.f32 %v1083, 1.442695
    %v1091 = vpow.pop %v1090
    %v1092 = vsel %vm589, %v1085, 0.0
    %1093 = vadd.xlane.f32.xlu0 %v1092
    %v1094 = vpop.xlane.xlu0 %1093
    %v1095 = vsel %vm589, %v1087, 0.0
    %1096 = vadd.xlane.f32.xlu0 %v1095
    %v1097 = vpop.xlane.xlu0 %1096
    %v1098 = vsel %vm589, %v1089, 0.0
    %1099 = vadd.xlane.f32.xlu0 %v1098
    %v1100 = vpop.xlane.xlu0 %1099
    %v1101 = vsel %vm589, %v1091, 0.0
    %1102 = vadd.xlane.f32.xlu0 %v1101
    %v1103 = vpop.xlane.xlu0 %1102
    %v1104 = vrcp.pop %v1094
    %v1105 = vrcp.pop %v1097
    %v1106 = vrcp.pop %v1100
    %v1107 = vrcp.pop %v1103
    %v1108 = vmul.f32 %v1085, %v1104
    %v1109 = vmul.f32 %v1087, %v1105
    %v1110 = vmul.f32 %v1089, %v1106
    %v1111 = vmul.f32 %v1091, %v1107
    %v1113 = vsel %vm589, %v1108, 0
    %v1116 = vsel %vm589, %v1109, 0
    %1118 = vmatprep.subr.mxu0 0.0
    %1119 = vmatpush1.msra.mxu0 %v385
    %1120 = vmatprep.subr.mxu0 0.0
    %1121 = vmatpush1.msra.mxu0 %v390
    %1122 = vmatprep.subr.mxu0 0.0
    %1123 = vmatpush1.msra.mxu0 0.0
    %1124 = vmatprep.subr.mxu0 0.0
    %1125 = vmatpush1.msra.mxu0 0.0
    %1126 = vmatprep.subr.mxu0 0.0
    %1127 = vmatpush1.msra.mxu0 0.0
    %1128 = vmatprep.subr.mxu0 0.0
    %1129 = vmatpush1.msra.mxu0 0.0
    %1130 = vmatprep.subr.mxu0 0.0
    %1131 = vmatpush1.msra.mxu0 0.0
    %1132 = vmatprep.subr.mxu0 0.0
    %1133 = vmatpush1.msra.mxu0 0.0
    %1134 = vmatprep.subr.mxu0 0.0
    %1135 = vmatpush1.msra.mxu0 0.0
    %1136 = vmatprep.subr.mxu0 0.0
    %1137 = vmatpush1.msra.mxu0 0.0
    %1138 = vmatprep.subr.mxu0 0.0
    %1139 = vmatpush1.msra.mxu0 0.0
    %1140 = vmatprep.subr.mxu0 0.0
    %1141 = vmatpush1.msra.mxu0 0.0
    %1142 = vmatprep.subr.mxu0 0.0
    %1143 = vmatpush1.msra.mxu0 0.0
    %1144 = vmatprep.subr.mxu0 0.0
    %1145 = vmatpush1.msra.mxu0 0.0
    %1146 = vmatprep.subr.mxu0 0.0
    %1147 = vmatpush1.msra.mxu0 0.0
    %1148 = vmatprep.subr.mxu0 0.0
    %1149 = vmatpush1.msra.mxu0 0.0
    %1150 = vmatprep.subr.mxu0 0.0
    %1151 = vmatpush1.msra.mxu0 0.0
    %1152 = vmatprep.subr.mxu0 0.0
    %1153 = vmatpush1.msra.mxu0 0.0
    %1154 = vmatprep.subr.mxu0 0.0
    %1155 = vmatpush1.msra.mxu0 0.0
    %1156 = vmatprep.subr.mxu0 0.0
    %1157 = vmatpush1.msra.mxu0 0.0
    %1158 = vmatprep.subr.mxu0 0.0
    %1159 = vmatpush1.msra.mxu0 0.0
    %1160 = vmatprep.subr.mxu0 0.0
    %1161 = vmatpush1.msra.mxu0 0.0
    %1162 = vmatprep.subr.mxu0 0.0
    %1163 = vmatpush1.msra.mxu0 0.0
    %1164 = vmatprep.subr.mxu0 0.0
    %1165 = vmatpush1.msra.mxu0 0.0
    %1166 = vmatprep.subr.mxu0 0.0
    %1167 = vmatpush1.msra.mxu0 0.0
    %1168 = vmatprep.subr.mxu0 0.0
    %1169 = vmatpush1.msra.mxu0 0.0
    %1170 = vmatprep.subr.mxu0 0.0
    %1171 = vmatpush1.msra.mxu0 0.0
    %1172 = vmatprep.subr.mxu0 0.0
    %1173 = vmatpush1.msra.mxu0 0.0
    %1174 = vmatprep.subr.mxu0 0.0
    %1175 = vmatpush1.msra.mxu0 0.0
    %1176 = vmatprep.subr.mxu0 0.0
    %1177 = vmatpush1.msra.mxu0 0.0
    %1178 = vmatprep.subr.mxu0 0.0
    %1179 = vmatpush1.msra.mxu0 0.0
    %1180 = vmatprep.subr.mxu0 0.0
    %1181 = vmatpush1.msra.mxu0 0.0
    %1182 = vmatprep.mubr.f32.mxu0 0.0
    %1183 = vmatmul.mubr.f32.gmra.mrb[0].mxu0 %v1113
    %v1184 = vpop.f32.mrb[0].mxu0
    %v1185 = vadd.f32 0.0, %v1184
    %v1186 = vpop.f32.mrb[0].mxu0
    %1187 = vmatprep.mubr.f32.mxu0 0.0
    %1188 = vmatmul.mubr.f32.gmra.mrb[0].mxu0 %v1116
    %v1189 = vpop.f32.mrb[0].mxu0
    %v1190 = vadd.f32 0.0, %v1189
    %v1191 = vpop.f32.mrb[0].mxu0
    %1192 = vdwg.mxu0
    %v1194 = vsel %vm589, %v1110, 0
    %v1197 = vsel %vm589, %v1111, 0
    %1199 = vmatprep.subr.mxu0 0.0
    %1200 = vmatpush1.msra.mxu0 %v395
    %1201 = vmatprep.subr.mxu0 0.0
    %1202 = vmatpush1.msra.mxu0 %v400
    %1203 = vmatprep.subr.mxu0 0.0
    %1204 = vmatpush1.msra.mxu0 0.0
    %1205 = vmatprep.subr.mxu0 0.0
    %1206 = vmatpush1.msra.mxu0 0.0
    %1207 = vmatprep.subr.mxu0 0.0
    %1208 = vmatpush1.msra.mxu0 0.0
    %1209 = vmatprep.subr.mxu0 0.0
    %1210 = vmatpush1.msra.mxu0 0.0
    %1211 = vmatprep.subr.mxu0 0.0
    %1212 = vmatpush1.msra.mxu0 0.0
    %1213 = vmatprep.subr.mxu0 0.0
    %1214 = vmatpush1.msra.mxu0 0.0
    %1215 = vmatprep.subr.mxu0 0.0
    %1216 = vmatpush1.msra.mxu0 0.0
    %1217 = vmatprep.subr.mxu0 0.0
    %1218 = vmatpush1.msra.mxu0 0.0
    %1219 = vmatprep.subr.mxu0 0.0
    %1220 = vmatpush1.msra.mxu0 0.0
    %1221 = vmatprep.subr.mxu0 0.0
    %1222 = vmatpush1.msra.mxu0 0.0
    %1223 = vmatprep.subr.mxu0 0.0
    %1224 = vmatpush1.msra.mxu0 0.0
    %1225 = vmatprep.subr.mxu0 0.0
    %1226 = vmatpush1.msra.mxu0 0.0
    %1227 = vmatprep.subr.mxu0 0.0
    %1228 = vmatpush1.msra.mxu0 0.0
    %1229 = vmatprep.subr.mxu0 0.0
    %1230 = vmatpush1.msra.mxu0 0.0
    %1231 = vmatprep.subr.mxu0 0.0
    %1232 = vmatpush1.msra.mxu0 0.0
    %1233 = vmatprep.subr.mxu0 0.0
    %1234 = vmatpush1.msra.mxu0 0.0
    %1235 = vmatprep.subr.mxu0 0.0
    %1236 = vmatpush1.msra.mxu0 0.0
    %1237 = vmatprep.subr.mxu0 0.0
    %1238 = vmatpush1.msra.mxu0 0.0
    %1239 = vmatprep.subr.mxu0 0.0
    %1240 = vmatpush1.msra.mxu0 0.0
    %1241 = vmatprep.subr.mxu0 0.0
    %1242 = vmatpush1.msra.mxu0 0.0
    %1243 = vmatprep.subr.mxu0 0.0
    %1244 = vmatpush1.msra.mxu0 0.0
    %1245 = vmatprep.subr.mxu0 0.0
    %1246 = vmatpush1.msra.mxu0 0.0
    %1247 = vmatprep.subr.mxu0 0.0
    %1248 = vmatpush1.msra.mxu0 0.0
    %1249 = vmatprep.subr.mxu0 0.0
    %1250 = vmatpush1.msra.mxu0 0.0
    %1251 = vmatprep.subr.mxu0 0.0
    %1252 = vmatpush1.msra.mxu0 0.0
    %1253 = vmatprep.subr.mxu0 0.0
    %1254 = vmatpush1.msra.mxu0 0.0
    %1255 = vmatprep.subr.mxu0 0.0
    %1256 = vmatpush1.msra.mxu0 0.0
    %1257 = vmatprep.subr.mxu0 0.0
    %1258 = vmatpush1.msra.mxu0 0.0
    %1259 = vmatprep.subr.mxu0 0.0
    %1260 = vmatpush1.msra.mxu0 0.0
    %1261 = vmatprep.subr.mxu0 0.0
    %1262 = vmatpush1.msra.mxu0 0.0
    %1263 = vmatprep.mubr.f32.mxu0 0.0
    %1264 = vmatmul.mubr.f32.gmra.mrb[0].mxu0 %v1194
    %v1265 = vpop.f32.mrb[0].mxu0
    %v1266 = vadd.f32 0.0, %v1265
    %v1267 = vpop.f32.mrb[0].mxu0
    %1268 = vmatprep.mubr.f32.mxu0 0.0
    %1269 = vmatmul.mubr.f32.gmra.mrb[0].mxu0 %v1197
    %v1270 = vpop.f32.mrb[0].mxu0
    %v1271 = vadd.f32 0.0, %v1270
    %v1272 = vpop.f32.mrb[0].mxu0
    %1273 = vdwg.mxu0
    %s1274 = scalar_lea.vmem %s7, 4
    %v1275 = vld [vmem:[%s1274] sm:$0xf]
    %v1277 = vsel %vm414, %v1185, 0
    %v1280 = vsel %vm414, %v1190, 0
    %v1283 = vsel %vm414, %v1266, 0
    %v1286 = vsel %vm414, %v1271, 0
    %v1289 = vsel %vm809, %v1275, 0
    %1291 = vmatprep.subr.mxu0 0.0
    %1292 = vmatpush1.msra.mxu0 %v1289
    %1293 = vmatprep.subr.mxu0 0.0
    %1294 = vmatpush1.msra.mxu0 0.0
    %1295 = vmatprep.subr.mxu0 0.0
    %1296 = vmatpush1.msra.mxu0 0.0
    %1297 = vmatprep.subr.mxu0 0.0
    %1298 = vmatpush1.msra.mxu0 0.0
    %1299 = vmatprep.subr.mxu0 0.0
    %1300 = vmatpush1.msra.mxu0 0.0
    %1301 = vmatprep.subr.mxu0 0.0
    %1302 = vmatpush1.msra.mxu0 0.0
    %1303 = vmatprep.subr.mxu0 0.0
    %1304 = vmatpush1.msra.mxu0 0.0
    %1305 = vmatprep.subr.mxu0 0.0
    %1306 = vmatpush1.msra.mxu0 0.0
    %1307 = vmatprep.subr.mxu0 0.0
    %1308 = vmatpush1.msra.mxu0 0.0
    %1309 = vmatprep.subr.mxu0 0.0
    %1310 = vmatpush1.msra.mxu0 0.0
    %1311 = vmatprep.subr.mxu0 0.0
    %1312 = vmatpush1.msra.mxu0 0.0
    %1313 = vmatprep.subr.mxu0 0.0
    %1314 = vmatpush1.msra.mxu0 0.0
    %1315 = vmatprep.subr.mxu0 0.0
    %1316 = vmatpush1.msra.mxu0 0.0
    %1317 = vmatprep.subr.mxu0 0.0
    %1318 = vmatpush1.msra.mxu0 0.0
    %1319 = vmatprep.subr.mxu0 0.0
    %1320 = vmatpush1.msra.mxu0 0.0
    %1321 = vmatprep.subr.mxu0 0.0
    %1322 = vmatpush1.msra.mxu0 0.0
    %1323 = vmatprep.subr.mxu0 0.0
    %1324 = vmatpush1.msra.mxu0 0.0
    %1325 = vmatprep.subr.mxu0 0.0
    %1326 = vmatpush1.msra.mxu0 0.0
    %1327 = vmatprep.subr.mxu0 0.0
    %1328 = vmatpush1.msra.mxu0 0.0
    %1329 = vmatprep.subr.mxu0 0.0
    %1330 = vmatpush1.msra.mxu0 0.0
    %1331 = vmatprep.subr.mxu0 0.0
    %1332 = vmatpush1.msra.mxu0 0.0
    %1333 = vmatprep.subr.mxu0 0.0
    %1334 = vmatpush1.msra.mxu0 0.0
    %1335 = vmatprep.subr.mxu0 0.0
    %1336 = vmatpush1.msra.mxu0 0.0
    %1337 = vmatprep.subr.mxu0 0.0
    %1338 = vmatpush1.msra.mxu0 0.0
    %1339 = vmatprep.subr.mxu0 0.0
    %1340 = vmatpush1.msra.mxu0 0.0
    %1341 = vmatprep.subr.mxu0 0.0
    %1342 = vmatpush1.msra.mxu0 0.0
    %1343 = vmatprep.subr.mxu0 0.0
    %1344 = vmatpush1.msra.mxu0 0.0
    %1345 = vmatprep.subr.mxu0 0.0
    %1346 = vmatpush1.msra.mxu0 0.0
    %1347 = vmatprep.subr.mxu0 0.0
    %1348 = vmatpush1.msra.mxu0 0.0
    %1349 = vmatprep.subr.mxu0 0.0
    %1350 = vmatpush1.msra.mxu0 0.0
    %1351 = vmatprep.subr.mxu0 0.0
    %1352 = vmatpush1.msra.mxu0 0.0
    %1353 = vmatprep.subr.mxu0 0.0
    %1354 = vmatpush1.msra.mxu0 0.0
    %1355 = vmatprep.mubr.f32.mxu0 0.0
    %1356 = vmatmul.mubr.f32.gmra.mrb[0].mxu0 %v1277
    %v1357 = vpop.f32.mrb[0].mxu0
    %v1358 = vadd.f32 0.0, %v1357
    %v1359 = vpop.f32.mrb[0].mxu0
    %1360 = vmatprep.mubr.f32.mxu0 0.0
    %1361 = vmatmul.mubr.f32.gmra.mrb[0].mxu0 %v1280
    %v1362 = vpop.f32.mrb[0].mxu0
    %v1363 = vadd.f32 0.0, %v1362
    %v1364 = vpop.f32.mrb[0].mxu0
    %1365 = vmatprep.mubr.f32.mxu0 0.0
    %1366 = vmatmul.mubr.f32.gmra.mrb[0].mxu0 %v1283
    %v1367 = vpop.f32.mrb[0].mxu0
    %v1368 = vadd.f32 0.0, %v1367
    %v1369 = vpop.f32.mrb[0].mxu0
    %1370 = vmatprep.mubr.f32.mxu0 0.0
    %1371 = vmatmul.mubr.f32.gmra.mrb[0].mxu0 %v1286
    %v1372 = vpop.f32.mrb[0].mxu0
    %v1373 = vadd.f32 0.0, %v1372
    %v1374 = vpop.f32.mrb[0].mxu0
    %1375 = vdwg.mxu0
    %v1376 = vadd.f32 %v898, %v1358
    %v1377 = vadd.f32 %v899, %v1363
    %v1378 = vadd.f32 %v900, %v1368
    %v1379 = vadd.f32 %v901, %v1373
    %1380 = vrot.lane.b32.xlu0 %v193, 120
    %v1381 = vpop.permute.xlu0 %1380
    %1382 = vrot.lane.b32.xlu0 %v198, 120
    %v1383 = vpop.permute.xlu0 %1382
    %v1384 = vsel %vm414, %v1381, 0
    %v1386 = vsel %vm414, %v1383, 0
    %1388 = vmatprep.subr.mxu0 0.0
    %1389 = vmatpush1.xpose.msra.mxu0 %v422
    %1390 = vmatprep.subr.mxu0 0.0
    %1391 = vmatpush1.xpose.msra.mxu0 %v425
    %1392 = vmatprep.subr.mxu0 0.0
    %1393 = vmatpush1.xpose.msra.mxu0 0.0
    %1394 = vmatprep.subr.mxu0 0.0
    %1395 = vmatpush1.xpose.msra.mxu0 0.0
    %1396 = vmatprep.subr.mxu0 0.0
    %1397 = vmatpush1.xpose.msra.mxu0 0.0
    %1398 = vmatprep.subr.mxu0 0.0
    %1399 = vmatpush1.xpose.msra.mxu0 0.0
    %1400 = vmatprep.subr.mxu0 0.0
    %1401 = vmatpush1.xpose.msra.mxu0 0.0
    %1402 = vmatprep.subr.mxu0 0.0
    %1403 = vmatpush1.xpose.msra.mxu0 0.0
    %1404 = vmatprep.subr.mxu0 0.0
    %1405 = vmatpush1.xpose.msra.mxu0 0.0
    %1406 = vmatprep.subr.mxu0 0.0
    %1407 = vmatpush1.xpose.msra.mxu0 0.0
    %1408 = vmatprep.subr.mxu0 0.0
    %1409 = vmatpush1.xpose.msra.mxu0 0.0
    %1410 = vmatprep.subr.mxu0 0.0
    %1411 = vmatpush1.xpose.msra.mxu0 0.0
    %1412 = vmatprep.subr.mxu0 0.0
    %1413 = vmatpush1.xpose.msra.mxu0 0.0
    %1414 = vmatprep.subr.mxu0 0.0
    %1415 = vmatpush1.xpose.msra.mxu0 0.0
    %1416 = vmatprep.subr.mxu0 0.0
    %1417 = vmatpush1.xpose.msra.mxu0 0.0
    %1418 = vmatprep.subr.mxu0 0.0
    %1419 = vmatpush1.xpose.msra.mxu0 0.0
    %1420 = vmatprep.subr.mxu0 0.0
    %1421 = vmatpush1.xpose.msra.mxu0 0.0
    %1422 = vmatprep.subr.mxu0 0.0
    %1423 = vmatpush1.xpose.msra.mxu0 0.0
    %1424 = vmatprep.subr.mxu0 0.0
    %1425 = vmatpush1.xpose.msra.mxu0 0.0
    %1426 = vmatprep.subr.mxu0 0.0
    %1427 = vmatpush1.xpose.msra.mxu0 0.0
    %1428 = vmatprep.subr.mxu0 0.0
    %1429 = vmatpush1.xpose.msra.mxu0 0.0
    %1430 = vmatprep.subr.mxu0 0.0
    %1431 = vmatpush1.xpose.msra.mxu0 0.0
    %1432 = vmatprep.subr.mxu0 0.0
    %1433 = vmatpush1.xpose.msra.mxu0 0.0
    %1434 = vmatprep.subr.mxu0 0.0
    %1435 = vmatpush1.xpose.msra.mxu0 0.0
    %1436 = vmatprep.subr.mxu0 0.0
    %1437 = vmatpush1.xpose.msra.mxu0 0.0
    %1438 = vmatprep.subr.mxu0 0.0
    %1439 = vmatpush1.xpose.msra.mxu0 0.0
    %1440 = vmatprep.subr.mxu0 0.0
    %1441 = vmatpush1.xpose.msra.mxu0 0.0
    %1442 = vmatprep.subr.mxu0 0.0
    %1443 = vmatpush1.xpose.msra.mxu0 0.0
    %1444 = vmatprep.subr.mxu0 0.0
    %1445 = vmatpush1.xpose.msra.mxu0 0.0
    %1446 = vmatprep.subr.mxu0 0.0
    %1447 = vmatpush1.xpose.msra.mxu0 0.0
    %1448 = vmatprep.subr.mxu0 0.0
    %1449 = vmatpush1.xpose.msra.mxu0 0.0
    %1450 = vmatprep.subr.mxu0 0.0
    %1451 = vmatpush1.xpose.msra.mxu0 0.0
    %1452 = vmatprep.mubr.f32.mxu0 0.0
    %1453 = vmatmul.mubr.f32.gmra.mrb[0].mxu0 %v1384
    %v1454 = vpop.f32.mrb[0].mxu0
    %v1455 = vadd.f32 0.0, %v1454
    %v1456 = vpop.f32.mrb[0].mxu0
    %1457 = vmatprep.mubr.f32.mxu0 0.0
    %1458 = vmatmul.mubr.f32.gmra.mrb[0].mxu0 %v1386
    %v1459 = vpop.f32.mrb[0].mxu0
    %v1460 = vadd.f32 0.0, %v1459
    %v1461 = vpop.f32.mrb[0].mxu0
    %1462 = vdwg.mxu0
    %1463 = vrot.lane.b32.xlu0 %v203, 120
    %v1464 = vpop.permute.xlu0 %1463
    %1465 = vrot.lane.b32.xlu0 %v208, 120
    %v1466 = vpop.permute.xlu0 %1465
    %v1467 = vsel %vm414, %v1464, 0
    %v1469 = vsel %vm414, %v1466, 0
    %1471 = vmatprep.subr.mxu0 0.0
    %1472 = vmatpush1.xpose.msra.mxu0 %v509
    %1473 = vmatprep.subr.mxu0 0.0
    %1474 = vmatpush1.xpose.msra.mxu0 %v512
    %1475 = vmatprep.subr.mxu0 0.0
    %1476 = vmatpush1.xpose.msra.mxu0 0.0
    %1477 = vmatprep.subr.mxu0 0.0
    %1478 = vmatpush1.xpose.msra.mxu0 0.0
    %1479 = vmatprep.subr.mxu0 0.0
    %1480 = vmatpush1.xpose.msra.mxu0 0.0
    %1481 = vmatprep.subr.mxu0 0.0
    %1482 = vmatpush1.xpose.msra.mxu0 0.0
    %1483 = vmatprep.subr.mxu0 0.0
    %1484 = vmatpush1.xpose.msra.mxu0 0.0
    %1485 = vmatprep.subr.mxu0 0.0
    %1486 = vmatpush1.xpose.msra.mxu0 0.0
    %1487 = vmatprep.subr.mxu0 0.0
    %1488 = vmatpush1.xpose.msra.mxu0 0.0
    %1489 = vmatprep.subr.mxu0 0.0
    %1490 = vmatpush1.xpose.msra.mxu0 0.0
    %1491 = vmatprep.subr.mxu0 0.0
    %1492 = vmatpush1.xpose.msra.mxu0 0.0
    %1493 = vmatprep.subr.mxu0 0.0
    %1494 = vmatpush1.xpose.msra.mxu0 0.0
    %1495 = vmatprep.subr.mxu0 0.0
    %1496 = vmatpush1.xpose.msra.mxu0 0.0
    %1497 = vmatprep.subr.mxu0 0.0
    %1498 = vmatpush1.xpose.msra.mxu0 0.0
    %1499 = vmatprep.subr.mxu0 0.0
    %1500 = vmatpush1.xpose.msra.mxu0 0.0
    %1501 = vmatprep.subr.mxu0 0.0
    %1502 = vmatpush1.xpose.msra.mxu0 0.0
    %1503 = vmatprep.subr.mxu0 0.0
    %1504 = vmatpush1.xpose.msra.mxu0 0.0
    %1505 = vmatprep.subr.mxu0 0.0
    %1506 = vmatpush1.xpose.msra.mxu0 0.0
    %1507 = vmatprep.subr.mxu0 0.0
    %1508 = vmatpush1.xpose.msra.mxu0 0.0
    %1509 = vmatprep.subr.mxu0 0.0
    %1510 = vmatpush1.xpose.msra.mxu0 0.0
    %1511 = vmatprep.subr.mxu0 0.0
    %1512 = vmatpush1.xpose.msra.mxu0 0.0
    %1513 = vmatprep.subr.mxu0 0.0
    %1514 = vmatpush1.xpose.msra.mxu0 0.0
    %1515 = vmatprep.subr.mxu0 0.0
    %1516 = vmatpush1.xpose.msra.mxu0 0.0
    %1517 = vmatprep.subr.mxu0 0.0
    %1518 = vmatpush1.xpose.msra.mxu0 0.0
    %1519 = vmatprep.subr.mxu0 0.0
    %1520 = vmatpush1.xpose.msra.mxu0 0.0
    %1521 = vmatprep.subr.mxu0 0.0
    %1522 = vmatpush1.xpose.msra.mxu0 0.0
    %1523 = vmatprep.subr.mxu0 0.0
    %1524 = vmatpush1.xpose.msra.mxu0 0.0
    %1525 = vmatprep.subr.mxu0 0.0
    %1526 = vmatpush1.xpose.msra.mxu0 0.0
    %1527 = vmatprep.subr.mxu0 0.0
    %1528 = vmatpush1.xpose.msra.mxu0 0.0
    %1529 = vmatprep.subr.mxu0 0.0
    %1530 = vmatpush1.xpose.msra.mxu0 0.0
    %1531 = vmatprep.subr.mxu0 0.0
    %1532 = vmatpush1.xpose.msra.mxu0 0.0
    %1533 = vmatprep.subr.mxu0 0.0
    %1534 = vmatpush1.xpose.msra.mxu0 0.0
    %1535 = vmatprep.mubr.f32.mxu0 0.0
    %1536 = vmatmul.mubr.f32.gmra.mrb[0].mxu0 %v1467
    %v1537 = vpop.f32.mrb[0].mxu0
    %v1538 = vadd.f32 0.0, %v1537
    %v1539 = vpop.f32.mrb[0].mxu0
    %1540 = vmatprep.mubr.f32.mxu0 0.0
    %1541 = vmatmul.mubr.f32.gmra.mrb[0].mxu0 %v1469
    %v1542 = vpop.f32.mrb[0].mxu0
    %v1543 = vadd.f32 0.0, %v1542
    %v1544 = vpop.f32.mrb[0].mxu0
    %1545 = vdwg.mxu0
    %v1546 = vsel %vm589, %v1455, -inf
    %1547 = vmax.xlane.f32.xlu0 %v1546
    %v1548 = vpop.xlane.xlu0 %1547
    %v1549 = vsel %vm589, %v1460, -inf
    %1550 = vmax.xlane.f32.xlu0 %v1549
    %v1551 = vpop.xlane.xlu0 %1550
    %v1552 = vsel %vm589, %v1538, -inf
    %1553 = vmax.xlane.f32.xlu0 %v1552
    %v1554 = vpop.xlane.xlu0 %1553
    %v1555 = vsel %vm589, %v1543, -inf
    %1556 = vmax.xlane.f32.xlu0 %v1555
    %v1557 = vpop.xlane.xlu0 %1556
    %v1558 = vsub.f32 %v1455, %v1548
    %v1559 = vsub.f32 %v1460, %v1551
    %v1560 = vsub.f32 %v1538, %v1554
    %v1561 = vsub.f32 %v1543, %v1557
    %v1562 = vmul.f32 %v1558, 1.442695
    %v1563 = vpow.pop %v1562
    %v1564 = vmul.f32 %v1559, 1.442695
    %v1565 = vpow.pop %v1564
    %v1566 = vmul.f32 %v1560, 1.442695
    %v1567 = vpow.pop %v1566
    %v1568 = vmul.f32 %v1561, 1.442695
    %v1569 = vpow.pop %v1568
    %v1570 = vsel %vm589, %v1563, 0.0
    %1571 = vadd.xlane.f32.xlu0 %v1570
    %v1572 = vpop.xlane.xlu0 %1571
    %v1573 = vsel %vm589, %v1565, 0.0
    %1574 = vadd.xlane.f32.xlu0 %v1573
    %v1575 = vpop.xlane.xlu0 %1574
    %v1576 = vsel %vm589, %v1567, 0.0
    %1577 = vadd.xlane.f32.xlu0 %v1576
    %v1578 = vpop.xlane.xlu0 %1577
    %v1579 = vsel %vm589, %v1569, 0.0
    %1580 = vadd.xlane.f32.xlu0 %v1579
    %v1581 = vpop.xlane.xlu0 %1580
    %v1582 = vrcp.pop %v1572
    %v1583 = vrcp.pop %v1575
    %v1584 = vrcp.pop %v1578
    %v1585 = vrcp.pop %v1581
    %v1586 = vmul.f32 %v1563, %v1582
    %v1587 = vmul.f32 %v1565, %v1583
    %v1588 = vmul.f32 %v1567, %v1584
    %v1589 = vmul.f32 %v1569, %v1585
    %v1591 = vsel %vm589, %v1586, 0
    %v1594 = vsel %vm589, %v1587, 0
    %1596 = vmatprep.subr.mxu0 0.0
    %1597 = vmatpush1.msra.mxu0 %v385
    %1598 = vmatprep.subr.mxu0 0.0
    %1599 = vmatpush1.msra.mxu0 %v390
    %1600 = vmatprep.subr.mxu0 0.0
    %1601 = vmatpush1.msra.mxu0 0.0
    %1602 = vmatprep.subr.mxu0 0.0
    %1603 = vmatpush1.msra.mxu0 0.0
    %1604 = vmatprep.subr.mxu0 0.0
    %1605 = vmatpush1.msra.mxu0 0.0
    %1606 = vmatprep.subr.mxu0 0.0
    %1607 = vmatpush1.msra.mxu0 0.0
    %1608 = vmatprep.subr.mxu0 0.0
    %1609 = vmatpush1.msra.mxu0 0.0
    %1610 = vmatprep.subr.mxu0 0.0
    %1611 = vmatpush1.msra.mxu0 0.0
    %1612 = vmatprep.subr.mxu0 0.0
    %1613 = vmatpush1.msra.mxu0 0.0
    %1614 = vmatprep.subr.mxu0 0.0
    %1615 = vmatpush1.msra.mxu0 0.0
    %1616 = vmatprep.subr.mxu0 0.0
    %1617 = vmatpush1.msra.mxu0 0.0
    %1618 = vmatprep.subr.mxu0 0.0
    %1619 = vmatpush1.msra.mxu0 0.0
    %1620 = vmatprep.subr.mxu0 0.0
    %1621 = vmatpush1.msra.mxu0 0.0
    %1622 = vmatprep.subr.mxu0 0.0
    %1623 = vmatpush1.msra.mxu0 0.0
    %1624 = vmatprep.subr.mxu0 0.0
    %1625 = vmatpush1.msra.mxu0 0.0
    %1626 = vmatprep.subr.mxu0 0.0
    %1627 = vmatpush1.msra.mxu0 0.0
    %1628 = vmatprep.subr.mxu0 0.0
    %1629 = vmatpush1.msra.mxu0 0.0
    %1630 = vmatprep.subr.mxu0 0.0
    %1631 = vmatpush1.msra.mxu0 0.0
    %1632 = vmatprep.subr.mxu0 0.0
    %1633 = vmatpush1.msra.mxu0 0.0
    %1634 = vmatprep.subr.mxu0 0.0
    %1635 = vmatpush1.msra.mxu0 0.0
    %1636 = vmatprep.subr.mxu0 0.0
    %1637 = vmatpush1.msra.mxu0 0.0
    %1638 = vmatprep.subr.mxu0 0.0
    %1639 = vmatpush1.msra.mxu0 0.0
    %1640 = vmatprep.subr.mxu0 0.0
    %1641 = vmatpush1.msra.mxu0 0.0
    %1642 = vmatprep.subr.mxu0 0.0
    %1643 = vmatpush1.msra.mxu0 0.0
    %1644 = vmatprep.subr.mxu0 0.0
    %1645 = vmatpush1.msra.mxu0 0.0
    %1646 = vmatprep.subr.mxu0 0.0
    %1647 = vmatpush1.msra.mxu0 0.0
    %1648 = vmatprep.subr.mxu0 0.0
    %1649 = vmatpush1.msra.mxu0 0.0
    %1650 = vmatprep.subr.mxu0 0.0
    %1651 = vmatpush1.msra.mxu0 0.0
    %1652 = vmatprep.subr.mxu0 0.0
    %1653 = vmatpush1.msra.mxu0 0.0
    %1654 = vmatprep.subr.mxu0 0.0
    %1655 = vmatpush1.msra.mxu0 0.0
    %1656 = vmatprep.subr.mxu0 0.0
    %1657 = vmatpush1.msra.mxu0 0.0
    %1658 = vmatprep.subr.mxu0 0.0
    %1659 = vmatpush1.msra.mxu0 0.0
    %1660 = vmatprep.mubr.f32.mxu0 0.0
    %1661 = vmatmul.mubr.f32.gmra.mrb[0].mxu0 %v1591
    %v1662 = vpop.f32.mrb[0].mxu0
    %v1663 = vadd.f32 0.0, %v1662
    %v1664 = vpop.f32.mrb[0].mxu0
    %1665 = vmatprep.mubr.f32.mxu0 0.0
    %1666 = vmatmul.mubr.f32.gmra.mrb[0].mxu0 %v1594
    %v1667 = vpop.f32.mrb[0].mxu0
    %v1668 = vadd.f32 0.0, %v1667
    %v1669 = vpop.f32.mrb[0].mxu0
    %1670 = vdwg.mxu0
    %v1672 = vsel %vm589, %v1588, 0
    %v1675 = vsel %vm589, %v1589, 0
    %1677 = vmatprep.subr.mxu0 0.0
    %1678 = vmatpush1.msra.mxu0 %v395
    %1679 = vmatprep.subr.mxu0 0.0
    %1680 = vmatpush1.msra.mxu0 %v400
    %1681 = vmatprep.subr.mxu0 0.0
    %1682 = vmatpush1.msra.mxu0 0.0
    %1683 = vmatprep.subr.mxu0 0.0
    %1684 = vmatpush1.msra.mxu0 0.0
    %1685 = vmatprep.subr.mxu0 0.0
    %1686 = vmatpush1.msra.mxu0 0.0
    %1687 = vmatprep.subr.mxu0 0.0
    %1688 = vmatpush1.msra.mxu0 0.0
    %1689 = vmatprep.subr.mxu0 0.0
    %1690 = vmatpush1.msra.mxu0 0.0
    %1691 = vmatprep.subr.mxu0 0.0
    %1692 = vmatpush1.msra.mxu0 0.0
    %1693 = vmatprep.subr.mxu0 0.0
    %1694 = vmatpush1.msra.mxu0 0.0
    %1695 = vmatprep.subr.mxu0 0.0
    %1696 = vmatpush1.msra.mxu0 0.0
    %1697 = vmatprep.subr.mxu0 0.0
    %1698 = vmatpush1.msra.mxu0 0.0
    %1699 = vmatprep.subr.mxu0 0.0
    %1700 = vmatpush1.msra.mxu0 0.0
    %1701 = vmatprep.subr.mxu0 0.0
    %1702 = vmatpush1.msra.mxu0 0.0
    %1703 = vmatprep.subr.mxu0 0.0
    %1704 = vmatpush1.msra.mxu0 0.0
    %1705 = vmatprep.subr.mxu0 0.0
    %1706 = vmatpush1.msra.mxu0 0.0
    %1707 = vmatprep.subr.mxu0 0.0
    %1708 = vmatpush1.msra.mxu0 0.0
    %1709 = vmatprep.subr.mxu0 0.0
    %1710 = vmatpush1.msra.mxu0 0.0
    %1711 = vmatprep.subr.mxu0 0.0
    %1712 = vmatpush1.msra.mxu0 0.0
    %1713 = vmatprep.subr.mxu0 0.0
    %1714 = vmatpush1.msra.mxu0 0.0
    %1715 = vmatprep.subr.mxu0 0.0
    %1716 = vmatpush1.msra.mxu0 0.0
    %1717 = vmatprep.subr.mxu0 0.0
    %1718 = vmatpush1.msra.mxu0 0.0
    %1719 = vmatprep.subr.mxu0 0.0
    %1720 = vmatpush1.msra.mxu0 0.0
    %1721 = vmatprep.subr.mxu0 0.0
    %1722 = vmatpush1.msra.mxu0 0.0
    %1723 = vmatprep.subr.mxu0 0.0
    %1724 = vmatpush1.msra.mxu0 0.0
    %1725 = vmatprep.subr.mxu0 0.0
    %1726 = vmatpush1.msra.mxu0 0.0
    %1727 = vmatprep.subr.mxu0 0.0
    %1728 = vmatpush1.msra.mxu0 0.0
    %1729 = vmatprep.subr.mxu0 0.0
    %1730 = vmatpush1.msra.mxu0 0.0
    %1731 = vmatprep.subr.mxu0 0.0
    %1732 = vmatpush1.msra.mxu0 0.0
    %1733 = vmatprep.subr.mxu0 0.0
    %1734 = vmatpush1.msra.mxu0 0.0
    %1735 = vmatprep.subr.mxu0 0.0
    %1736 = vmatpush1.msra.mxu0 0.0
    %1737 = vmatprep.subr.mxu0 0.0
    %1738 = vmatpush1.msra.mxu0 0.0
    %1739 = vmatprep.subr.mxu0 0.0
    %1740 = vmatpush1.msra.mxu0 0.0
    %1741 = vmatprep.mubr.f32.mxu0 0.0
    %1742 = vmatmul.mubr.f32.gmra.mrb[0].mxu0 %v1672
    %v1743 = vpop.f32.mrb[0].mxu0
    %v1744 = vadd.f32 0.0, %v1743
    %v1745 = vpop.f32.mrb[0].mxu0
    %1746 = vmatprep.mubr.f32.mxu0 0.0
    %1747 = vmatmul.mubr.f32.gmra.mrb[0].mxu0 %v1675
    %v1748 = vpop.f32.mrb[0].mxu0
    %v1749 = vadd.f32 0.0, %v1748
    %v1750 = vpop.f32.mrb[0].mxu0
    %1751 = vdwg.mxu0
    %s1752 = scalar_lea.vmem %s7, 8
    %v1753 = vld [vmem:[%s1752] sm:$0xf]
    %v1755 = vsel %vm414, %v1663, 0
    %v1758 = vsel %vm414, %v1668, 0
    %v1761 = vsel %vm414, %v1744, 0
    %v1764 = vsel %vm414, %v1749, 0
    %v1767 = vsel %vm809, %v1753, 0
    %1769 = vmatprep.subr.mxu0 0.0
    %1770 = vmatpush1.msra.mxu0 %v1767
    %1771 = vmatprep.subr.mxu0 0.0
    %1772 = vmatpush1.msra.mxu0 0.0
    %1773 = vmatprep.subr.mxu0 0.0
    %1774 = vmatpush1.msra.mxu0 0.0
    %1775 = vmatprep.subr.mxu0 0.0
    %1776 = vmatpush1.msra.mxu0 0.0
    %1777 = vmatprep.subr.mxu0 0.0
    %1778 = vmatpush1.msra.mxu0 0.0
    %1779 = vmatprep.subr.mxu0 0.0
    %1780 = vmatpush1.msra.mxu0 0.0
    %1781 = vmatprep.subr.mxu0 0.0
    %1782 = vmatpush1.msra.mxu0 0.0
    %1783 = vmatprep.subr.mxu0 0.0
    %1784 = vmatpush1.msra.mxu0 0.0
    %1785 = vmatprep.subr.mxu0 0.0
    %1786 = vmatpush1.msra.mxu0 0.0
    %1787 = vmatprep.subr.mxu0 0.0
    %1788 = vmatpush1.msra.mxu0 0.0
    %1789 = vmatprep.subr.mxu0 0.0
    %1790 = vmatpush1.msra.mxu0 0.0
    %1791 = vmatprep.subr.mxu0 0.0
    %1792 = vmatpush1.msra.mxu0 0.0
    %1793 = vmatprep.subr.mxu0 0.0
    %1794 = vmatpush1.msra.mxu0 0.0
    %1795 = vmatprep.subr.mxu0 0.0
    %1796 = vmatpush1.msra.mxu0 0.0
    %1797 = vmatprep.subr.mxu0 0.0
    %1798 = vmatpush1.msra.mxu0 0.0
    %1799 = vmatprep.subr.mxu0 0.0
    %1800 = vmatpush1.msra.mxu0 0.0
    %1801 = vmatprep.subr.mxu0 0.0
    %1802 = vmatpush1.msra.mxu0 0.0
    %1803 = vmatprep.subr.mxu0 0.0
    %1804 = vmatpush1.msra.mxu0 0.0
    %1805 = vmatprep.subr.mxu0 0.0
    %1806 = vmatpush1.msra.mxu0 0.0
    %1807 = vmatprep.subr.mxu0 0.0
    %1808 = vmatpush1.msra.mxu0 0.0
    %1809 = vmatprep.subr.mxu0 0.0
    %1810 = vmatpush1.msra.mxu0 0.0
    %1811 = vmatprep.subr.mxu0 0.0
    %1812 = vmatpush1.msra.mxu0 0.0
    %1813 = vmatprep.subr.mxu0 0.0
    %1814 = vmatpush1.msra.mxu0 0.0
    %1815 = vmatprep.subr.mxu0 0.0
    %1816 = vmatpush1.msra.mxu0 0.0
    %1817 = vmatprep.subr.mxu0 0.0
    %1818 = vmatpush1.msra.mxu0 0.0
    %1819 = vmatprep.subr.mxu0 0.0
    %1820 = vmatpush1.msra.mxu0 0.0
    %1821 = vmatprep.subr.mxu0 0.0
    %1822 = vmatpush1.msra.mxu0 0.0
    %1823 = vmatprep.subr.mxu0 0.0
    %1824 = vmatpush1.msra.mxu0 0.0
    %1825 = vmatprep.subr.mxu0 0.0
    %1826 = vmatpush1.msra.mxu0 0.0
    %1827 = vmatprep.subr.mxu0 0.0
    %1828 = vmatpush1.msra.mxu0 0.0
    %1829 = vmatprep.subr.mxu0 0.0
    %1830 = vmatpush1.msra.mxu0 0.0
    %1831 = vmatprep.subr.mxu0 0.0
    %1832 = vmatpush1.msra.mxu0 0.0
    %1833 = vmatprep.mubr.f32.mxu0 0.0
    %1834 = vmatmul.mubr.f32.gmra.mrb[0].mxu0 %v1755
    %v1835 = vpop.f32.mrb[0].mxu0
    %v1836 = vadd.f32 0.0, %v1835
    %v1837 = vpop.f32.mrb[0].mxu0
    %1838 = vmatprep.mubr.f32.mxu0 0.0
    %1839 = vmatmul.mubr.f32.gmra.mrb[0].mxu0 %v1758
    %v1840 = vpop.f32.mrb[0].mxu0
    %v1841 = vadd.f32 0.0, %v1840
    %v1842 = vpop.f32.mrb[0].mxu0
    %1843 = vmatprep.mubr.f32.mxu0 0.0
    %1844 = vmatmul.mubr.f32.gmra.mrb[0].mxu0 %v1761
    %v1845 = vpop.f32.mrb[0].mxu0
    %v1846 = vadd.f32 0.0, %v1845
    %v1847 = vpop.f32.mrb[0].mxu0
    %1848 = vmatprep.mubr.f32.mxu0 0.0
    %1849 = vmatmul.mubr.f32.gmra.mrb[0].mxu0 %v1764
    %v1850 = vpop.f32.mrb[0].mxu0
    %v1851 = vadd.f32 0.0, %v1850
    %v1852 = vpop.f32.mrb[0].mxu0
    %1853 = vdwg.mxu0
    %v1854 = vadd.f32 %v1376, %v1836
    %v1855 = vadd.f32 %v1377, %v1841
    %v1856 = vadd.f32 %v1378, %v1846
    %v1857 = vadd.f32 %v1379, %v1851
    %1858 = vrot.lane.b32.xlu0 %v193, 116
    %v1859 = vpop.permute.xlu0 %1858
    %1860 = vrot.lane.b32.xlu0 %v198, 116
    %v1861 = vpop.permute.xlu0 %1860
    %v1862 = vsel %vm414, %v1859, 0
    %v1864 = vsel %vm414, %v1861, 0
    %1866 = vmatprep.subr.mxu0 0.0
    %1867 = vmatpush1.xpose.msra.mxu0 %v422
    %1868 = vmatprep.subr.mxu0 0.0
    %1869 = vmatpush1.xpose.msra.mxu0 %v425
    %1870 = vmatprep.subr.mxu0 0.0
    %1871 = vmatpush1.xpose.msra.mxu0 0.0
    %1872 = vmatprep.subr.mxu0 0.0
    %1873 = vmatpush1.xpose.msra.mxu0 0.0
    %1874 = vmatprep.subr.mxu0 0.0
    %1875 = vmatpush1.xpose.msra.mxu0 0.0
    %1876 = vmatprep.subr.mxu0 0.0
    %1877 = vmatpush1.xpose.msra.mxu0 0.0
    %1878 = vmatprep.subr.mxu0 0.0
    %1879 = vmatpush1.xpose.msra.mxu0 0.0
    %1880 = vmatprep.subr.mxu0 0.0
    %1881 = vmatpush1.xpose.msra.mxu0 0.0
    %1882 = vmatprep.subr.mxu0 0.0
    %1883 = vmatpush1.xpose.msra.mxu0 0.0
    %1884 = vmatprep.subr.mxu0 0.0
    %1885 = vmatpush1.xpose.msra.mxu0 0.0
    %1886 = vmatprep.subr.mxu0 0.0
    %1887 = vmatpush1.xpose.msra.mxu0 0.0
    %1888 = vmatprep.subr.mxu0 0.0
    %1889 = vmatpush1.xpose.msra.mxu0 0.0
    %1890 = vmatprep.subr.mxu0 0.0
    %1891 = vmatpush1.xpose.msra.mxu0 0.0
    %1892 = vmatprep.subr.mxu0 0.0
    %1893 = vmatpush1.xpose.msra.mxu0 0.0
    %1894 = vmatprep.subr.mxu0 0.0
    %1895 = vmatpush1.xpose.msra.mxu0 0.0
    %1896 = vmatprep.subr.mxu0 0.0
    %1897 = vmatpush1.xpose.msra.mxu0 0.0
    %1898 = vmatprep.subr.mxu0 0.0
    %1899 = vmatpush1.xpose.msra.mxu0 0.0
    %1900 = vmatprep.subr.mxu0 0.0
    %1901 = vmatpush1.xpose.msra.mxu0 0.0
    %1902 = vmatprep.subr.mxu0 0.0
    %1903 = vmatpush1.xpose.msra.mxu0 0.0
    %1904 = vmatprep.subr.mxu0 0.0
    %1905 = vmatpush1.xpose.msra.mxu0 0.0
    %1906 = vmatprep.subr.mxu0 0.0
    %1907 = vmatpush1.xpose.msra.mxu0 0.0
    %1908 = vmatprep.subr.mxu0 0.0
    %1909 = vmatpush1.xpose.msra.mxu0 0.0
    %1910 = vmatprep.subr.mxu0 0.0
    %1911 = vmatpush1.xpose.msra.mxu0 0.0
    %1912 = vmatprep.subr.mxu0 0.0
    %1913 = vmatpush1.xpose.msra.mxu0 0.0
    %1914 = vmatprep.subr.mxu0 0.0
    %1915 = vmatpush1.xpose.msra.mxu0 0.0
    %1916 = vmatprep.subr.mxu0 0.0
    %1917 = vmatpush1.xpose.msra.mxu0 0.0
    %1918 = vmatprep.subr.mxu0 0.0
    %1919 = vmatpush1.xpose.msra.mxu0 0.0
    %1920 = vmatprep.subr.mxu0 0.0
    %1921 = vmatpush1.xpose.msra.mxu0 0.0
    %1922 = vmatprep.subr.mxu0 0.0
    %1923 = vmatpush1.xpose.msra.mxu0 0.0
    %1924 = vmatprep.subr.mxu0 0.0
    %1925 = vmatpush1.xpose.msra.mxu0 0.0
    %1926 = vmatprep.subr.mxu0 0.0
    %1927 = vmatpush1.xpose.msra.mxu0 0.0
    %1928 = vmatprep.subr.mxu0 0.0
    %1929 = vmatpush1.xpose.msra.mxu0 0.0
    %1930 = vmatprep.mubr.f32.mxu0 0.0
    %1931 = vmatmul.mubr.f32.gmra.mrb[0].mxu0 %v1862
    %v1932 = vpop.f32.mrb[0].mxu0
    %v1933 = vadd.f32 0.0, %v1932
    %v1934 = vpop.f32.mrb[0].mxu0
    %1935 = vmatprep.mubr.f32.mxu0 0.0
    %1936 = vmatmul.mubr.f32.gmra.mrb[0].mxu0 %v1864
    %v1937 = vpop.f32.mrb[0].mxu0
    %v1938 = vadd.f32 0.0, %v1937
    %v1939 = vpop.f32.mrb[0].mxu0
    %1940 = vdwg.mxu0
    %1941 = vrot.lane.b32.xlu0 %v203, 116
    %v1942 = vpop.permute.xlu0 %1941
    %1943 = vrot.lane.b32.xlu0 %v208, 116
    %v1944 = vpop.permute.xlu0 %1943
    %v1945 = vsel %vm414, %v1942, 0
    %v1947 = vsel %vm414, %v1944, 0
    %1949 = vmatprep.subr.mxu0 0.0
    %1950 = vmatpush1.xpose.msra.mxu0 %v509
    %1951 = vmatprep.subr.mxu0 0.0
    %1952 = vmatpush1.xpose.msra.mxu0 %v512
    %1953 = vmatprep.subr.mxu0 0.0
    %1954 = vmatpush1.xpose.msra.mxu0 0.0
    %1955 = vmatprep.subr.mxu0 0.0
    %1956 = vmatpush1.xpose.msra.mxu0 0.0
    %1957 = vmatprep.subr.mxu0 0.0
    %1958 = vmatpush1.xpose.msra.mxu0 0.0
    %1959 = vmatprep.subr.mxu0 0.0
    %1960 = vmatpush1.xpose.msra.mxu0 0.0
    %1961 = vmatprep.subr.mxu0 0.0
    %1962 = vmatpush1.xpose.msra.mxu0 0.0
    %1963 = vmatprep.subr.mxu0 0.0
    %1964 = vmatpush1.xpose.msra.mxu0 0.0
    %1965 = vmatprep.subr.mxu0 0.0
    %1966 = vmatpush1.xpose.msra.mxu0 0.0
    %1967 = vmatprep.subr.mxu0 0.0
    %1968 = vmatpush1.xpose.msra.mxu0 0.0
    %1969 = vmatprep.subr.mxu0 0.0
    %1970 = vmatpush1.xpose.msra.mxu0 0.0
    %1971 = vmatprep.subr.mxu0 0.0
    %1972 = vmatpush1.xpose.msra.mxu0 0.0
    %1973 = vmatprep.subr.mxu0 0.0
    %1974 = vmatpush1.xpose.msra.mxu0 0.0
    %1975 = vmatprep.subr.mxu0 0.0
    %1976 = vmatpush1.xpose.msra.mxu0 0.0
    %1977 = vmatprep.subr.mxu0 0.0
    %1978 = vmatpush1.xpose.msra.mxu0 0.0
    %1979 = vmatprep.subr.mxu0 0.0
    %1980 = vmatpush1.xpose.msra.mxu0 0.0
    %1981 = vmatprep.subr.mxu0 0.0
    %1982 = vmatpush1.xpose.msra.mxu0 0.0
    %1983 = vmatprep.subr.mxu0 0.0
    %1984 = vmatpush1.xpose.msra.mxu0 0.0
    %1985 = vmatprep.subr.mxu0 0.0
    %1986 = vmatpush1.xpose.msra.mxu0 0.0
    %1987 = vmatprep.subr.mxu0 0.0
    %1988 = vmatpush1.xpose.msra.mxu0 0.0
    %1989 = vmatprep.subr.mxu0 0.0
    %1990 = vmatpush1.xpose.msra.mxu0 0.0
    %1991 = vmatprep.subr.mxu0 0.0
    %1992 = vmatpush1.xpose.msra.mxu0 0.0
    %1993 = vmatprep.subr.mxu0 0.0
    %1994 = vmatpush1.xpose.msra.mxu0 0.0
    %1995 = vmatprep.subr.mxu0 0.0
    %1996 = vmatpush1.xpose.msra.mxu0 0.0
    %1997 = vmatprep.subr.mxu0 0.0
    %1998 = vmatpush1.xpose.msra.mxu0 0.0
    %1999 = vmatprep.subr.mxu0 0.0
    %2000 = vmatpush1.xpose.msra.mxu0 0.0
    %2001 = vmatprep.subr.mxu0 0.0
    %2002 = vmatpush1.xpose.msra.mxu0 0.0
    %2003 = vmatprep.subr.mxu0 0.0
    %2004 = vmatpush1.xpose.msra.mxu0 0.0
    %2005 = vmatprep.subr.mxu0 0.0
    %2006 = vmatpush1.xpose.msra.mxu0 0.0
    %2007 = vmatprep.subr.mxu0 0.0
    %2008 = vmatpush1.xpose.msra.mxu0 0.0
    %2009 = vmatprep.subr.mxu0 0.0
    %2010 = vmatpush1.xpose.msra.mxu0 0.0
    %2011 = vmatprep.subr.mxu0 0.0
    %2012 = vmatpush1.xpose.msra.mxu0 0.0
    %2013 = vmatprep.mubr.f32.mxu0 0.0
    %2014 = vmatmul.mubr.f32.gmra.mrb[0].mxu0 %v1945
    %v2015 = vpop.f32.mrb[0].mxu0
    %v2016 = vadd.f32 0.0, %v2015
    %v2017 = vpop.f32.mrb[0].mxu0
    %2018 = vmatprep.mubr.f32.mxu0 0.0
    %2019 = vmatmul.mubr.f32.gmra.mrb[0].mxu0 %v1947
    %v2020 = vpop.f32.mrb[0].mxu0
    %v2021 = vadd.f32 0.0, %v2020
    %v2022 = vpop.f32.mrb[0].mxu0
    %2023 = vdwg.mxu0
    %v2024 = vsel %vm589, %v1933, -inf
    %2025 = vmax.xlane.f32.xlu0 %v2024
    %v2026 = vpop.xlane.xlu0 %2025
    %v2027 = vsel %vm589, %v1938, -inf
    %2028 = vmax.xlane.f32.xlu0 %v2027
    %v2029 = vpop.xlane.xlu0 %2028
    %v2030 = vsel %vm589, %v2016, -inf
    %2031 = vmax.xlane.f32.xlu0 %v2030
    %v2032 = vpop.xlane.xlu0 %2031
    %v2033 = vsel %vm589, %v2021, -inf
    %2034 = vmax.xlane.f32.xlu0 %v2033
    %v2035 = vpop.xlane.xlu0 %2034
    %v2036 = vsub.f32 %v1933, %v2026
    %v2037 = vsub.f32 %v1938, %v2029
    %v2038 = vsub.f32 %v2016, %v2032
    %v2039 = vsub.f32 %v2021, %v2035
    %v2040 = vmul.f32 %v2036, 1.442695
    %v2041 = vpow.pop %v2040
    %v2042 = vmul.f32 %v2037, 1.442695
    %v2043 = vpow.pop %v2042
    %v2044 = vmul.f32 %v2038, 1.442695
    %v2045 = vpow.pop %v2044
    %v2046 = vmul.f32 %v2039, 1.442695
    %v2047 = vpow.pop %v2046
    %v2048 = vsel %vm589, %v2041, 0.0
    %2049 = vadd.xlane.f32.xlu0 %v2048
    %v2050 = vpop.xlane.xlu0 %2049
    %v2051 = vsel %vm589, %v2043, 0.0
    %2052 = vadd.xlane.f32.xlu0 %v2051
    %v2053 = vpop.xlane.xlu0 %2052
    %v2054 = vsel %vm589, %v2045, 0.0
    %2055 = vadd.xlane.f32.xlu0 %v2054
    %v2056 = vpop.xlane.xlu0 %2055
    %v2057 = vsel %vm589, %v2047, 0.0
    %2058 = vadd.xlane.f32.xlu0 %v2057
    %v2059 = vpop.xlane.xlu0 %2058
    %v2060 = vrcp.pop %v2050
    %v2061 = vrcp.pop %v2053
    %v2062 = vrcp.pop %v2056
    %v2063 = vrcp.pop %v2059
    %v2064 = vmul.f32 %v2041, %v2060
    %v2065 = vmul.f32 %v2043, %v2061
    %v2066 = vmul.f32 %v2045, %v2062
    %v2067 = vmul.f32 %v2047, %v2063
    %v2069 = vsel %vm589, %v2064, 0
    %v2072 = vsel %vm589, %v2065, 0
    %2074 = vmatprep.subr.mxu0 0.0
    %2075 = vmatpush1.msra.mxu0 %v385
    %2076 = vmatprep.subr.mxu0 0.0
    %2077 = vmatpush1.msra.mxu0 %v390
    %2078 = vmatprep.subr.mxu0 0.0
    %2079 = vmatpush1.msra.mxu0 0.0
    %2080 = vmatprep.subr.mxu0 0.0
    %2081 = vmatpush1.msra.mxu0 0.0
    %2082 = vmatprep.subr.mxu0 0.0
    %2083 = vmatpush1.msra.mxu0 0.0
    %2084 = vmatprep.subr.mxu0 0.0
    %2085 = vmatpush1.msra.mxu0 0.0
    %2086 = vmatprep.subr.mxu0 0.0
    %2087 = vmatpush1.msra.mxu0 0.0
    %2088 = vmatprep.subr.mxu0 0.0
    %2089 = vmatpush1.msra.mxu0 0.0
    %2090 = vmatprep.subr.mxu0 0.0
    %2091 = vmatpush1.msra.mxu0 0.0
    %2092 = vmatprep.subr.mxu0 0.0
    %2093 = vmatpush1.msra.mxu0 0.0
    %2094 = vmatprep.subr.mxu0 0.0
    %2095 = vmatpush1.msra.mxu0 0.0
    %2096 = vmatprep.subr.mxu0 0.0
    %2097 = vmatpush1.msra.mxu0 0.0
    %2098 = vmatprep.subr.mxu0 0.0
    %2099 = vmatpush1.msra.mxu0 0.0
    %2100 = vmatprep.subr.mxu0 0.0
    %2101 = vmatpush1.msra.mxu0 0.0
    %2102 = vmatprep.subr.mxu0 0.0
    %2103 = vmatpush1.msra.mxu0 0.0
    %2104 = vmatprep.subr.mxu0 0.0
    %2105 = vmatpush1.msra.mxu0 0.0
    %2106 = vmatprep.subr.mxu0 0.0
    %2107 = vmatpush1.msra.mxu0 0.0
    %2108 = vmatprep.subr.mxu0 0.0
    %2109 = vmatpush1.msra.mxu0 0.0
    %2110 = vmatprep.subr.mxu0 0.0
    %2111 = vmatpush1.msra.mxu0 0.0
    %2112 = vmatprep.subr.mxu0 0.0
    %2113 = vmatpush1.msra.mxu0 0.0
    %2114 = vmatprep.subr.mxu0 0.0
    %2115 = vmatpush1.msra.mxu0 0.0
    %2116 = vmatprep.subr.mxu0 0.0
    %2117 = vmatpush1.msra.mxu0 0.0
    %2118 = vmatprep.subr.mxu0 0.0
    %2119 = vmatpush1.msra.mxu0 0.0
    %2120 = vmatprep.subr.mxu0 0.0
    %2121 = vmatpush1.msra.mxu0 0.0
    %2122 = vmatprep.subr.mxu0 0.0
    %2123 = vmatpush1.msra.mxu0 0.0
    %2124 = vmatprep.subr.mxu0 0.0
    %2125 = vmatpush1.msra.mxu0 0.0
    %2126 = vmatprep.subr.mxu0 0.0
    %2127 = vmatpush1.msra.mxu0 0.0
    %2128 = vmatprep.subr.mxu0 0.0
    %2129 = vmatpush1.msra.mxu0 0.0
    %2130 = vmatprep.subr.mxu0 0.0
    %2131 = vmatpush1.msra.mxu0 0.0
    %2132 = vmatprep.subr.mxu0 0.0
    %2133 = vmatpush1.msra.mxu0 0.0
    %2134 = vmatprep.subr.mxu0 0.0
    %2135 = vmatpush1.msra.mxu0 0.0
    %2136 = vmatprep.subr.mxu0 0.0
    %2137 = vmatpush1.msra.mxu0 0.0
    %2138 = vmatprep.mubr.f32.mxu0 0.0
    %2139 = vmatmul.mubr.f32.gmra.mrb[0].mxu0 %v2069
    %v2140 = vpop.f32.mrb[0].mxu0
    %v2141 = vadd.f32 0.0, %v2140
    %v2142 = vpop.f32.mrb[0].mxu0
    %2143 = vmatprep.mubr.f32.mxu0 0.0
    %2144 = vmatmul.mubr.f32.gmra.mrb[0].mxu0 %v2072
    %v2145 = vpop.f32.mrb[0].mxu0
    %v2146 = vadd.f32 0.0, %v2145
    %v2147 = vpop.f32.mrb[0].mxu0
    %2148 = vdwg.mxu0
    %v2150 = vsel %vm589, %v2066, 0
    %v2153 = vsel %vm589, %v2067, 0
    %2155 = vmatprep.subr.mxu0 0.0
    %2156 = vmatpush1.msra.mxu0 %v395
    %2157 = vmatprep.subr.mxu0 0.0
    %2158 = vmatpush1.msra.mxu0 %v400
    %2159 = vmatprep.subr.mxu0 0.0
    %2160 = vmatpush1.msra.mxu0 0.0
    %2161 = vmatprep.subr.mxu0 0.0
    %2162 = vmatpush1.msra.mxu0 0.0
    %2163 = vmatprep.subr.mxu0 0.0
    %2164 = vmatpush1.msra.mxu0 0.0
    %2165 = vmatprep.subr.mxu0 0.0
    %2166 = vmatpush1.msra.mxu0 0.0
    %2167 = vmatprep.subr.mxu0 0.0
    %2168 = vmatpush1.msra.mxu0 0.0
    %2169 = vmatprep.subr.mxu0 0.0
    %2170 = vmatpush1.msra.mxu0 0.0
    %2171 = vmatprep.subr.mxu0 0.0
    %2172 = vmatpush1.msra.mxu0 0.0
    %2173 = vmatprep.subr.mxu0 0.0
    %2174 = vmatpush1.msra.mxu0 0.0
    %2175 = vmatprep.subr.mxu0 0.0
    %2176 = vmatpush1.msra.mxu0 0.0
    %2177 = vmatprep.subr.mxu0 0.0
    %2178 = vmatpush1.msra.mxu0 0.0
    %2179 = vmatprep.subr.mxu0 0.0
    %2180 = vmatpush1.msra.mxu0 0.0
    %2181 = vmatprep.subr.mxu0 0.0
    %2182 = vmatpush1.msra.mxu0 0.0
    %2183 = vmatprep.subr.mxu0 0.0
    %2184 = vmatpush1.msra.mxu0 0.0
    %2185 = vmatprep.subr.mxu0 0.0
    %2186 = vmatpush1.msra.mxu0 0.0
    %2187 = vmatprep.subr.mxu0 0.0
    %2188 = vmatpush1.msra.mxu0 0.0
    %2189 = vmatprep.subr.mxu0 0.0
    %2190 = vmatpush1.msra.mxu0 0.0
    %2191 = vmatprep.subr.mxu0 0.0
    %2192 = vmatpush1.msra.mxu0 0.0
    %2193 = vmatprep.subr.mxu0 0.0
    %2194 = vmatpush1.msra.mxu0 0.0
    %2195 = vmatprep.subr.mxu0 0.0
    %2196 = vmatpush1.msra.mxu0 0.0
    %2197 = vmatprep.subr.mxu0 0.0
    %2198 = vmatpush1.msra.mxu0 0.0
    %2199 = vmatprep.subr.mxu0 0.0
    %2200 = vmatpush1.msra.mxu0 0.0
    %2201 = vmatprep.subr.mxu0 0.0
    %2202 = vmatpush1.msra.mxu0 0.0
    %2203 = vmatprep.subr.mxu0 0.0
    %2204 = vmatpush1.msra.mxu0 0.0
    %2205 = vmatprep.subr.mxu0 0.0
    %2206 = vmatpush1.msra.mxu0 0.0
    %2207 = vmatprep.subr.mxu0 0.0
    %2208 = vmatpush1.msra.mxu0 0.0
    %2209 = vmatprep.subr.mxu0 0.0
    %2210 = vmatpush1.msra.mxu0 0.0
    %2211 = vmatprep.subr.mxu0 0.0
    %2212 = vmatpush1.msra.mxu0 0.0
    %2213 = vmatprep.subr.mxu0 0.0
    %2214 = vmatpush1.msra.mxu0 0.0
    %2215 = vmatprep.subr.mxu0 0.0
    %2216 = vmatpush1.msra.mxu0 0.0
    %2217 = vmatprep.subr.mxu0 0.0
    %2218 = vmatpush1.msra.mxu0 0.0
    %2219 = vmatprep.mubr.f32.mxu0 0.0
    %2220 = vmatmul.mubr.f32.gmra.mrb[0].mxu0 %v2150
    %v2221 = vpop.f32.mrb[0].mxu0
    %v2222 = vadd.f32 0.0, %v2221
    %v2223 = vpop.f32.mrb[0].mxu0
    %2224 = vmatprep.mubr.f32.mxu0 0.0
    %2225 = vmatmul.mubr.f32.gmra.mrb[0].mxu0 %v2153
    %v2226 = vpop.f32.mrb[0].mxu0
    %v2227 = vadd.f32 0.0, %v2226
    %v2228 = vpop.f32.mrb[0].mxu0
    %2229 = vdwg.mxu0
    %s2230 = scalar_lea.vmem %s7, 12
    %v2231 = vld [vmem:[%s2230] sm:$0xf]
    %v2233 = vsel %vm414, %v2141, 0
    %v2236 = vsel %vm414, %v2146, 0
    %v2239 = vsel %vm414, %v2222, 0
    %v2242 = vsel %vm414, %v2227, 0
    %v2245 = vsel %vm809, %v2231, 0
    %2247 = vmatprep.subr.mxu0 0.0
    %2248 = vmatpush1.msra.mxu0 %v2245
    %2249 = vmatprep.subr.mxu0 0.0
    %2250 = vmatpush1.msra.mxu0 0.0
    %2251 = vmatprep.subr.mxu0 0.0
    %2252 = vmatpush1.msra.mxu0 0.0
    %2253 = vmatprep.subr.mxu0 0.0
    %2254 = vmatpush1.msra.mxu0 0.0
    %2255 = vmatprep.subr.mxu0 0.0
    %2256 = vmatpush1.msra.mxu0 0.0
    %2257 = vmatprep.subr.mxu0 0.0
    %2258 = vmatpush1.msra.mxu0 0.0
    %2259 = vmatprep.subr.mxu0 0.0
    %2260 = vmatpush1.msra.mxu0 0.0
    %2261 = vmatprep.subr.mxu0 0.0
    %2262 = vmatpush1.msra.mxu0 0.0
    %2263 = vmatprep.subr.mxu0 0.0
    %2264 = vmatpush1.msra.mxu0 0.0
    %2265 = vmatprep.subr.mxu0 0.0
    %2266 = vmatpush1.msra.mxu0 0.0
    %2267 = vmatprep.subr.mxu0 0.0
    %2268 = vmatpush1.msra.mxu0 0.0
    %2269 = vmatprep.subr.mxu0 0.0
    %2270 = vmatpush1.msra.mxu0 0.0
    %2271 = vmatprep.subr.mxu0 0.0
    %2272 = vmatpush1.msra.mxu0 0.0
    %2273 = vmatprep.subr.mxu0 0.0
    %2274 = vmatpush1.msra.mxu0 0.0
    %2275 = vmatprep.subr.mxu0 0.0
    %2276 = vmatpush1.msra.mxu0 0.0
    %2277 = vmatprep.subr.mxu0 0.0
    %2278 = vmatpush1.msra.mxu0 0.0
    %2279 = vmatprep.subr.mxu0 0.0
    %2280 = vmatpush1.msra.mxu0 0.0
    %2281 = vmatprep.subr.mxu0 0.0
    %2282 = vmatpush1.msra.mxu0 0.0
    %2283 = vmatprep.subr.mxu0 0.0
    %2284 = vmatpush1.msra.mxu0 0.0
    %2285 = vmatprep.subr.mxu0 0.0
    %2286 = vmatpush1.msra.mxu0 0.0
    %2287 = vmatprep.subr.mxu0 0.0
    %2288 = vmatpush1.msra.mxu0 0.0
    %2289 = vmatprep.subr.mxu0 0.0
    %2290 = vmatpush1.msra.mxu0 0.0
    %2291 = vmatprep.subr.mxu0 0.0
    %2292 = vmatpush1.msra.mxu0 0.0
    %2293 = vmatprep.subr.mxu0 0.0
    %2294 = vmatpush1.msra.mxu0 0.0
    %2295 = vmatprep.subr.mxu0 0.0
    %2296 = vmatpush1.msra.mxu0 0.0
    %2297 = vmatprep.subr.mxu0 0.0
    %2298 = vmatpush1.msra.mxu0 0.0
    %2299 = vmatprep.subr.mxu0 0.0
    %2300 = vmatpush1.msra.mxu0 0.0
    %2301 = vmatprep.subr.mxu0 0.0
    %2302 = vmatpush1.msra.mxu0 0.0
    %2303 = vmatprep.subr.mxu0 0.0
    %2304 = vmatpush1.msra.mxu0 0.0
    %2305 = vmatprep.subr.mxu0 0.0
    %2306 = vmatpush1.msra.mxu0 0.0
    %2307 = vmatprep.subr.mxu0 0.0
    %2308 = vmatpush1.msra.mxu0 0.0
    %2309 = vmatprep.subr.mxu0 0.0
    %2310 = vmatpush1.msra.mxu0 0.0
    %2311 = vmatprep.mubr.f32.mxu0 0.0
    %2312 = vmatmul.mubr.f32.gmra.mrb[0].mxu0 %v2233
    %v2313 = vpop.f32.mrb[0].mxu0
    %v2314 = vadd.f32 0.0, %v2313
    %v2315 = vpop.f32.mrb[0].mxu0
    %2316 = vmatprep.mubr.f32.mxu0 0.0
    %2317 = vmatmul.mubr.f32.gmra.mrb[0].mxu0 %v2236
    %v2318 = vpop.f32.mrb[0].mxu0
    %v2319 = vadd.f32 0.0, %v2318
    %v2320 = vpop.f32.mrb[0].mxu0
    %2321 = vmatprep.mubr.f32.mxu0 0.0
    %2322 = vmatmul.mubr.f32.gmra.mrb[0].mxu0 %v2239
    %v2323 = vpop.f32.mrb[0].mxu0
    %v2324 = vadd.f32 0.0, %v2323
    %v2325 = vpop.f32.mrb[0].mxu0
    %2326 = vmatprep.mubr.f32.mxu0 0.0
    %2327 = vmatmul.mubr.f32.gmra.mrb[0].mxu0 %v2242
    %v2328 = vpop.f32.mrb[0].mxu0
    %v2329 = vadd.f32 0.0, %v2328
    %v2330 = vpop.f32.mrb[0].mxu0
    %2331 = vdwg.mxu0
    %v2332 = vadd.f32 %v1854, %v2314
    %v2333 = vadd.f32 %v1855, %v2319
    %v2334 = vadd.f32 %v1856, %v2324
    %v2335 = vadd.f32 %v1857, %v2329
    %2336 = vrot.lane.b32.xlu0 %v193, 112
    %v2337 = vpop.permute.xlu0 %2336
    %2338 = vrot.lane.b32.xlu0 %v198, 112
    %v2339 = vpop.permute.xlu0 %2338
    %v2340 = vsel %vm414, %v2337, 0
    %v2342 = vsel %vm414, %v2339, 0
    %2344 = vmatprep.subr.mxu0 0.0
    %2345 = vmatpush1.xpose.msra.mxu0 %v422
    %2346 = vmatprep.subr.mxu0 0.0
    %2347 = vmatpush1.xpose.msra.mxu0 %v425
    %2348 = vmatprep.subr.mxu0 0.0
    %2349 = vmatpush1.xpose.msra.mxu0 0.0
    %2350 = vmatprep.subr.mxu0 0.0
    %2351 = vmatpush1.xpose.msra.mxu0 0.0
    %2352 = vmatprep.subr.mxu0 0.0
    %2353 = vmatpush1.xpose.msra.mxu0 0.0
    %2354 = vmatprep.subr.mxu0 0.0
    %2355 = vmatpush1.xpose.msra.mxu0 0.0
    %2356 = vmatprep.subr.mxu0 0.0
    %2357 = vmatpush1.xpose.msra.mxu0 0.0
    %2358 = vmatprep.subr.mxu0 0.0
    %2359 = vmatpush1.xpose.msra.mxu0 0.0
    %2360 = vmatprep.subr.mxu0 0.0
    %2361 = vmatpush1.xpose.msra.mxu0 0.0
    %2362 = vmatprep.subr.mxu0 0.0
    %2363 = vmatpush1.xpose.msra.mxu0 0.0
    %2364 = vmatprep.subr.mxu0 0.0
    %2365 = vmatpush1.xpose.msra.mxu0 0.0
    %2366 = vmatprep.subr.mxu0 0.0
    %2367 = vmatpush1.xpose.msra.mxu0 0.0
    %2368 = vmatprep.subr.mxu0 0.0
    %2369 = vmatpush1.xpose.msra.mxu0 0.0
    %2370 = vmatprep.subr.mxu0 0.0
    %2371 = vmatpush1.xpose.msra.mxu0 0.0
    %2372 = vmatprep.subr.mxu0 0.0
    %2373 = vmatpush1.xpose.msra.mxu0 0.0
    %2374 = vmatprep.subr.mxu0 0.0
    %2375 = vmatpush1.xpose.msra.mxu0 0.0
    %2376 = vmatprep.subr.mxu0 0.0
    %2377 = vmatpush1.xpose.msra.mxu0 0.0
    %2378 = vmatprep.subr.mxu0 0.0
    %2379 = vmatpush1.xpose.msra.mxu0 0.0
    %2380 = vmatprep.subr.mxu0 0.0
    %2381 = vmatpush1.xpose.msra.mxu0 0.0
    %2382 = vmatprep.subr.mxu0 0.0
    %2383 = vmatpush1.xpose.msra.mxu0 0.0
    %2384 = vmatprep.subr.mxu0 0.0
    %2385 = vmatpush1.xpose.msra.mxu0 0.0
    %2386 = vmatprep.subr.mxu0 0.0
    %2387 = vmatpush1.xpose.msra.mxu0 0.0
    %2388 = vmatprep.subr.mxu0 0.0
    %2389 = vmatpush1.xpose.msra.mxu0 0.0
    %2390 = vmatprep.subr.mxu0 0.0
    %2391 = vmatpush1.xpose.msra.mxu0 0.0
    %2392 = vmatprep.subr.mxu0 0.0
    %2393 = vmatpush1.xpose.msra.mxu0 0.0
    %2394 = vmatprep.subr.mxu0 0.0
    %2395 = vmatpush1.xpose.msra.mxu0 0.0
    %2396 = vmatprep.subr.mxu0 0.0
    %2397 = vmatpush1.xpose.msra.mxu0 0.0
    %2398 = vmatprep.subr.mxu0 0.0
    %2399 = vmatpush1.xpose.msra.mxu0 0.0
    %2400 = vmatprep.subr.mxu0 0.0
    %2401 = vmatpush1.xpose.msra.mxu0 0.0
    %2402 = vmatprep.subr.mxu0 0.0
    %2403 = vmatpush1.xpose.msra.mxu0 0.0
    %2404 = vmatprep.subr.mxu0 0.0
    %2405 = vmatpush1.xpose.msra.mxu0 0.0
    %2406 = vmatprep.subr.mxu0 0.0
    %2407 = vmatpush1.xpose.msra.mxu0 0.0
    %2408 = vmatprep.mubr.f32.mxu0 0.0
    %2409 = vmatmul.mubr.f32.gmra.mrb[0].mxu0 %v2340
    %v2410 = vpop.f32.mrb[0].mxu0
    %v2411 = vadd.f32 0.0, %v2410
    %v2412 = vpop.f32.mrb[0].mxu0
    %2413 = vmatprep.mubr.f32.mxu0 0.0
    %2414 = vmatmul.mubr.f32.gmra.mrb[0].mxu0 %v2342
    %v2415 = vpop.f32.mrb[0].mxu0
    %v2416 = vadd.f32 0.0, %v2415
    %v2417 = vpop.f32.mrb[0].mxu0
    %2418 = vdwg.mxu0
    %2419 = vrot.lane.b32.xlu0 %v203, 112
    %v2420 = vpop.permute.xlu0 %2419
    %2421 = vrot.lane.b32.xlu0 %v208, 112
    %v2422 = vpop.permute.xlu0 %2421
    %v2423 = vsel %vm414, %v2420, 0
    %v2425 = vsel %vm414, %v2422, 0
    %2427 = vmatprep.subr.mxu0 0.0
    %2428 = vmatpush1.xpose.msra.mxu0 %v509
    %2429 = vmatprep.subr.mxu0 0.0
    %2430 = vmatpush1.xpose.msra.mxu0 %v512
    %2431 = vmatprep.subr.mxu0 0.0
    %2432 = vmatpush1.xpose.msra.mxu0 0.0
    %2433 = vmatprep.subr.mxu0 0.0
    %2434 = vmatpush1.xpose.msra.mxu0 0.0
    %2435 = vmatprep.subr.mxu0 0.0
    %2436 = vmatpush1.xpose.msra.mxu0 0.0
    %2437 = vmatprep.subr.mxu0 0.0
    %2438 = vmatpush1.xpose.msra.mxu0 0.0
    %2439 = vmatprep.subr.mxu0 0.0
    %2440 = vmatpush1.xpose.msra.mxu0 0.0
    %2441 = vmatprep.subr.mxu0 0.0
    %2442 = vmatpush1.xpose.msra.mxu0 0.0
    %2443 = vmatprep.subr.mxu0 0.0
    %2444 = vmatpush1.xpose.msra.mxu0 0.0
    %2445 = vmatprep.subr.mxu0 0.0
    %2446 = vmatpush1.xpose.msra.mxu0 0.0
    %2447 = vmatprep.subr.mxu0 0.0
    %2448 = vmatpush1.xpose.msra.mxu0 0.0
    %2449 = vmatprep.subr.mxu0 0.0
    %2450 = vmatpush1.xpose.msra.mxu0 0.0
    %2451 = vmatprep.subr.mxu0 0.0
    %2452 = vmatpush1.xpose.msra.mxu0 0.0
    %2453 = vmatprep.subr.mxu0 0.0
    %2454 = vmatpush1.xpose.msra.mxu0 0.0
    %2455 = vmatprep.subr.mxu0 0.0
    %2456 = vmatpush1.xpose.msra.mxu0 0.0
    %2457 = vmatprep.subr.mxu0 0.0
    %2458 = vmatpush1.xpose.msra.mxu0 0.0
    %2459 = vmatprep.subr.mxu0 0.0
    %2460 = vmatpush1.xpose.msra.mxu0 0.0
    %2461 = vmatprep.subr.mxu0 0.0
    %2462 = vmatpush1.xpose.msra.mxu0 0.0
    %2463 = vmatprep.subr.mxu0 0.0
    %2464 = vmatpush1.xpose.msra.mxu0 0.0
    %2465 = vmatprep.subr.mxu0 0.0
    %2466 = vmatpush1.xpose.msra.mxu0 0.0
    %2467 = vmatprep.subr.mxu0 0.0
    %2468 = vmatpush1.xpose.msra.mxu0 0.0
    %2469 = vmatprep.subr.mxu0 0.0
    %2470 = vmatpush1.xpose.msra.mxu0 0.0
    %2471 = vmatprep.subr.mxu0 0.0
    %2472 = vmatpush1.xpose.msra.mxu0 0.0
    %2473 = vmatprep.subr.mxu0 0.0
    %2474 = vmatpush1.xpose.msra.mxu0 0.0
    %2475 = vmatprep.subr.mxu0 0.0
    %2476 = vmatpush1.xpose.msra.mxu0 0.0
    %2477 = vmatprep.subr.mxu0 0.0
    %2478 = vmatpush1.xpose.msra.mxu0 0.0
    %2479 = vmatprep.subr.mxu0 0.0
    %2480 = vmatpush1.xpose.msra.mxu0 0.0
    %2481 = vmatprep.subr.mxu0 0.0
    %2482 = vmatpush1.xpose.msra.mxu0 0.0
    %2483 = vmatprep.subr.mxu0 0.0
    %2484 = vmatpush1.xpose.msra.mxu0 0.0
    %2485 = vmatprep.subr.mxu0 0.0
    %2486 = vmatpush1.xpose.msra.mxu0 0.0
    %2487 = vmatprep.subr.mxu0 0.0
    %2488 = vmatpush1.xpose.msra.mxu0 0.0
    %2489 = vmatprep.subr.mxu0 0.0
    %2490 = vmatpush1.xpose.msra.mxu0 0.0
    %2491 = vmatprep.mubr.f32.mxu0 0.0
    %2492 = vmatmul.mubr.f32.gmra.mrb[0].mxu0 %v2423
    %v2493 = vpop.f32.mrb[0].mxu0
    %v2494 = vadd.f32 0.0, %v2493
    %v2495 = vpop.f32.mrb[0].mxu0
    %2496 = vmatprep.mubr.f32.mxu0 0.0
    %2497 = vmatmul.mubr.f32.gmra.mrb[0].mxu0 %v2425
    %v2498 = vpop.f32.mrb[0].mxu0
    %v2499 = vadd.f32 0.0, %v2498
    %v2500 = vpop.f32.mrb[0].mxu0
    %2501 = vdwg.mxu0
    %v2502 = vsel %vm589, %v2411, -inf
    %2503 = vmax.xlane.f32.xlu0 %v2502
    %v2504 = vpop.xlane.xlu0 %2503
    %v2505 = vsel %vm589, %v2416, -inf
    %2506 = vmax.xlane.f32.xlu0 %v2505
    %v2507 = vpop.xlane.xlu0 %2506
    %v2508 = vsel %vm589, %v2494, -inf
    %2509 = vmax.xlane.f32.xlu0 %v2508
    %v2510 = vpop.xlane.xlu0 %2509
    %v2511 = vsel %vm589, %v2499, -inf
    %2512 = vmax.xlane.f32.xlu0 %v2511
    %v2513 = vpop.xlane.xlu0 %2512
    %v2514 = vsub.f32 %v2411, %v2504
    %v2515 = vsub.f32 %v2416, %v2507
    %v2516 = vsub.f32 %v2494, %v2510
    %v2517 = vsub.f32 %v2499, %v2513
    %v2518 = vmul.f32 %v2514, 1.442695
    %v2519 = vpow.pop %v2518
    %v2520 = vmul.f32 %v2515, 1.442695
    %v2521 = vpow.pop %v2520
    %v2522 = vmul.f32 %v2516, 1.442695
    %v2523 = vpow.pop %v2522
    %v2524 = vmul.f32 %v2517, 1.442695
    %v2525 = vpow.pop %v2524
    %v2526 = vsel %vm589, %v2519, 0.0
    %2527 = vadd.xlane.f32.xlu0 %v2526
    %v2528 = vpop.xlane.xlu0 %2527
    %v2529 = vsel %vm589, %v2521, 0.0
    %2530 = vadd.xlane.f32.xlu0 %v2529
    %v2531 = vpop.xlane.xlu0 %2530
    %v2532 = vsel %vm589, %v2523, 0.0
    %2533 = vadd.xlane.f32.xlu0 %v2532
    %v2534 = vpop.xlane.xlu0 %2533
    %v2535 = vsel %vm589, %v2525, 0.0
    %2536 = vadd.xlane.f32.xlu0 %v2535
    %v2537 = vpop.xlane.xlu0 %2536
    %v2538 = vrcp.pop %v2528
    %v2539 = vrcp.pop %v2531
    %v2540 = vrcp.pop %v2534
    %v2541 = vrcp.pop %v2537
    %v2542 = vmul.f32 %v2519, %v2538
    %v2543 = vmul.f32 %v2521, %v2539
    %v2544 = vmul.f32 %v2523, %v2540
    %v2545 = vmul.f32 %v2525, %v2541
    %v2547 = vsel %vm589, %v2542, 0
    %v2550 = vsel %vm589, %v2543, 0
    %2552 = vmatprep.subr.mxu0 0.0
    %2553 = vmatpush1.msra.mxu0 %v385
    %2554 = vmatprep.subr.mxu0 0.0
    %2555 = vmatpush1.msra.mxu0 %v390
    %2556 = vmatprep.subr.mxu0 0.0
    %2557 = vmatpush1.msra.mxu0 0.0
    %2558 = vmatprep.subr.mxu0 0.0
    %2559 = vmatpush1.msra.mxu0 0.0
    %2560 = vmatprep.subr.mxu0 0.0
    %2561 = vmatpush1.msra.mxu0 0.0
    %2562 = vmatprep.subr.mxu0 0.0
    %2563 = vmatpush1.msra.mxu0 0.0
    %2564 = vmatprep.subr.mxu0 0.0
    %2565 = vmatpush1.msra.mxu0 0.0
    %2566 = vmatprep.subr.mxu0 0.0
    %2567 = vmatpush1.msra.mxu0 0.0
    %2568 = vmatprep.subr.mxu0 0.0
    %2569 = vmatpush1.msra.mxu0 0.0
    %2570 = vmatprep.subr.mxu0 0.0
    %2571 = vmatpush1.msra.mxu0 0.0
    %2572 = vmatprep.subr.mxu0 0.0
    %2573 = vmatpush1.msra.mxu0 0.0
    %2574 = vmatprep.subr.mxu0 0.0
    %2575 = vmatpush1.msra.mxu0 0.0
    %2576 = vmatprep.subr.mxu0 0.0
    %2577 = vmatpush1.msra.mxu0 0.0
    %2578 = vmatprep.subr.mxu0 0.0
    %2579 = vmatpush1.msra.mxu0 0.0
    %2580 = vmatprep.subr.mxu0 0.0
    %2581 = vmatpush1.msra.mxu0 0.0
    %2582 = vmatprep.subr.mxu0 0.0
    %2583 = vmatpush1.msra.mxu0 0.0
    %2584 = vmatprep.subr.mxu0 0.0
    %2585 = vmatpush1.msra.mxu0 0.0
    %2586 = vmatprep.subr.mxu0 0.0
    %2587 = vmatpush1.msra.mxu0 0.0
    %2588 = vmatprep.subr.mxu0 0.0
    %2589 = vmatpush1.msra.mxu0 0.0
    %2590 = vmatprep.subr.mxu0 0.0
    %2591 = vmatpush1.msra.mxu0 0.0
    %2592 = vmatprep.subr.mxu0 0.0
    %2593 = vmatpush1.msra.mxu0 0.0
    %2594 = vmatprep.subr.mxu0 0.0
    %2595 = vmatpush1.msra.mxu0 0.0
    %2596 = vmatprep.subr.mxu0 0.0
    %2597 = vmatpush1.msra.mxu0 0.0
    %2598 = vmatprep.subr.mxu0 0.0
    %2599 = vmatpush1.msra.mxu0 0.0
    %2600 = vmatprep.subr.mxu0 0.0
    %2601 = vmatpush1.msra.mxu0 0.0
    %2602 = vmatprep.subr.mxu0 0.0
    %2603 = vmatpush1.msra.mxu0 0.0
    %2604 = vmatprep.subr.mxu0 0.0
    %2605 = vmatpush1.msra.mxu0 0.0
    %2606 = vmatprep.subr.mxu0 0.0
    %2607 = vmatpush1.msra.mxu0 0.0
    %2608 = vmatprep.subr.mxu0 0.0
    %2609 = vmatpush1.msra.mxu0 0.0
    %2610 = vmatprep.subr.mxu0 0.0
    %2611 = vmatpush1.msra.mxu0 0.0
    %2612 = vmatprep.subr.mxu0 0.0
    %2613 = vmatpush1.msra.mxu0 0.0
    %2614 = vmatprep.subr.mxu0 0.0
    %2615 = vmatpush1.msra.mxu0 0.0
    %2616 = vmatprep.mubr.f32.mxu0 0.0
    %2617 = vmatmul.mubr.f32.gmra.mrb[0].mxu0 %v2547
    %v2618 = vpop.f32.mrb[0].mxu0
    %v2619 = vadd.f32 0.0, %v2618
    %v2620 = vpop.f32.mrb[0].mxu0
    %2621 = vmatprep.mubr.f32.mxu0 0.0
    %2622 = vmatmul.mubr.f32.gmra.mrb[0].mxu0 %v2550
    %v2623 = vpop.f32.mrb[0].mxu0
    %v2624 = vadd.f32 0.0, %v2623
    %v2625 = vpop.f32.mrb[0].mxu0
    %2626 = vdwg.mxu0
    %v2628 = vsel %vm589, %v2544, 0
    %v2631 = vsel %vm589, %v2545, 0
    %2633 = vmatprep.subr.mxu0 0.0
    %2634 = vmatpush1.msra.mxu0 %v395
    %2635 = vmatprep.subr.mxu0 0.0
    %2636 = vmatpush1.msra.mxu0 %v400
    %2637 = vmatprep.subr.mxu0 0.0
    %2638 = vmatpush1.msra.mxu0 0.0
    %2639 = vmatprep.subr.mxu0 0.0
    %2640 = vmatpush1.msra.mxu0 0.0
    %2641 = vmatprep.subr.mxu0 0.0
    %2642 = vmatpush1.msra.mxu0 0.0
    %2643 = vmatprep.subr.mxu0 0.0
    %2644 = vmatpush1.msra.mxu0 0.0
    %2645 = vmatprep.subr.mxu0 0.0
    %2646 = vmatpush1.msra.mxu0 0.0
    %2647 = vmatprep.subr.mxu0 0.0
    %2648 = vmatpush1.msra.mxu0 0.0
    %2649 = vmatprep.subr.mxu0 0.0
    %2650 = vmatpush1.msra.mxu0 0.0
    %2651 = vmatprep.subr.mxu0 0.0
    %2652 = vmatpush1.msra.mxu0 0.0
    %2653 = vmatprep.subr.mxu0 0.0
    %2654 = vmatpush1.msra.mxu0 0.0
    %2655 = vmatprep.subr.mxu0 0.0
    %2656 = vmatpush1.msra.mxu0 0.0
    %2657 = vmatprep.subr.mxu0 0.0
    %2658 = vmatpush1.msra.mxu0 0.0
    %2659 = vmatprep.subr.mxu0 0.0
    %2660 = vmatpush1.msra.mxu0 0.0
    %2661 = vmatprep.subr.mxu0 0.0
    %2662 = vmatpush1.msra.mxu0 0.0
    %2663 = vmatprep.subr.mxu0 0.0
    %2664 = vmatpush1.msra.mxu0 0.0
    %2665 = vmatprep.subr.mxu0 0.0
    %2666 = vmatpush1.msra.mxu0 0.0
    %2667 = vmatprep.subr.mxu0 0.0
    %2668 = vmatpush1.msra.mxu0 0.0
    %2669 = vmatprep.subr.mxu0 0.0
    %2670 = vmatpush1.msra.mxu0 0.0
    %2671 = vmatprep.subr.mxu0 0.0
    %2672 = vmatpush1.msra.mxu0 0.0
    %2673 = vmatprep.subr.mxu0 0.0
    %2674 = vmatpush1.msra.mxu0 0.0
    %2675 = vmatprep.subr.mxu0 0.0
    %2676 = vmatpush1.msra.mxu0 0.0
    %2677 = vmatprep.subr.mxu0 0.0
    %2678 = vmatpush1.msra.mxu0 0.0
    %2679 = vmatprep.subr.mxu0 0.0
    %2680 = vmatpush1.msra.mxu0 0.0
    %2681 = vmatprep.subr.mxu0 0.0
    %2682 = vmatpush1.msra.mxu0 0.0
    %2683 = vmatprep.subr.mxu0 0.0
    %2684 = vmatpush1.msra.mxu0 0.0
    %2685 = vmatprep.subr.mxu0 0.0
    %2686 = vmatpush1.msra.mxu0 0.0
    %2687 = vmatprep.subr.mxu0 0.0
    %2688 = vmatpush1.msra.mxu0 0.0
    %2689 = vmatprep.subr.mxu0 0.0
    %2690 = vmatpush1.msra.mxu0 0.0
    %2691 = vmatprep.subr.mxu0 0.0
    %2692 = vmatpush1.msra.mxu0 0.0
    %2693 = vmatprep.subr.mxu0 0.0
    %2694 = vmatpush1.msra.mxu0 0.0
    %2695 = vmatprep.subr.mxu0 0.0
    %2696 = vmatpush1.msra.mxu0 0.0
    %2697 = vmatprep.mubr.f32.mxu0 0.0
    %2698 = vmatmul.mubr.f32.gmra.mrb[0].mxu0 %v2628
    %v2699 = vpop.f32.mrb[0].mxu0
    %v2700 = vadd.f32 0.0, %v2699
    %v2701 = vpop.f32.mrb[0].mxu0
    %2702 = vmatprep.mubr.f32.mxu0 0.0
    %2703 = vmatmul.mubr.f32.gmra.mrb[0].mxu0 %v2631
    %v2704 = vpop.f32.mrb[0].mxu0
    %v2705 = vadd.f32 0.0, %v2704
    %v2706 = vpop.f32.mrb[0].mxu0
    %2707 = vdwg.mxu0
    %s2708 = scalar_lea.vmem %s7, 16
    %v2709 = vld [vmem:[%s2708] sm:$0xf]
    %v2711 = vsel %vm414, %v2619, 0
    %v2714 = vsel %vm414, %v2624, 0
    %v2717 = vsel %vm414, %v2700, 0
    %v2720 = vsel %vm414, %v2705, 0
    %v2723 = vsel %vm809, %v2709, 0
    %2725 = vmatprep.subr.mxu0 0.0
    %2726 = vmatpush1.msra.mxu0 %v2723
    %2727 = vmatprep.subr.mxu0 0.0
    %2728 = vmatpush1.msra.mxu0 0.0
    %2729 = vmatprep.subr.mxu0 0.0
    %2730 = vmatpush1.msra.mxu0 0.0
    %2731 = vmatprep.subr.mxu0 0.0
    %2732 = vmatpush1.msra.mxu0 0.0
    %2733 = vmatprep.subr.mxu0 0.0
    %2734 = vmatpush1.msra.mxu0 0.0
    %2735 = vmatprep.subr.mxu0 0.0
    %2736 = vmatpush1.msra.mxu0 0.0
    %2737 = vmatprep.subr.mxu0 0.0
    %2738 = vmatpush1.msra.mxu0 0.0
    %2739 = vmatprep.subr.mxu0 0.0
    %2740 = vmatpush1.msra.mxu0 0.0
    %2741 = vmatprep.subr.mxu0 0.0
    %2742 = vmatpush1.msra.mxu0 0.0
    %2743 = vmatprep.subr.mxu0 0.0
    %2744 = vmatpush1.msra.mxu0 0.0
    %2745 = vmatprep.subr.mxu0 0.0
    %2746 = vmatpush1.msra.mxu0 0.0
    %2747 = vmatprep.subr.mxu0 0.0
    %2748 = vmatpush1.msra.mxu0 0.0
    %2749 = vmatprep.subr.mxu0 0.0
    %2750 = vmatpush1.msra.mxu0 0.0
    %2751 = vmatprep.subr.mxu0 0.0
    %2752 = vmatpush1.msra.mxu0 0.0
    %2753 = vmatprep.subr.mxu0 0.0
    %2754 = vmatpush1.msra.mxu0 0.0
    %2755 = vmatprep.subr.mxu0 0.0
    %2756 = vmatpush1.msra.mxu0 0.0
    %2757 = vmatprep.subr.mxu0 0.0
    %2758 = vmatpush1.msra.mxu0 0.0
    %2759 = vmatprep.subr.mxu0 0.0
    %2760 = vmatpush1.msra.mxu0 0.0
    %2761 = vmatprep.subr.mxu0 0.0
    %2762 = vmatpush1.msra.mxu0 0.0
    %2763 = vmatprep.subr.mxu0 0.0
    %2764 = vmatpush1.msra.mxu0 0.0
    %2765 = vmatprep.subr.mxu0 0.0
    %2766 = vmatpush1.msra.mxu0 0.0
    %2767 = vmatprep.subr.mxu0 0.0
    %2768 = vmatpush1.msra.mxu0 0.0
    %2769 = vmatprep.subr.mxu0 0.0
    %2770 = vmatpush1.msra.mxu0 0.0
    %2771 = vmatprep.subr.mxu0 0.0
    %2772 = vmatpush1.msra.mxu0 0.0
    %2773 = vmatprep.subr.mxu0 0.0
    %2774 = vmatpush1.msra.mxu0 0.0
    %2775 = vmatprep.subr.mxu0 0.0
    %2776 = vmatpush1.msra.mxu0 0.0
    %2777 = vmatprep.subr.mxu0 0.0
    %2778 = vmatpush1.msra.mxu0 0.0
    %2779 = vmatprep.subr.mxu0 0.0
    %2780 = vmatpush1.msra.mxu0 0.0
    %2781 = vmatprep.subr.mxu0 0.0
    %2782 = vmatpush1.msra.mxu0 0.0
    %2783 = vmatprep.subr.mxu0 0.0
    %2784 = vmatpush1.msra.mxu0 0.0
    %2785 = vmatprep.subr.mxu0 0.0
    %2786 = vmatpush1.msra.mxu0 0.0
    %2787 = vmatprep.subr.mxu0 0.0
    %2788 = vmatpush1.msra.mxu0 0.0
    %2789 = vmatprep.mubr.f32.mxu0 0.0
    %2790 = vmatmul.mubr.f32.gmra.mrb[0].mxu0 %v2711
    %v2791 = vpop.f32.mrb[0].mxu0
    %v2792 = vadd.f32 0.0, %v2791
    %v2793 = vpop.f32.mrb[0].mxu0
    %2794 = vmatprep.mubr.f32.mxu0 0.0
    %2795 = vmatmul.mubr.f32.gmra.mrb[0].mxu0 %v2714
    %v2796 = vpop.f32.mrb[0].mxu0
    %v2797 = vadd.f32 0.0, %v2796
    %v2798 = vpop.f32.mrb[0].mxu0
    %2799 = vmatprep.mubr.f32.mxu0 0.0
    %2800 = vmatmul.mubr.f32.gmra.mrb[0].mxu0 %v2717
    %v2801 = vpop.f32.mrb[0].mxu0
    %v2802 = vadd.f32 0.0, %v2801
    %v2803 = vpop.f32.mrb[0].mxu0
    %2804 = vmatprep.mubr.f32.mxu0 0.0
    %2805 = vmatmul.mubr.f32.gmra.mrb[0].mxu0 %v2720
    %v2806 = vpop.f32.mrb[0].mxu0
    %v2807 = vadd.f32 0.0, %v2806
    %v2808 = vpop.f32.mrb[0].mxu0
    %2809 = vdwg.mxu0
    %v2810 = vadd.f32 %v2332, %v2792
    %v2811 = vadd.f32 %v2333, %v2797
    %v2812 = vadd.f32 %v2334, %v2802
    %v2813 = vadd.f32 %v2335, %v2807
    %2814 = vrot.lane.b32.xlu0 %v193, 108
    %v2815 = vpop.permute.xlu0 %2814
    %2816 = vrot.lane.b32.xlu0 %v198, 108
    %v2817 = vpop.permute.xlu0 %2816
    %v2818 = vsel %vm414, %v2815, 0
    %v2820 = vsel %vm414, %v2817, 0
    %2822 = vmatprep.subr.mxu0 0.0
    %2823 = vmatpush1.xpose.msra.mxu0 %v422
    %2824 = vmatprep.subr.mxu0 0.0
    %2825 = vmatpush1.xpose.msra.mxu0 %v425
    %2826 = vmatprep.subr.mxu0 0.0
    %2827 = vmatpush1.xpose.msra.mxu0 0.0
    %2828 = vmatprep.subr.mxu0 0.0
    %2829 = vmatpush1.xpose.msra.mxu0 0.0
    %2830 = vmatprep.subr.mxu0 0.0
    %2831 = vmatpush1.xpose.msra.mxu0 0.0
    %2832 = vmatprep.subr.mxu0 0.0
    %2833 = vmatpush1.xpose.msra.mxu0 0.0
    %2834 = vmatprep.subr.mxu0 0.0
    %2835 = vmatpush1.xpose.msra.mxu0 0.0
    %2836 = vmatprep.subr.mxu0 0.0
    %2837 = vmatpush1.xpose.msra.mxu0 0.0
    %2838 = vmatprep.subr.mxu0 0.0
    %2839 = vmatpush1.xpose.msra.mxu0 0.0
    %2840 = vmatprep.subr.mxu0 0.0
    %2841 = vmatpush1.xpose.msra.mxu0 0.0
    %2842 = vmatprep.subr.mxu0 0.0
    %2843 = vmatpush1.xpose.msra.mxu0 0.0
    %2844 = vmatprep.subr.mxu0 0.0
    %2845 = vmatpush1.xpose.msra.mxu0 0.0
    %2846 = vmatprep.subr.mxu0 0.0
    %2847 = vmatpush1.xpose.msra.mxu0 0.0
    %2848 = vmatprep.subr.mxu0 0.0
    %2849 = vmatpush1.xpose.msra.mxu0 0.0
    %2850 = vmatprep.subr.mxu0 0.0
    %2851 = vmatpush1.xpose.msra.mxu0 0.0
    %2852 = vmatprep.subr.mxu0 0.0
    %2853 = vmatpush1.xpose.msra.mxu0 0.0
    %2854 = vmatprep.subr.mxu0 0.0
    %2855 = vmatpush1.xpose.msra.mxu0 0.0
    %2856 = vmatprep.subr.mxu0 0.0
    %2857 = vmatpush1.xpose.msra.mxu0 0.0
    %2858 = vmatprep.subr.mxu0 0.0
    %2859 = vmatpush1.xpose.msra.mxu0 0.0
    %2860 = vmatprep.subr.mxu0 0.0
    %2861 = vmatpush1.xpose.msra.mxu0 0.0
    %2862 = vmatprep.subr.mxu0 0.0
    %2863 = vmatpush1.xpose.msra.mxu0 0.0
    %2864 = vmatprep.subr.mxu0 0.0
    %2865 = vmatpush1.xpose.msra.mxu0 0.0
    %2866 = vmatprep.subr.mxu0 0.0
    %2867 = vmatpush1.xpose.msra.mxu0 0.0
    %2868 = vmatprep.subr.mxu0 0.0
    %2869 = vmatpush1.xpose.msra.mxu0 0.0
    %2870 = vmatprep.subr.mxu0 0.0
    %2871 = vmatpush1.xpose.msra.mxu0 0.0
    %2872 = vmatprep.subr.mxu0 0.0
    %2873 = vmatpush1.xpose.msra.mxu0 0.0
    %2874 = vmatprep.subr.mxu0 0.0
    %2875 = vmatpush1.xpose.msra.mxu0 0.0
    %2876 = vmatprep.subr.mxu0 0.0
    %2877 = vmatpush1.xpose.msra.mxu0 0.0
    %2878 = vmatprep.subr.mxu0 0.0
    %2879 = vmatpush1.xpose.msra.mxu0 0.0
    %2880 = vmatprep.subr.mxu0 0.0
    %2881 = vmatpush1.xpose.msra.mxu0 0.0
    %2882 = vmatprep.subr.mxu0 0.0
    %2883 = vmatpush1.xpose.msra.mxu0 0.0
    %2884 = vmatprep.subr.mxu0 0.0
    %2885 = vmatpush1.xpose.msra.mxu0 0.0
    %2886 = vmatprep.mubr.f32.mxu0 0.0
    %2887 = vmatmul.mubr.f32.gmra.mrb[0].mxu0 %v2818
    %v2888 = vpop.f32.mrb[0].mxu0
    %v2889 = vadd.f32 0.0, %v2888
    %v2890 = vpop.f32.mrb[0].mxu0
    %2891 = vmatprep.mubr.f32.mxu0 0.0
    %2892 = vmatmul.mubr.f32.gmra.mrb[0].mxu0 %v2820
    %v2893 = vpop.f32.mrb[0].mxu0
    %v2894 = vadd.f32 0.0, %v2893
    %v2895 = vpop.f32.mrb[0].mxu0
    %2896 = vdwg.mxu0
    %2897 = vrot.lane.b32.xlu0 %v203, 108
    %v2898 = vpop.permute.xlu0 %2897
    %2899 = vrot.lane.b32.xlu0 %v208, 108
    %v2900 = vpop.permute.xlu0 %2899
    %v2901 = vsel %vm414, %v2898, 0
    %v2903 = vsel %vm414, %v2900, 0
    %2905 = vmatprep.subr.mxu0 0.0
    %2906 = vmatpush1.xpose.msra.mxu0 %v509
    %2907 = vmatprep.subr.mxu0 0.0
    %2908 = vmatpush1.xpose.msra.mxu0 %v512
    %2909 = vmatprep.subr.mxu0 0.0
    %2910 = vmatpush1.xpose.msra.mxu0 0.0
    %2911 = vmatprep.subr.mxu0 0.0
    %2912 = vmatpush1.xpose.msra.mxu0 0.0
    %2913 = vmatprep.subr.mxu0 0.0
    %2914 = vmatpush1.xpose.msra.mxu0 0.0
    %2915 = vmatprep.subr.mxu0 0.0
    %2916 = vmatpush1.xpose.msra.mxu0 0.0
    %2917 = vmatprep.subr.mxu0 0.0
    %2918 = vmatpush1.xpose.msra.mxu0 0.0
    %2919 = vmatprep.subr.mxu0 0.0
    %2920 = vmatpush1.xpose.msra.mxu0 0.0
    %2921 = vmatprep.subr.mxu0 0.0
    %2922 = vmatpush1.xpose.msra.mxu0 0.0
    %2923 = vmatprep.subr.mxu0 0.0
    %2924 = vmatpush1.xpose.msra.mxu0 0.0
    %2925 = vmatprep.subr.mxu0 0.0
    %2926 = vmatpush1.xpose.msra.mxu0 0.0
    %2927 = vmatprep.subr.mxu0 0.0
    %2928 = vmatpush1.xpose.msra.mxu0 0.0
    %2929 = vmatprep.subr.mxu0 0.0
    %2930 = vmatpush1.xpose.msra.mxu0 0.0
    %2931 = vmatprep.subr.mxu0 0.0
    %2932 = vmatpush1.xpose.msra.mxu0 0.0
    %2933 = vmatprep.subr.mxu0 0.0
    %2934 = vmatpush1.xpose.msra.mxu0 0.0
    %2935 = vmatprep.subr.mxu0 0.0
    %2936 = vmatpush1.xpose.msra.mxu0 0.0
    %2937 = vmatprep.subr.mxu0 0.0
    %2938 = vmatpush1.xpose.msra.mxu0 0.0
    %2939 = vmatprep.subr.mxu0 0.0
    %2940 = vmatpush1.xpose.msra.mxu0 0.0
    %2941 = vmatprep.subr.mxu0 0.0
    %2942 = vmatpush1.xpose.msra.mxu0 0.0
    %2943 = vmatprep.subr.mxu0 0.0
    %2944 = vmatpush1.xpose.msra.mxu0 0.0
    %2945 = vmatprep.subr.mxu0 0.0
    %2946 = vmatpush1.xpose.msra.mxu0 0.0
    %2947 = vmatprep.subr.mxu0 0.0
    %2948 = vmatpush1.xpose.msra.mxu0 0.0
    %2949 = vmatprep.subr.mxu0 0.0
    %2950 = vmatpush1.xpose.msra.mxu0 0.0
    %2951 = vmatprep.subr.mxu0 0.0
    %2952 = vmatpush1.xpose.msra.mxu0 0.0
    %2953 = vmatprep.subr.mxu0 0.0
    %2954 = vmatpush1.xpose.msra.mxu0 0.0
    %2955 = vmatprep.subr.mxu0 0.0
    %2956 = vmatpush1.xpose.msra.mxu0 0.0
    %2957 = vmatprep.subr.mxu0 0.0
    %2958 = vmatpush1.xpose.msra.mxu0 0.0
    %2959 = vmatprep.subr.mxu0 0.0
    %2960 = vmatpush1.xpose.msra.mxu0 0.0
    %2961 = vmatprep.subr.mxu0 0.0
    %2962 = vmatpush1.xpose.msra.mxu0 0.0
    %2963 = vmatprep.subr.mxu0 0.0
    %2964 = vmatpush1.xpose.msra.mxu0 0.0
    %2965 = vmatprep.subr.mxu0 0.0
    %2966 = vmatpush1.xpose.msra.mxu0 0.0
    %2967 = vmatprep.subr.mxu0 0.0
    %2968 = vmatpush1.xpose.msra.mxu0 0.0
    %2969 = vmatprep.mubr.f32.mxu0 0.0
    %2970 = vmatmul.mubr.f32.gmra.mrb[0].mxu0 %v2901
    %v2971 = vpop.f32.mrb[0].mxu0
    %v2972 = vadd.f32 0.0, %v2971
    %v2973 = vpop.f32.mrb[0].mxu0
    %2974 = vmatprep.mubr.f32.mxu0 0.0
    %2975 = vmatmul.mubr.f32.gmra.mrb[0].mxu0 %v2903
    %v2976 = vpop.f32.mrb[0].mxu0
    %v2977 = vadd.f32 0.0, %v2976
    %v2978 = vpop.f32.mrb[0].mxu0
    %2979 = vdwg.mxu0
    %v2980 = vsel %vm589, %v2889, -inf
    %2981 = vmax.xlane.f32.xlu0 %v2980
    %v2982 = vpop.xlane.xlu0 %2981
    %v2983 = vsel %vm589, %v2894, -inf
    %2984 = vmax.xlane.f32.xlu0 %v2983
    %v2985 = vpop.xlane.xlu0 %2984
    %v2986 = vsel %vm589, %v2972, -inf
    %2987 = vmax.xlane.f32.xlu0 %v2986
    %v2988 = vpop.xlane.xlu0 %2987
    %v2989 = vsel %vm589, %v2977, -inf
    %2990 = vmax.xlane.f32.xlu0 %v2989
    %v2991 = vpop.xlane.xlu0 %2990
    %v2992 = vsub.f32 %v2889, %v2982
    %v2993 = vsub.f32 %v2894, %v2985
    %v2994 = vsub.f32 %v2972, %v2988
    %v2995 = vsub.f32 %v2977, %v2991
    %v2996 = vmul.f32 %v2992, 1.442695
    %v2997 = vpow.pop %v2996
    %v2998 = vmul.f32 %v2993, 1.442695
    %v2999 = vpow.pop %v2998
    %v3000 = vmul.f32 %v2994, 1.442695
    %v3001 = vpow.pop %v3000
    %v3002 = vmul.f32 %v2995, 1.442695
    %v3003 = vpow.pop %v3002
    %v3004 = vsel %vm589, %v2997, 0.0
    %3005 = vadd.xlane.f32.xlu0 %v3004
    %v3006 = vpop.xlane.xlu0 %3005
    %v3007 = vsel %vm589, %v2999, 0.0
    %3008 = vadd.xlane.f32.xlu0 %v3007
    %v3009 = vpop.xlane.xlu0 %3008
    %v3010 = vsel %vm589, %v3001, 0.0
    %3011 = vadd.xlane.f32.xlu0 %v3010
    %v3012 = vpop.xlane.xlu0 %3011
    %v3013 = vsel %vm589, %v3003, 0.0
    %3014 = vadd.xlane.f32.xlu0 %v3013
    %v3015 = vpop.xlane.xlu0 %3014
    %v3016 = vrcp.pop %v3006
    %v3017 = vrcp.pop %v3009
    %v3018 = vrcp.pop %v3012
    %v3019 = vrcp.pop %v3015
    %v3020 = vmul.f32 %v2997, %v3016
    %v3021 = vmul.f32 %v2999, %v3017
    %v3022 = vmul.f32 %v3001, %v3018
    %v3023 = vmul.f32 %v3003, %v3019
    %v3025 = vsel %vm589, %v3020, 0
    %v3028 = vsel %vm589, %v3021, 0
    %3030 = vmatprep.subr.mxu0 0.0
    %3031 = vmatpush1.msra.mxu0 %v385
    %3032 = vmatprep.subr.mxu0 0.0
    %3033 = vmatpush1.msra.mxu0 %v390
    %3034 = vmatprep.subr.mxu0 0.0
    %3035 = vmatpush1.msra.mxu0 0.0
    %3036 = vmatprep.subr.mxu0 0.0
    %3037 = vmatpush1.msra.mxu0 0.0
    %3038 = vmatprep.subr.mxu0 0.0
    %3039 = vmatpush1.msra.mxu0 0.0
    %3040 = vmatprep.subr.mxu0 0.0
    %3041 = vmatpush1.msra.mxu0 0.0
    %3042 = vmatprep.subr.mxu0 0.0
    %3043 = vmatpush1.msra.mxu0 0.0
    %3044 = vmatprep.subr.mxu0 0.0
    %3045 = vmatpush1.msra.mxu0 0.0
    %3046 = vmatprep.subr.mxu0 0.0
    %3047 = vmatpush1.msra.mxu0 0.0
    %3048 = vmatprep.subr.mxu0 0.0
    %3049 = vmatpush1.msra.mxu0 0.0
    %3050 = vmatprep.subr.mxu0 0.0
    %3051 = vmatpush1.msra.mxu0 0.0
    %3052 = vmatprep.subr.mxu0 0.0
    %3053 = vmatpush1.msra.mxu0 0.0
    %3054 = vmatprep.subr.mxu0 0.0
    %3055 = vmatpush1.msra.mxu0 0.0
    %3056 = vmatprep.subr.mxu0 0.0
    %3057 = vmatpush1.msra.mxu0 0.0
    %3058 = vmatprep.subr.mxu0 0.0
    %3059 = vmatpush1.msra.mxu0 0.0
    %3060 = vmatprep.subr.mxu0 0.0
    %3061 = vmatpush1.msra.mxu0 0.0
    %3062 = vmatprep.subr.mxu0 0.0
    %3063 = vmatpush1.msra.mxu0 0.0
    %3064 = vmatprep.subr.mxu0 0.0
    %3065 = vmatpush1.msra.mxu0 0.0
    %3066 = vmatprep.subr.mxu0 0.0
    %3067 = vmatpush1.msra.mxu0 0.0
    %3068 = vmatprep.subr.mxu0 0.0
    %3069 = vmatpush1.msra.mxu0 0.0
    %3070 = vmatprep.subr.mxu0 0.0
    %3071 = vmatpush1.msra.mxu0 0.0
    %3072 = vmatprep.subr.mxu0 0.0
    %3073 = vmatpush1.msra.mxu0 0.0
    %3074 = vmatprep.subr.mxu0 0.0
    %3075 = vmatpush1.msra.mxu0 0.0
    %3076 = vmatprep.subr.mxu0 0.0
    %3077 = vmatpush1.msra.mxu0 0.0
    %3078 = vmatprep.subr.mxu0 0.0
    %3079 = vmatpush1.msra.mxu0 0.0
    %3080 = vmatprep.subr.mxu0 0.0
    %3081 = vmatpush1.msra.mxu0 0.0
    %3082 = vmatprep.subr.mxu0 0.0
    %3083 = vmatpush1.msra.mxu0 0.0
    %3084 = vmatprep.subr.mxu0 0.0
    %3085 = vmatpush1.msra.mxu0 0.0
    %3086 = vmatprep.subr.mxu0 0.0
    %3087 = vmatpush1.msra.mxu0 0.0
    %3088 = vmatprep.subr.mxu0 0.0
    %3089 = vmatpush1.msra.mxu0 0.0
    %3090 = vmatprep.subr.mxu0 0.0
    %3091 = vmatpush1.msra.mxu0 0.0
    %3092 = vmatprep.subr.mxu0 0.0
    %3093 = vmatpush1.msra.mxu0 0.0
    %3094 = vmatprep.mubr.f32.mxu0 0.0
    %3095 = vmatmul.mubr.f32.gmra.mrb[0].mxu0 %v3025
    %v3096 = vpop.f32.mrb[0].mxu0
    %v3097 = vadd.f32 0.0, %v3096
    %v3098 = vpop.f32.mrb[0].mxu0
    %3099 = vmatprep.mubr.f32.mxu0 0.0
    %3100 = vmatmul.mubr.f32.gmra.mrb[0].mxu0 %v3028
    %v3101 = vpop.f32.mrb[0].mxu0
    %v3102 = vadd.f32 0.0, %v3101
    %v3103 = vpop.f32.mrb[0].mxu0
    %3104 = vdwg.mxu0
    %v3106 = vsel %vm589, %v3022, 0
    %v3109 = vsel %vm589, %v3023, 0
    %3111 = vmatprep.subr.mxu0 0.0
    %3112 = vmatpush1.msra.mxu0 %v395
    %3113 = vmatprep.subr.mxu0 0.0
    %3114 = vmatpush1.msra.mxu0 %v400
    %3115 = vmatprep.subr.mxu0 0.0
    %3116 = vmatpush1.msra.mxu0 0.0
    %3117 = vmatprep.subr.mxu0 0.0
    %3118 = vmatpush1.msra.mxu0 0.0
    %3119 = vmatprep.subr.mxu0 0.0
    %3120 = vmatpush1.msra.mxu0 0.0
    %3121 = vmatprep.subr.mxu0 0.0
    %3122 = vmatpush1.msra.mxu0 0.0
    %3123 = vmatprep.subr.mxu0 0.0
    %3124 = vmatpush1.msra.mxu0 0.0
    %3125 = vmatprep.subr.mxu0 0.0
    %3126 = vmatpush1.msra.mxu0 0.0
    %3127 = vmatprep.subr.mxu0 0.0
    %3128 = vmatpush1.msra.mxu0 0.0
    %3129 = vmatprep.subr.mxu0 0.0
    %3130 = vmatpush1.msra.mxu0 0.0
    %3131 = vmatprep.subr.mxu0 0.0
    %3132 = vmatpush1.msra.mxu0 0.0
    %3133 = vmatprep.subr.mxu0 0.0
    %3134 = vmatpush1.msra.mxu0 0.0
    %3135 = vmatprep.subr.mxu0 0.0
    %3136 = vmatpush1.msra.mxu0 0.0
    %3137 = vmatprep.subr.mxu0 0.0
    %3138 = vmatpush1.msra.mxu0 0.0
    %3139 = vmatprep.subr.mxu0 0.0
    %3140 = vmatpush1.msra.mxu0 0.0
    %3141 = vmatprep.subr.mxu0 0.0
    %3142 = vmatpush1.msra.mxu0 0.0
    %3143 = vmatprep.subr.mxu0 0.0
    %3144 = vmatpush1.msra.mxu0 0.0
    %3145 = vmatprep.subr.mxu0 0.0
    %3146 = vmatpush1.msra.mxu0 0.0
    %3147 = vmatprep.subr.mxu0 0.0
    %3148 = vmatpush1.msra.mxu0 0.0
    %3149 = vmatprep.subr.mxu0 0.0
    %3150 = vmatpush1.msra.mxu0 0.0
    %3151 = vmatprep.subr.mxu0 0.0
    %3152 = vmatpush1.msra.mxu0 0.0
    %3153 = vmatprep.subr.mxu0 0.0
    %3154 = vmatpush1.msra.mxu0 0.0
    %3155 = vmatprep.subr.mxu0 0.0
    %3156 = vmatpush1.msra.mxu0 0.0
    %3157 = vmatprep.subr.mxu0 0.0
    %3158 = vmatpush1.msra.mxu0 0.0
    %3159 = vmatprep.subr.mxu0 0.0
    %3160 = vmatpush1.msra.mxu0 0.0
    %3161 = vmatprep.subr.mxu0 0.0
    %3162 = vmatpush1.msra.mxu0 0.0
    %3163 = vmatprep.subr.mxu0 0.0
    %3164 = vmatpush1.msra.mxu0 0.0
    %3165 = vmatprep.subr.mxu0 0.0
    %3166 = vmatpush1.msra.mxu0 0.0
    %3167 = vmatprep.subr.mxu0 0.0
    %3168 = vmatpush1.msra.mxu0 0.0
    %3169 = vmatprep.subr.mxu0 0.0
    %3170 = vmatpush1.msra.mxu0 0.0
    %3171 = vmatprep.subr.mxu0 0.0
    %3172 = vmatpush1.msra.mxu0 0.0
    %3173 = vmatprep.subr.mxu0 0.0
    %3174 = vmatpush1.msra.mxu0 0.0
    %3175 = vmatprep.mubr.f32.mxu0 0.0
    %3176 = vmatmul.mubr.f32.gmra.mrb[0].mxu0 %v3106
    %v3177 = vpop.f32.mrb[0].mxu0
    %v3178 = vadd.f32 0.0, %v3177
    %v3179 = vpop.f32.mrb[0].mxu0
    %3180 = vmatprep.mubr.f32.mxu0 0.0
    %3181 = vmatmul.mubr.f32.gmra.mrb[0].mxu0 %v3109
    %v3182 = vpop.f32.mrb[0].mxu0
    %v3183 = vadd.f32 0.0, %v3182
    %v3184 = vpop.f32.mrb[0].mxu0
    %3185 = vdwg.mxu0
    %s3186 = scalar_lea.vmem %s7, 20
    %v3187 = vld [vmem:[%s3186] sm:$0xf]
    %v3189 = vsel %vm414, %v3097, 0
    %v3192 = vsel %vm414, %v3102, 0
    %v3195 = vsel %vm414, %v3178, 0
    %v3198 = vsel %vm414, %v3183, 0
    %v3201 = vsel %vm809, %v3187, 0
    %3203 = vmatprep.subr.mxu0 0.0
    %3204 = vmatpush1.msra.mxu0 %v3201
    %3205 = vmatprep.subr.mxu0 0.0
    %3206 = vmatpush1.msra.mxu0 0.0
    %3207 = vmatprep.subr.mxu0 0.0
    %3208 = vmatpush1.msra.mxu0 0.0
    %3209 = vmatprep.subr.mxu0 0.0
    %3210 = vmatpush1.msra.mxu0 0.0
    %3211 = vmatprep.subr.mxu0 0.0
    %3212 = vmatpush1.msra.mxu0 0.0
    %3213 = vmatprep.subr.mxu0 0.0
    %3214 = vmatpush1.msra.mxu0 0.0
    %3215 = vmatprep.subr.mxu0 0.0
    %3216 = vmatpush1.msra.mxu0 0.0
    %3217 = vmatprep.subr.mxu0 0.0
    %3218 = vmatpush1.msra.mxu0 0.0
    %3219 = vmatprep.subr.mxu0 0.0
    %3220 = vmatpush1.msra.mxu0 0.0
    %3221 = vmatprep.subr.mxu0 0.0
    %3222 = vmatpush1.msra.mxu0 0.0
    %3223 = vmatprep.subr.mxu0 0.0
    %3224 = vmatpush1.msra.mxu0 0.0
    %3225 = vmatprep.subr.mxu0 0.0
    %3226 = vmatpush1.msra.mxu0 0.0
    %3227 = vmatprep.subr.mxu0 0.0
    %3228 = vmatpush1.msra.mxu0 0.0
    %3229 = vmatprep.subr.mxu0 0.0
    %3230 = vmatpush1.msra.mxu0 0.0
    %3231 = vmatprep.subr.mxu0 0.0
    %3232 = vmatpush1.msra.mxu0 0.0
    %3233 = vmatprep.subr.mxu0 0.0
    %3234 = vmatpush1.msra.mxu0 0.0
    %3235 = vmatprep.subr.mxu0 0.0
    %3236 = vmatpush1.msra.mxu0 0.0
    %3237 = vmatprep.subr.mxu0 0.0
    %3238 = vmatpush1.msra.mxu0 0.0
    %3239 = vmatprep.subr.mxu0 0.0
    %3240 = vmatpush1.msra.mxu0 0.0
    %3241 = vmatprep.subr.mxu0 0.0
    %3242 = vmatpush1.msra.mxu0 0.0
    %3243 = vmatprep.subr.mxu0 0.0
    %3244 = vmatpush1.msra.mxu0 0.0
    %3245 = vmatprep.subr.mxu0 0.0
    %3246 = vmatpush1.msra.mxu0 0.0
    %3247 = vmatprep.subr.mxu0 0.0
    %3248 = vmatpush1.msra.mxu0 0.0
    %3249 = vmatprep.subr.mxu0 0.0
    %3250 = vmatpush1.msra.mxu0 0.0
    %3251 = vmatprep.subr.mxu0 0.0
    %3252 = vmatpush1.msra.mxu0 0.0
    %3253 = vmatprep.subr.mxu0 0.0
    %3254 = vmatpush1.msra.mxu0 0.0
    %3255 = vmatprep.subr.mxu0 0.0
    %3256 = vmatpush1.msra.mxu0 0.0
    %3257 = vmatprep.subr.mxu0 0.0
    %3258 = vmatpush1.msra.mxu0 0.0
    %3259 = vmatprep.subr.mxu0 0.0
    %3260 = vmatpush1.msra.mxu0 0.0
    %3261 = vmatprep.subr.mxu0 0.0
    %3262 = vmatpush1.msra.mxu0 0.0
    %3263 = vmatprep.subr.mxu0 0.0
    %3264 = vmatpush1.msra.mxu0 0.0
    %3265 = vmatprep.subr.mxu0 0.0
    %3266 = vmatpush1.msra.mxu0 0.0
    %3267 = vmatprep.mubr.f32.mxu0 0.0
    %3268 = vmatmul.mubr.f32.gmra.mrb[0].mxu0 %v3189
    %v3269 = vpop.f32.mrb[0].mxu0
    %v3270 = vadd.f32 0.0, %v3269
    %v3271 = vpop.f32.mrb[0].mxu0
    %3272 = vmatprep.mubr.f32.mxu0 0.0
    %3273 = vmatmul.mubr.f32.gmra.mrb[0].mxu0 %v3192
    %v3274 = vpop.f32.mrb[0].mxu0
    %v3275 = vadd.f32 0.0, %v3274
    %v3276 = vpop.f32.mrb[0].mxu0
    %3277 = vmatprep.mubr.f32.mxu0 0.0
    %3278 = vmatmul.mubr.f32.gmra.mrb[0].mxu0 %v3195
    %v3279 = vpop.f32.mrb[0].mxu0
    %v3280 = vadd.f32 0.0, %v3279
    %v3281 = vpop.f32.mrb[0].mxu0
    %3282 = vmatprep.mubr.f32.mxu0 0.0
    %3283 = vmatmul.mubr.f32.gmra.mrb[0].mxu0 %v3198
    %v3284 = vpop.f32.mrb[0].mxu0
    %v3285 = vadd.f32 0.0, %v3284
    %v3286 = vpop.f32.mrb[0].mxu0
    %3287 = vdwg.mxu0
    %v3288 = vadd.f32 %v2810, %v3270
    %v3289 = vadd.f32 %v2811, %v3275
    %v3290 = vadd.f32 %v2812, %v3280
    %v3291 = vadd.f32 %v2813, %v3285
    %3292 = vrot.lane.b32.xlu0 %v193, 104
    %v3293 = vpop.permute.xlu0 %3292
    %3294 = vrot.lane.b32.xlu0 %v198, 104
    %v3295 = vpop.permute.xlu0 %3294
    %v3296 = vsel %vm414, %v3293, 0
    %v3298 = vsel %vm414, %v3295, 0
    %3300 = vmatprep.subr.mxu0 0.0
    %3301 = vmatpush1.xpose.msra.mxu0 %v422
    %3302 = vmatprep.subr.mxu0 0.0
    %3303 = vmatpush1.xpose.msra.mxu0 %v425
    %3304 = vmatprep.subr.mxu0 0.0
    %3305 = vmatpush1.xpose.msra.mxu0 0.0
    %3306 = vmatprep.subr.mxu0 0.0
    %3307 = vmatpush1.xpose.msra.mxu0 0.0
    %3308 = vmatprep.subr.mxu0 0.0
    %3309 = vmatpush1.xpose.msra.mxu0 0.0
    %3310 = vmatprep.subr.mxu0 0.0
    %3311 = vmatpush1.xpose.msra.mxu0 0.0
    %3312 = vmatprep.subr.mxu0 0.0
    %3313 = vmatpush1.xpose.msra.mxu0 0.0
    %3314 = vmatprep.subr.mxu0 0.0
    %3315 = vmatpush1.xpose.msra.mxu0 0.0
    %3316 = vmatprep.subr.mxu0 0.0
    %3317 = vmatpush1.xpose.msra.mxu0 0.0
    %3318 = vmatprep.subr.mxu0 0.0
    %3319 = vmatpush1.xpose.msra.mxu0 0.0
    %3320 = vmatprep.subr.mxu0 0.0
    %3321 = vmatpush1.xpose.msra.mxu0 0.0
    %3322 = vmatprep.subr.mxu0 0.0
    %3323 = vmatpush1.xpose.msra.mxu0 0.0
    %3324 = vmatprep.subr.mxu0 0.0
    %3325 = vmatpush1.xpose.msra.mxu0 0.0
    %3326 = vmatprep.subr.mxu0 0.0
    %3327 = vmatpush1.xpose.msra.mxu0 0.0
    %3328 = vmatprep.subr.mxu0 0.0
    %3329 = vmatpush1.xpose.msra.mxu0 0.0
    %3330 = vmatprep.subr.mxu0 0.0
    %3331 = vmatpush1.xpose.msra.mxu0 0.0
    %3332 = vmatprep.subr.mxu0 0.0
    %3333 = vmatpush1.xpose.msra.mxu0 0.0
    %3334 = vmatprep.subr.mxu0 0.0
    %3335 = vmatpush1.xpose.msra.mxu0 0.0
    %3336 = vmatprep.subr.mxu0 0.0
    %3337 = vmatpush1.xpose.msra.mxu0 0.0
    %3338 = vmatprep.subr.mxu0 0.0
    %3339 = vmatpush1.xpose.msra.mxu0 0.0
    %3340 = vmatprep.subr.mxu0 0.0
    %3341 = vmatpush1.xpose.msra.mxu0 0.0
    %3342 = vmatprep.subr.mxu0 0.0
    %3343 = vmatpush1.xpose.msra.mxu0 0.0
    %3344 = vmatprep.subr.mxu0 0.0
    %3345 = vmatpush1.xpose.msra.mxu0 0.0
    %3346 = vmatprep.subr.mxu0 0.0
    %3347 = vmatpush1.xpose.msra.mxu0 0.0
    %3348 = vmatprep.subr.mxu0 0.0
    %3349 = vmatpush1.xpose.msra.mxu0 0.0
    %3350 = vmatprep.subr.mxu0 0.0
    %3351 = vmatpush1.xpose.msra.mxu0 0.0
    %3352 = vmatprep.subr.mxu0 0.0
    %3353 = vmatpush1.xpose.msra.mxu0 0.0
    %3354 = vmatprep.subr.mxu0 0.0
    %3355 = vmatpush1.xpose.msra.mxu0 0.0
    %3356 = vmatprep.subr.mxu0 0.0
    %3357 = vmatpush1.xpose.msra.mxu0 0.0
    %3358 = vmatprep.subr.mxu0 0.0
    %3359 = vmatpush1.xpose.msra.mxu0 0.0
    %3360 = vmatprep.subr.mxu0 0.0
    %3361 = vmatpush1.xpose.msra.mxu0 0.0
    %3362 = vmatprep.subr.mxu0 0.0
    %3363 = vmatpush1.xpose.msra.mxu0 0.0
    %3364 = vmatprep.mubr.f32.mxu0 0.0
    %3365 = vmatmul.mubr.f32.gmra.mrb[0].mxu0 %v3296
    %v3366 = vpop.f32.mrb[0].mxu0
    %v3367 = vadd.f32 0.0, %v3366
    %v3368 = vpop.f32.mrb[0].mxu0
    %3369 = vmatprep.mubr.f32.mxu0 0.0
    %3370 = vmatmul.mubr.f32.gmra.mrb[0].mxu0 %v3298
    %v3371 = vpop.f32.mrb[0].mxu0
    %v3372 = vadd.f32 0.0, %v3371
    %v3373 = vpop.f32.mrb[0].mxu0
    %3374 = vdwg.mxu0
    %3375 = vrot.lane.b32.xlu0 %v203, 104
    %v3376 = vpop.permute.xlu0 %3375
    %3377 = vrot.lane.b32.xlu0 %v208, 104
    %v3378 = vpop.permute.xlu0 %3377
    %v3379 = vsel %vm414, %v3376, 0
    %v3381 = vsel %vm414, %v3378, 0
    %3383 = vmatprep.subr.mxu0 0.0
    %3384 = vmatpush1.xpose.msra.mxu0 %v509
    %3385 = vmatprep.subr.mxu0 0.0
    %3386 = vmatpush1.xpose.msra.mxu0 %v512
    %3387 = vmatprep.subr.mxu0 0.0
    %3388 = vmatpush1.xpose.msra.mxu0 0.0
    %3389 = vmatprep.subr.mxu0 0.0
    %3390 = vmatpush1.xpose.msra.mxu0 0.0
    %3391 = vmatprep.subr.mxu0 0.0
    %3392 = vmatpush1.xpose.msra.mxu0 0.0
    %3393 = vmatprep.subr.mxu0 0.0
    %3394 = vmatpush1.xpose.msra.mxu0 0.0
    %3395 = vmatprep.subr.mxu0 0.0
    %3396 = vmatpush1.xpose.msra.mxu0 0.0
    %3397 = vmatprep.subr.mxu0 0.0
    %3398 = vmatpush1.xpose.msra.mxu0 0.0
    %3399 = vmatprep.subr.mxu0 0.0
    %3400 = vmatpush1.xpose.msra.mxu0 0.0
    %3401 = vmatprep.subr.mxu0 0.0
    %3402 = vmatpush1.xpose.msra.mxu0 0.0
    %3403 = vmatprep.subr.mxu0 0.0
    %3404 = vmatpush1.xpose.msra.mxu0 0.0
    %3405 = vmatprep.subr.mxu0 0.0
    %3406 = vmatpush1.xpose.msra.mxu0 0.0
    %3407 = vmatprep.subr.mxu0 0.0
    %3408 = vmatpush1.xpose.msra.mxu0 0.0
    %3409 = vmatprep.subr.mxu0 0.0
    %3410 = vmatpush1.xpose.msra.mxu0 0.0
    %3411 = vmatprep.subr.mxu0 0.0
    %3412 = vmatpush1.xpose.msra.mxu0 0.0
    %3413 = vmatprep.subr.mxu0 0.0
    %3414 = vmatpush1.xpose.msra.mxu0 0.0
    %3415 = vmatprep.subr.mxu0 0.0
    %3416 = vmatpush1.xpose.msra.mxu0 0.0
    %3417 = vmatprep.subr.mxu0 0.0
    %3418 = vmatpush1.xpose.msra.mxu0 0.0
    %3419 = vmatprep.subr.mxu0 0.0
    %3420 = vmatpush1.xpose.msra.mxu0 0.0
    %3421 = vmatprep.subr.mxu0 0.0
    %3422 = vmatpush1.xpose.msra.mxu0 0.0
    %3423 = vmatprep.subr.mxu0 0.0
    %3424 = vmatpush1.xpose.msra.mxu0 0.0
    %3425 = vmatprep.subr.mxu0 0.0
    %3426 = vmatpush1.xpose.msra.mxu0 0.0
    %3427 = vmatprep.subr.mxu0 0.0
    %3428 = vmatpush1.xpose.msra.mxu0 0.0
    %3429 = vmatprep.subr.mxu0 0.0
    %3430 = vmatpush1.xpose.msra.mxu0 0.0
    %3431 = vmatprep.subr.mxu0 0.0
    %3432 = vmatpush1.xpose.msra.mxu0 0.0
    %3433 = vmatprep.subr.mxu0 0.0
    %3434 = vmatpush1.xpose.msra.mxu0 0.0
    %3435 = vmatprep.subr.mxu0 0.0
    %3436 = vmatpush1.xpose.msra.mxu0 0.0
    %3437 = vmatprep.subr.mxu0 0.0
    %3438 = vmatpush1.xpose.msra.mxu0 0.0
    %3439 = vmatprep.subr.mxu0 0.0
    %3440 = vmatpush1.xpose.msra.mxu0 0.0
    %3441 = vmatprep.subr.mxu0 0.0
    %3442 = vmatpush1.xpose.msra.mxu0 0.0
    %3443 = vmatprep.subr.mxu0 0.0
    %3444 = vmatpush1.xpose.msra.mxu0 0.0
    %3445 = vmatprep.subr.mxu0 0.0
    %3446 = vmatpush1.xpose.msra.mxu0 0.0
    %3447 = vmatprep.mubr.f32.mxu0 0.0
    %3448 = vmatmul.mubr.f32.gmra.mrb[0].mxu0 %v3379
    %v3449 = vpop.f32.mrb[0].mxu0
    %v3450 = vadd.f32 0.0, %v3449
    %v3451 = vpop.f32.mrb[0].mxu0
    %3452 = vmatprep.mubr.f32.mxu0 0.0
    %3453 = vmatmul.mubr.f32.gmra.mrb[0].mxu0 %v3381
    %v3454 = vpop.f32.mrb[0].mxu0
    %v3455 = vadd.f32 0.0, %v3454
    %v3456 = vpop.f32.mrb[0].mxu0
    %3457 = vdwg.mxu0
    %v3458 = vsel %vm589, %v3367, -inf
    %3459 = vmax.xlane.f32.xlu0 %v3458
    %v3460 = vpop.xlane.xlu0 %3459
    %v3461 = vsel %vm589, %v3372, -inf
    %3462 = vmax.xlane.f32.xlu0 %v3461
    %v3463 = vpop.xlane.xlu0 %3462
    %v3464 = vsel %vm589, %v3450, -inf
    %3465 = vmax.xlane.f32.xlu0 %v3464
    %v3466 = vpop.xlane.xlu0 %3465
    %v3467 = vsel %vm589, %v3455, -inf
    %3468 = vmax.xlane.f32.xlu0 %v3467
    %v3469 = vpop.xlane.xlu0 %3468
    %v3470 = vsub.f32 %v3367, %v3460
    %v3471 = vsub.f32 %v3372, %v3463
    %v3472 = vsub.f32 %v3450, %v3466
    %v3473 = vsub.f32 %v3455, %v3469
    %v3474 = vmul.f32 %v3470, 1.442695
    %v3475 = vpow.pop %v3474
    %v3476 = vmul.f32 %v3471, 1.442695
    %v3477 = vpow.pop %v3476
    %v3478 = vmul.f32 %v3472, 1.442695
    %v3479 = vpow.pop %v3478
    %v3480 = vmul.f32 %v3473, 1.442695
    %v3481 = vpow.pop %v3480
    %v3482 = vsel %vm589, %v3475, 0.0
    %3483 = vadd.xlane.f32.xlu0 %v3482
    %v3484 = vpop.xlane.xlu0 %3483
    %v3485 = vsel %vm589, %v3477, 0.0
    %3486 = vadd.xlane.f32.xlu0 %v3485
    %v3487 = vpop.xlane.xlu0 %3486
    %v3488 = vsel %vm589, %v3479, 0.0
    %3489 = vadd.xlane.f32.xlu0 %v3488
    %v3490 = vpop.xlane.xlu0 %3489
    %v3491 = vsel %vm589, %v3481, 0.0
    %3492 = vadd.xlane.f32.xlu0 %v3491
    %v3493 = vpop.xlane.xlu0 %3492
    %v3494 = vrcp.pop %v3484
    %v3495 = vrcp.pop %v3487
    %v3496 = vrcp.pop %v3490
    %v3497 = vrcp.pop %v3493
    %v3498 = vmul.f32 %v3475, %v3494
    %v3499 = vmul.f32 %v3477, %v3495
    %v3500 = vmul.f32 %v3479, %v3496
    %v3501 = vmul.f32 %v3481, %v3497
    %v3503 = vsel %vm589, %v3498, 0
    %v3506 = vsel %vm589, %v3499, 0
    %3508 = vmatprep.subr.mxu0 0.0
    %3509 = vmatpush1.msra.mxu0 %v385
    %3510 = vmatprep.subr.mxu0 0.0
    %3511 = vmatpush1.msra.mxu0 %v390
    %3512 = vmatprep.subr.mxu0 0.0
    %3513 = vmatpush1.msra.mxu0 0.0
    %3514 = vmatprep.subr.mxu0 0.0
    %3515 = vmatpush1.msra.mxu0 0.0
    %3516 = vmatprep.subr.mxu0 0.0
    %3517 = vmatpush1.msra.mxu0 0.0
    %3518 = vmatprep.subr.mxu0 0.0
    %3519 = vmatpush1.msra.mxu0 0.0
    %3520 = vmatprep.subr.mxu0 0.0
    %3521 = vmatpush1.msra.mxu0 0.0
    %3522 = vmatprep.subr.mxu0 0.0
    %3523 = vmatpush1.msra.mxu0 0.0
    %3524 = vmatprep.subr.mxu0 0.0
    %3525 = vmatpush1.msra.mxu0 0.0
    %3526 = vmatprep.subr.mxu0 0.0
    %3527 = vmatpush1.msra.mxu0 0.0
    %3528 = vmatprep.subr.mxu0 0.0
    %3529 = vmatpush1.msra.mxu0 0.0
    %3530 = vmatprep.subr.mxu0 0.0
    %3531 = vmatpush1.msra.mxu0 0.0
    %3532 = vmatprep.subr.mxu0 0.0
    %3533 = vmatpush1.msra.mxu0 0.0
    %3534 = vmatprep.subr.mxu0 0.0
    %3535 = vmatpush1.msra.mxu0 0.0
    %3536 = vmatprep.subr.mxu0 0.0
    %3537 = vmatpush1.msra.mxu0 0.0
    %3538 = vmatprep.subr.mxu0 0.0
    %3539 = vmatpush1.msra.mxu0 0.0
    %3540 = vmatprep.subr.mxu0 0.0
    %3541 = vmatpush1.msra.mxu0 0.0
    %3542 = vmatprep.subr.mxu0 0.0
    %3543 = vmatpush1.msra.mxu0 0.0
    %3544 = vmatprep.subr.mxu0 0.0
    %3545 = vmatpush1.msra.mxu0 0.0
    %3546 = vmatprep.subr.mxu0 0.0
    %3547 = vmatpush1.msra.mxu0 0.0
    %3548 = vmatprep.subr.mxu0 0.0
    %3549 = vmatpush1.msra.mxu0 0.0
    %3550 = vmatprep.subr.mxu0 0.0
    %3551 = vmatpush1.msra.mxu0 0.0
    %3552 = vmatprep.subr.mxu0 0.0
    %3553 = vmatpush1.msra.mxu0 0.0
    %3554 = vmatprep.subr.mxu0 0.0
    %3555 = vmatpush1.msra.mxu0 0.0
    %3556 = vmatprep.subr.mxu0 0.0
    %3557 = vmatpush1.msra.mxu0 0.0
    %3558 = vmatprep.subr.mxu0 0.0
    %3559 = vmatpush1.msra.mxu0 0.0
    %3560 = vmatprep.subr.mxu0 0.0
    %3561 = vmatpush1.msra.mxu0 0.0
    %3562 = vmatprep.subr.mxu0 0.0
    %3563 = vmatpush1.msra.mxu0 0.0
    %3564 = vmatprep.subr.mxu0 0.0
    %3565 = vmatpush1.msra.mxu0 0.0
    %3566 = vmatprep.subr.mxu0 0.0
    %3567 = vmatpush1.msra.mxu0 0.0
    %3568 = vmatprep.subr.mxu0 0.0
    %3569 = vmatpush1.msra.mxu0 0.0
    %3570 = vmatprep.subr.mxu0 0.0
    %3571 = vmatpush1.msra.mxu0 0.0
    %3572 = vmatprep.mubr.f32.mxu0 0.0
    %3573 = vmatmul.mubr.f32.gmra.mrb[0].mxu0 %v3503
    %v3574 = vpop.f32.mrb[0].mxu0
    %v3575 = vadd.f32 0.0, %v3574
    %v3576 = vpop.f32.mrb[0].mxu0
    %3577 = vmatprep.mubr.f32.mxu0 0.0
    %3578 = vmatmul.mubr.f32.gmra.mrb[0].mxu0 %v3506
    %v3579 = vpop.f32.mrb[0].mxu0
    %v3580 = vadd.f32 0.0, %v3579
    %v3581 = vpop.f32.mrb[0].mxu0
    %3582 = vdwg.mxu0
    %v3584 = vsel %vm589, %v3500, 0
    %v3587 = vsel %vm589, %v3501, 0
    %3589 = vmatprep.subr.mxu0 0.0
    %3590 = vmatpush1.msra.mxu0 %v395
    %3591 = vmatprep.subr.mxu0 0.0
    %3592 = vmatpush1.msra.mxu0 %v400
    %3593 = vmatprep.subr.mxu0 0.0
    %3594 = vmatpush1.msra.mxu0 0.0
    %3595 = vmatprep.subr.mxu0 0.0
    %3596 = vmatpush1.msra.mxu0 0.0
    %3597 = vmatprep.subr.mxu0 0.0
    %3598 = vmatpush1.msra.mxu0 0.0
    %3599 = vmatprep.subr.mxu0 0.0
    %3600 = vmatpush1.msra.mxu0 0.0
    %3601 = vmatprep.subr.mxu0 0.0
    %3602 = vmatpush1.msra.mxu0 0.0
    %3603 = vmatprep.subr.mxu0 0.0
    %3604 = vmatpush1.msra.mxu0 0.0
    %3605 = vmatprep.subr.mxu0 0.0
    %3606 = vmatpush1.msra.mxu0 0.0
    %3607 = vmatprep.subr.mxu0 0.0
    %3608 = vmatpush1.msra.mxu0 0.0
    %3609 = vmatprep.subr.mxu0 0.0
    %3610 = vmatpush1.msra.mxu0 0.0
    %3611 = vmatprep.subr.mxu0 0.0
    %3612 = vmatpush1.msra.mxu0 0.0
    %3613 = vmatprep.subr.mxu0 0.0
    %3614 = vmatpush1.msra.mxu0 0.0
    %3615 = vmatprep.subr.mxu0 0.0
    %3616 = vmatpush1.msra.mxu0 0.0
    %3617 = vmatprep.subr.mxu0 0.0
    %3618 = vmatpush1.msra.mxu0 0.0
    %3619 = vmatprep.subr.mxu0 0.0
    %3620 = vmatpush1.msra.mxu0 0.0
    %3621 = vmatprep.subr.mxu0 0.0
    %3622 = vmatpush1.msra.mxu0 0.0
    %3623 = vmatprep.subr.mxu0 0.0
    %3624 = vmatpush1.msra.mxu0 0.0
    %3625 = vmatprep.subr.mxu0 0.0
    %3626 = vmatpush1.msra.mxu0 0.0
    %3627 = vmatprep.subr.mxu0 0.0
    %3628 = vmatpush1.msra.mxu0 0.0
    %3629 = vmatprep.subr.mxu0 0.0
    %3630 = vmatpush1.msra.mxu0 0.0
    %3631 = vmatprep.subr.mxu0 0.0
    %3632 = vmatpush1.msra.mxu0 0.0
    %3633 = vmatprep.subr.mxu0 0.0
    %3634 = vmatpush1.msra.mxu0 0.0
    %3635 = vmatprep.subr.mxu0 0.0
    %3636 = vmatpush1.msra.mxu0 0.0
    %3637 = vmatprep.subr.mxu0 0.0
    %3638 = vmatpush1.msra.mxu0 0.0
    %3639 = vmatprep.subr.mxu0 0.0
    %3640 = vmatpush1.msra.mxu0 0.0
    %3641 = vmatprep.subr.mxu0 0.0
    %3642 = vmatpush1.msra.mxu0 0.0
    %3643 = vmatprep.subr.mxu0 0.0
    %3644 = vmatpush1.msra.mxu0 0.0
    %3645 = vmatprep.subr.mxu0 0.0
    %3646 = vmatpush1.msra.mxu0 0.0
    %3647 = vmatprep.subr.mxu0 0.0
    %3648 = vmatpush1.msra.mxu0 0.0
    %3649 = vmatprep.subr.mxu0 0.0
    %3650 = vmatpush1.msra.mxu0 0.0
    %3651 = vmatprep.subr.mxu0 0.0
    %3652 = vmatpush1.msra.mxu0 0.0
    %3653 = vmatprep.mubr.f32.mxu0 0.0
    %3654 = vmatmul.mubr.f32.gmra.mrb[0].mxu0 %v3584
    %v3655 = vpop.f32.mrb[0].mxu0
    %v3656 = vadd.f32 0.0, %v3655
    %v3657 = vpop.f32.mrb[0].mxu0
    %3658 = vmatprep.mubr.f32.mxu0 0.0
    %3659 = vmatmul.mubr.f32.gmra.mrb[0].mxu0 %v3587
    %v3660 = vpop.f32.mrb[0].mxu0
    %v3661 = vadd.f32 0.0, %v3660
    %v3662 = vpop.f32.mrb[0].mxu0
    %3663 = vdwg.mxu0
    %s3664 = scalar_lea.vmem %s7, 24
    %v3665 = vld [vmem:[%s3664] sm:$0xf]
    %v3667 = vsel %vm414, %v3575, 0
    %v3670 = vsel %vm414, %v3580, 0
    %v3673 = vsel %vm414, %v3656, 0
    %v3676 = vsel %vm414, %v3661, 0
    %v3679 = vsel %vm809, %v3665, 0
    %3681 = vmatprep.subr.mxu0 0.0
    %3682 = vmatpush1.msra.mxu0 %v3679
    %3683 = vmatprep.subr.mxu0 0.0
    %3684 = vmatpush1.msra.mxu0 0.0
    %3685 = vmatprep.subr.mxu0 0.0
    %3686 = vmatpush1.msra.mxu0 0.0
    %3687 = vmatprep.subr.mxu0 0.0
    %3688 = vmatpush1.msra.mxu0 0.0
    %3689 = vmatprep.subr.mxu0 0.0
    %3690 = vmatpush1.msra.mxu0 0.0
    %3691 = vmatprep.subr.mxu0 0.0
    %3692 = vmatpush1.msra.mxu0 0.0
    %3693 = vmatprep.subr.mxu0 0.0
    %3694 = vmatpush1.msra.mxu0 0.0
    %3695 = vmatprep.subr.mxu0 0.0
    %3696 = vmatpush1.msra.mxu0 0.0
    %3697 = vmatprep.subr.mxu0 0.0
    %3698 = vmatpush1.msra.mxu0 0.0
    %3699 = vmatprep.subr.mxu0 0.0
    %3700 = vmatpush1.msra.mxu0 0.0
    %3701 = vmatprep.subr.mxu0 0.0
    %3702 = vmatpush1.msra.mxu0 0.0
    %3703 = vmatprep.subr.mxu0 0.0
    %3704 = vmatpush1.msra.mxu0 0.0
    %3705 = vmatprep.subr.mxu0 0.0
    %3706 = vmatpush1.msra.mxu0 0.0
    %3707 = vmatprep.subr.mxu0 0.0
    %3708 = vmatpush1.msra.mxu0 0.0
    %3709 = vmatprep.subr.mxu0 0.0
    %3710 = vmatpush1.msra.mxu0 0.0
    %3711 = vmatprep.subr.mxu0 0.0
    %3712 = vmatpush1.msra.mxu0 0.0
    %3713 = vmatprep.subr.mxu0 0.0
    %3714 = vmatpush1.msra.mxu0 0.0
    %3715 = vmatprep.subr.mxu0 0.0
    %3716 = vmatpush1.msra.mxu0 0.0
    %3717 = vmatprep.subr.mxu0 0.0
    %3718 = vmatpush1.msra.mxu0 0.0
    %3719 = vmatprep.subr.mxu0 0.0
    %3720 = vmatpush1.msra.mxu0 0.0
    %3721 = vmatprep.subr.mxu0 0.0
    %3722 = vmatpush1.msra.mxu0 0.0
    %3723 = vmatprep.subr.mxu0 0.0
    %3724 = vmatpush1.msra.mxu0 0.0
    %3725 = vmatprep.subr.mxu0 0.0
    %3726 = vmatpush1.msra.mxu0 0.0
    %3727 = vmatprep.subr.mxu0 0.0
    %3728 = vmatpush1.msra.mxu0 0.0
    %3729 = vmatprep.subr.mxu0 0.0
    %3730 = vmatpush1.msra.mxu0 0.0
    %3731 = vmatprep.subr.mxu0 0.0
    %3732 = vmatpush1.msra.mxu0 0.0
    %3733 = vmatprep.subr.mxu0 0.0
    %3734 = vmatpush1.msra.mxu0 0.0
    %3735 = vmatprep.subr.mxu0 0.0
    %3736 = vmatpush1.msra.mxu0 0.0
    %3737 = vmatprep.subr.mxu0 0.0
    %3738 = vmatpush1.msra.mxu0 0.0
    %3739 = vmatprep.subr.mxu0 0.0
    %3740 = vmatpush1.msra.mxu0 0.0
    %3741 = vmatprep.subr.mxu0 0.0
    %3742 = vmatpush1.msra.mxu0 0.0
    %3743 = vmatprep.subr.mxu0 0.0
    %3744 = vmatpush1.msra.mxu0 0.0
    %3745 = vmatprep.mubr.f32.mxu0 0.0
    %3746 = vmatmul.mubr.f32.gmra.mrb[0].mxu0 %v3667
    %v3747 = vpop.f32.mrb[0].mxu0
    %v3748 = vadd.f32 0.0, %v3747
    %v3749 = vpop.f32.mrb[0].mxu0
    %3750 = vmatprep.mubr.f32.mxu0 0.0
    %3751 = vmatmul.mubr.f32.gmra.mrb[0].mxu0 %v3670
    %v3752 = vpop.f32.mrb[0].mxu0
    %v3753 = vadd.f32 0.0, %v3752
    %v3754 = vpop.f32.mrb[0].mxu0
    %3755 = vmatprep.mubr.f32.mxu0 0.0
    %3756 = vmatmul.mubr.f32.gmra.mrb[0].mxu0 %v3673
    %v3757 = vpop.f32.mrb[0].mxu0
    %v3758 = vadd.f32 0.0, %v3757
    %v3759 = vpop.f32.mrb[0].mxu0
    %3760 = vmatprep.mubr.f32.mxu0 0.0
    %3761 = vmatmul.mubr.f32.gmra.mrb[0].mxu0 %v3676
    %v3762 = vpop.f32.mrb[0].mxu0
    %v3763 = vadd.f32 0.0, %v3762
    %v3764 = vpop.f32.mrb[0].mxu0
    %3765 = vdwg.mxu0
    %v3766 = vadd.f32 %v3288, %v3748
    %v3767 = vadd.f32 %v3289, %v3753
    %v3768 = vadd.f32 %v3290, %v3758
    %v3769 = vadd.f32 %v3291, %v3763
    %3770 = vrot.lane.b32.xlu0 %v193, 100
    %v3771 = vpop.permute.xlu0 %3770
    %3772 = vrot.lane.b32.xlu0 %v198, 100
    %v3773 = vpop.permute.xlu0 %3772
    %v3774 = vsel %vm414, %v3771, 0
    %v3776 = vsel %vm414, %v3773, 0
    %3778 = vmatprep.subr.mxu0 0.0
    %3779 = vmatpush1.xpose.msra.mxu0 %v422
    %3780 = vmatprep.subr.mxu0 0.0
    %3781 = vmatpush1.xpose.msra.mxu0 %v425
    %3782 = vmatprep.subr.mxu0 0.0
    %3783 = vmatpush1.xpose.msra.mxu0 0.0
    %3784 = vmatprep.subr.mxu0 0.0
    %3785 = vmatpush1.xpose.msra.mxu0 0.0
    %3786 = vmatprep.subr.mxu0 0.0
    %3787 = vmatpush1.xpose.msra.mxu0 0.0
    %3788 = vmatprep.subr.mxu0 0.0
    %3789 = vmatpush1.xpose.msra.mxu0 0.0
    %3790 = vmatprep.subr.mxu0 0.0
    %3791 = vmatpush1.xpose.msra.mxu0 0.0
    %3792 = vmatprep.subr.mxu0 0.0
    %3793 = vmatpush1.xpose.msra.mxu0 0.0
    %3794 = vmatprep.subr.mxu0 0.0
    %3795 = vmatpush1.xpose.msra.mxu0 0.0
    %3796 = vmatprep.subr.mxu0 0.0
    %3797 = vmatpush1.xpose.msra.mxu0 0.0
    %3798 = vmatprep.subr.mxu0 0.0
    %3799 = vmatpush1.xpose.msra.mxu0 0.0
    %3800 = vmatprep.subr.mxu0 0.0
    %3801 = vmatpush1.xpose.msra.mxu0 0.0
    %3802 = vmatprep.subr.mxu0 0.0
    %3803 = vmatpush1.xpose.msra.mxu0 0.0
    %3804 = vmatprep.subr.mxu0 0.0
    %3805 = vmatpush1.xpose.msra.mxu0 0.0
    %3806 = vmatprep.subr.mxu0 0.0
    %3807 = vmatpush1.xpose.msra.mxu0 0.0
    %3808 = vmatprep.subr.mxu0 0.0
    %3809 = vmatpush1.xpose.msra.mxu0 0.0
    %3810 = vmatprep.subr.mxu0 0.0
    %3811 = vmatpush1.xpose.msra.mxu0 0.0
    %3812 = vmatprep.subr.mxu0 0.0
    %3813 = vmatpush1.xpose.msra.mxu0 0.0
    %3814 = vmatprep.subr.mxu0 0.0
    %3815 = vmatpush1.xpose.msra.mxu0 0.0
    %3816 = vmatprep.subr.mxu0 0.0
    %3817 = vmatpush1.xpose.msra.mxu0 0.0
    %3818 = vmatprep.subr.mxu0 0.0
    %3819 = vmatpush1.xpose.msra.mxu0 0.0
    %3820 = vmatprep.subr.mxu0 0.0
    %3821 = vmatpush1.xpose.msra.mxu0 0.0
    %3822 = vmatprep.subr.mxu0 0.0
    %3823 = vmatpush1.xpose.msra.mxu0 0.0
    %3824 = vmatprep.subr.mxu0 0.0
    %3825 = vmatpush1.xpose.msra.mxu0 0.0
    %3826 = vmatprep.subr.mxu0 0.0
    %3827 = vmatpush1.xpose.msra.mxu0 0.0
    %3828 = vmatprep.subr.mxu0 0.0
    %3829 = vmatpush1.xpose.msra.mxu0 0.0
    %3830 = vmatprep.subr.mxu0 0.0
    %3831 = vmatpush1.xpose.msra.mxu0 0.0
    %3832 = vmatprep.subr.mxu0 0.0
    %3833 = vmatpush1.xpose.msra.mxu0 0.0
    %3834 = vmatprep.subr.mxu0 0.0
    %3835 = vmatpush1.xpose.msra.mxu0 0.0
    %3836 = vmatprep.subr.mxu0 0.0
    %3837 = vmatpush1.xpose.msra.mxu0 0.0
    %3838 = vmatprep.subr.mxu0 0.0
    %3839 = vmatpush1.xpose.msra.mxu0 0.0
    %3840 = vmatprep.subr.mxu0 0.0
    %3841 = vmatpush1.xpose.msra.mxu0 0.0
    %3842 = vmatprep.mubr.f32.mxu0 0.0
    %3843 = vmatmul.mubr.f32.gmra.mrb[0].mxu0 %v3774
    %v3844 = vpop.f32.mrb[0].mxu0
    %v3845 = vadd.f32 0.0, %v3844
    %v3846 = vpop.f32.mrb[0].mxu0
    %3847 = vmatprep.mubr.f32.mxu0 0.0
    %3848 = vmatmul.mubr.f32.gmra.mrb[0].mxu0 %v3776
    %v3849 = vpop.f32.mrb[0].mxu0
    %v3850 = vadd.f32 0.0, %v3849
    %v3851 = vpop.f32.mrb[0].mxu0
    %3852 = vdwg.mxu0
    %3853 = vrot.lane.b32.xlu0 %v203, 100
    %v3854 = vpop.permute.xlu0 %3853
    %3855 = vrot.lane.b32.xlu0 %v208, 100
    %v3856 = vpop.permute.xlu0 %3855
    %v3857 = vsel %vm414, %v3854, 0
    %v3859 = vsel %vm414, %v3856, 0
    %3861 = vmatprep.subr.mxu0 0.0
    %3862 = vmatpush1.xpose.msra.mxu0 %v509
    %3863 = vmatprep.subr.mxu0 0.0
    %3864 = vmatpush1.xpose.msra.mxu0 %v512
    %3865 = vmatprep.subr.mxu0 0.0
    %3866 = vmatpush1.xpose.msra.mxu0 0.0
    %3867 = vmatprep.subr.mxu0 0.0
    %3868 = vmatpush1.xpose.msra.mxu0 0.0
    %3869 = vmatprep.subr.mxu0 0.0
    %3870 = vmatpush1.xpose.msra.mxu0 0.0
    %3871 = vmatprep.subr.mxu0 0.0
    %3872 = vmatpush1.xpose.msra.mxu0 0.0
    %3873 = vmatprep.subr.mxu0 0.0
    %3874 = vmatpush1.xpose.msra.mxu0 0.0
    %3875 = vmatprep.subr.mxu0 0.0
    %3876 = vmatpush1.xpose.msra.mxu0 0.0
    %3877 = vmatprep.subr.mxu0 0.0
    %3878 = vmatpush1.xpose.msra.mxu0 0.0
    %3879 = vmatprep.subr.mxu0 0.0
    %3880 = vmatpush1.xpose.msra.mxu0 0.0
    %3881 = vmatprep.subr.mxu0 0.0
    %3882 = vmatpush1.xpose.msra.mxu0 0.0
    %3883 = vmatprep.subr.mxu0 0.0
    %3884 = vmatpush1.xpose.msra.mxu0 0.0
    %3885 = vmatprep.subr.mxu0 0.0
    %3886 = vmatpush1.xpose.msra.mxu0 0.0
    %3887 = vmatprep.subr.mxu0 0.0
    %3888 = vmatpush1.xpose.msra.mxu0 0.0
    %3889 = vmatprep.subr.mxu0 0.0
    %3890 = vmatpush1.xpose.msra.mxu0 0.0
    %3891 = vmatprep.subr.mxu0 0.0
    %3892 = vmatpush1.xpose.msra.mxu0 0.0
    %3893 = vmatprep.subr.mxu0 0.0
    %3894 = vmatpush1.xpose.msra.mxu0 0.0
    %3895 = vmatprep.subr.mxu0 0.0
    %3896 = vmatpush1.xpose.msra.mxu0 0.0
    %3897 = vmatprep.subr.mxu0 0.0
    %3898 = vmatpush1.xpose.msra.mxu0 0.0
    %3899 = vmatprep.subr.mxu0 0.0
    %3900 = vmatpush1.xpose.msra.mxu0 0.0
    %3901 = vmatprep.subr.mxu0 0.0
    %3902 = vmatpush1.xpose.msra.mxu0 0.0
    %3903 = vmatprep.subr.mxu0 0.0
    %3904 = vmatpush1.xpose.msra.mxu0 0.0
    %3905 = vmatprep.subr.mxu0 0.0
    %3906 = vmatpush1.xpose.msra.mxu0 0.0
    %3907 = vmatprep.subr.mxu0 0.0
    %3908 = vmatpush1.xpose.msra.mxu0 0.0
    %3909 = vmatprep.subr.mxu0 0.0
    %3910 = vmatpush1.xpose.msra.mxu0 0.0
    %3911 = vmatprep.subr.mxu0 0.0
    %3912 = vmatpush1.xpose.msra.mxu0 0.0
    %3913 = vmatprep.subr.mxu0 0.0
    %3914 = vmatpush1.xpose.msra.mxu0 0.0
    %3915 = vmatprep.subr.mxu0 0.0
    %3916 = vmatpush1.xpose.msra.mxu0 0.0
    %3917 = vmatprep.subr.mxu0 0.0
    %3918 = vmatpush1.xpose.msra.mxu0 0.0
    %3919 = vmatprep.subr.mxu0 0.0
    %3920 = vmatpush1.xpose.msra.mxu0 0.0
    %3921 = vmatprep.subr.mxu0 0.0
    %3922 = vmatpush1.xpose.msra.mxu0 0.0
    %3923 = vmatprep.subr.mxu0 0.0
    %3924 = vmatpush1.xpose.msra.mxu0 0.0
    %3925 = vmatprep.mubr.f32.mxu0 0.0
    %3926 = vmatmul.mubr.f32.gmra.mrb[0].mxu0 %v3857
    %v3927 = vpop.f32.mrb[0].mxu0
    %v3928 = vadd.f32 0.0, %v3927
    %v3929 = vpop.f32.mrb[0].mxu0
    %3930 = vmatprep.mubr.f32.mxu0 0.0
    %3931 = vmatmul.mubr.f32.gmra.mrb[0].mxu0 %v3859
    %v3932 = vpop.f32.mrb[0].mxu0
    %v3933 = vadd.f32 0.0, %v3932
    %v3934 = vpop.f32.mrb[0].mxu0
    %3935 = vdwg.mxu0
    %v3936 = vsel %vm589, %v3845, -inf
    %3937 = vmax.xlane.f32.xlu0 %v3936
    %v3938 = vpop.xlane.xlu0 %3937
    %v3939 = vsel %vm589, %v3850, -inf
    %3940 = vmax.xlane.f32.xlu0 %v3939
    %v3941 = vpop.xlane.xlu0 %3940
    %v3942 = vsel %vm589, %v3928, -inf
    %3943 = vmax.xlane.f32.xlu0 %v3942
    %v3944 = vpop.xlane.xlu0 %3943
    %v3945 = vsel %vm589, %v3933, -inf
    %3946 = vmax.xlane.f32.xlu0 %v3945
    %v3947 = vpop.xlane.xlu0 %3946
    %v3948 = vsub.f32 %v3845, %v3938
    %v3949 = vsub.f32 %v3850, %v3941
    %v3950 = vsub.f32 %v3928, %v3944
    %v3951 = vsub.f32 %v3933, %v3947
    %v3952 = vmul.f32 %v3948, 1.442695
    %v3953 = vpow.pop %v3952
    %v3954 = vmul.f32 %v3949, 1.442695
    %v3955 = vpow.pop %v3954
    %v3956 = vmul.f32 %v3950, 1.442695
    %v3957 = vpow.pop %v3956
    %v3958 = vmul.f32 %v3951, 1.442695
    %v3959 = vpow.pop %v3958
    %v3960 = vsel %vm589, %v3953, 0.0
    %3961 = vadd.xlane.f32.xlu0 %v3960
    %v3962 = vpop.xlane.xlu0 %3961
    %v3963 = vsel %vm589, %v3955, 0.0
    %3964 = vadd.xlane.f32.xlu0 %v3963
    %v3965 = vpop.xlane.xlu0 %3964
    %v3966 = vsel %vm589, %v3957, 0.0
    %3967 = vadd.xlane.f32.xlu0 %v3966
    %v3968 = vpop.xlane.xlu0 %3967
    %v3969 = vsel %vm589, %v3959, 0.0
    %3970 = vadd.xlane.f32.xlu0 %v3969
    %v3971 = vpop.xlane.xlu0 %3970
    %v3972 = vrcp.pop %v3962
    %v3973 = vrcp.pop %v3965
    %v3974 = vrcp.pop %v3968
    %v3975 = vrcp.pop %v3971
    %v3976 = vmul.f32 %v3953, %v3972
    %v3977 = vmul.f32 %v3955, %v3973
    %v3978 = vmul.f32 %v3957, %v3974
    %v3979 = vmul.f32 %v3959, %v3975
    %v3981 = vsel %vm589, %v3976, 0
    %v3984 = vsel %vm589, %v3977, 0
    %3986 = vmatprep.subr.mxu0 0.0
    %3987 = vmatpush1.msra.mxu0 %v385
    %3988 = vmatprep.subr.mxu0 0.0
    %3989 = vmatpush1.msra.mxu0 %v390
    %3990 = vmatprep.subr.mxu0 0.0
    %3991 = vmatpush1.msra.mxu0 0.0
    %3992 = vmatprep.subr.mxu0 0.0
    %3993 = vmatpush1.msra.mxu0 0.0
    %3994 = vmatprep.subr.mxu0 0.0
    %3995 = vmatpush1.msra.mxu0 0.0
    %3996 = vmatprep.subr.mxu0 0.0
    %3997 = vmatpush1.msra.mxu0 0.0
    %3998 = vmatprep.subr.mxu0 0.0
    %3999 = vmatpush1.msra.mxu0 0.0
    %4000 = vmatprep.subr.mxu0 0.0
    %4001 = vmatpush1.msra.mxu0 0.0
    %4002 = vmatprep.subr.mxu0 0.0
    %4003 = vmatpush1.msra.mxu0 0.0
    %4004 = vmatprep.subr.mxu0 0.0
    %4005 = vmatpush1.msra.mxu0 0.0
    %4006 = vmatprep.subr.mxu0 0.0
    %4007 = vmatpush1.msra.mxu0 0.0
    %4008 = vmatprep.subr.mxu0 0.0
    %4009 = vmatpush1.msra.mxu0 0.0
    %4010 = vmatprep.subr.mxu0 0.0
    %4011 = vmatpush1.msra.mxu0 0.0
    %4012 = vmatprep.subr.mxu0 0.0
    %4013 = vmatpush1.msra.mxu0 0.0
    %4014 = vmatprep.subr.mxu0 0.0
    %4015 = vmatpush1.msra.mxu0 0.0
    %4016 = vmatprep.subr.mxu0 0.0
    %4017 = vmatpush1.msra.mxu0 0.0
    %4018 = vmatprep.subr.mxu0 0.0
    %4019 = vmatpush1.msra.mxu0 0.0
    %4020 = vmatprep.subr.mxu0 0.0
    %4021 = vmatpush1.msra.mxu0 0.0
    %4022 = vmatprep.subr.mxu0 0.0
    %4023 = vmatpush1.msra.mxu0 0.0
    %4024 = vmatprep.subr.mxu0 0.0
    %4025 = vmatpush1.msra.mxu0 0.0
    %4026 = vmatprep.subr.mxu0 0.0
    %4027 = vmatpush1.msra.mxu0 0.0
    %4028 = vmatprep.subr.mxu0 0.0
    %4029 = vmatpush1.msra.mxu0 0.0
    %4030 = vmatprep.subr.mxu0 0.0
    %4031 = vmatpush1.msra.mxu0 0.0
    %4032 = vmatprep.subr.mxu0 0.0
    %4033 = vmatpush1.msra.mxu0 0.0
    %4034 = vmatprep.subr.mxu0 0.0
    %4035 = vmatpush1.msra.mxu0 0.0
    %4036 = vmatprep.subr.mxu0 0.0
    %4037 = vmatpush1.msra.mxu0 0.0
    %4038 = vmatprep.subr.mxu0 0.0
    %4039 = vmatpush1.msra.mxu0 0.0
    %4040 = vmatprep.subr.mxu0 0.0
    %4041 = vmatpush1.msra.mxu0 0.0
    %4042 = vmatprep.subr.mxu0 0.0
    %4043 = vmatpush1.msra.mxu0 0.0
    %4044 = vmatprep.subr.mxu0 0.0
    %4045 = vmatpush1.msra.mxu0 0.0
    %4046 = vmatprep.subr.mxu0 0.0
    %4047 = vmatpush1.msra.mxu0 0.0
    %4048 = vmatprep.subr.mxu0 0.0
    %4049 = vmatpush1.msra.mxu0 0.0
    %4050 = vmatprep.mubr.f32.mxu0 0.0
    %4051 = vmatmul.mubr.f32.gmra.mrb[0].mxu0 %v3981
    %v4052 = vpop.f32.mrb[0].mxu0
    %v4053 = vadd.f32 0.0, %v4052
    %v4054 = vpop.f32.mrb[0].mxu0
    %4055 = vmatprep.mubr.f32.mxu0 0.0
    %4056 = vmatmul.mubr.f32.gmra.mrb[0].mxu0 %v3984
    %v4057 = vpop.f32.mrb[0].mxu0
    %v4058 = vadd.f32 0.0, %v4057
    %v4059 = vpop.f32.mrb[0].mxu0
    %4060 = vdwg.mxu0
    %v4062 = vsel %vm589, %v3978, 0
    %v4065 = vsel %vm589, %v3979, 0
    %4067 = vmatprep.subr.mxu0 0.0
    %4068 = vmatpush1.msra.mxu0 %v395
    %4069 = vmatprep.subr.mxu0 0.0
    %4070 = vmatpush1.msra.mxu0 %v400
    %4071 = vmatprep.subr.mxu0 0.0
    %4072 = vmatpush1.msra.mxu0 0.0
    %4073 = vmatprep.subr.mxu0 0.0
    %4074 = vmatpush1.msra.mxu0 0.0
    %4075 = vmatprep.subr.mxu0 0.0
    %4076 = vmatpush1.msra.mxu0 0.0
    %4077 = vmatprep.subr.mxu0 0.0
    %4078 = vmatpush1.msra.mxu0 0.0
    %4079 = vmatprep.subr.mxu0 0.0
    %4080 = vmatpush1.msra.mxu0 0.0
    %4081 = vmatprep.subr.mxu0 0.0
    %4082 = vmatpush1.msra.mxu0 0.0
    %4083 = vmatprep.subr.mxu0 0.0
    %4084 = vmatpush1.msra.mxu0 0.0
    %4085 = vmatprep.subr.mxu0 0.0
    %4086 = vmatpush1.msra.mxu0 0.0
    %4087 = vmatprep.subr.mxu0 0.0
    %4088 = vmatpush1.msra.mxu0 0.0
    %4089 = vmatprep.subr.mxu0 0.0
    %4090 = vmatpush1.msra.mxu0 0.0
    %4091 = vmatprep.subr.mxu0 0.0
    %4092 = vmatpush1.msra.mxu0 0.0
    %4093 = vmatprep.subr.mxu0 0.0
    %4094 = vmatpush1.msra.mxu0 0.0
    %4095 = vmatprep.subr.mxu0 0.0
    %4096 = vmatpush1.msra.mxu0 0.0
    %4097 = vmatprep.subr.mxu0 0.0
    %4098 = vmatpush1.msra.mxu0 0.0
    %4099 = vmatprep.subr.mxu0 0.0
    %4100 = vmatpush1.msra.mxu0 0.0
    %4101 = vmatprep.subr.mxu0 0.0
    %4102 = vmatpush1.msra.mxu0 0.0
    %4103 = vmatprep.subr.mxu0 0.0
    %4104 = vmatpush1.msra.mxu0 0.0
    %4105 = vmatprep.subr.mxu0 0.0
    %4106 = vmatpush1.msra.mxu0 0.0
    %4107 = vmatprep.subr.mxu0 0.0
    %4108 = vmatpush1.msra.mxu0 0.0
    %4109 = vmatprep.subr.mxu0 0.0
    %4110 = vmatpush1.msra.mxu0 0.0
    %4111 = vmatprep.subr.mxu0 0.0
    %4112 = vmatpush1.msra.mxu0 0.0
    %4113 = vmatprep.subr.mxu0 0.0
    %4114 = vmatpush1.msra.mxu0 0.0
    %4115 = vmatprep.subr.mxu0 0.0
    %4116 = vmatpush1.msra.mxu0 0.0
    %4117 = vmatprep.subr.mxu0 0.0
    %4118 = vmatpush1.msra.mxu0 0.0
    %4119 = vmatprep.subr.mxu0 0.0
    %4120 = vmatpush1.msra.mxu0 0.0
    %4121 = vmatprep.subr.mxu0 0.0
    %4122 = vmatpush1.msra.mxu0 0.0
    %4123 = vmatprep.subr.mxu0 0.0
    %4124 = vmatpush1.msra.mxu0 0.0
    %4125 = vmatprep.subr.mxu0 0.0
    %4126 = vmatpush1.msra.mxu0 0.0
    %4127 = vmatprep.subr.mxu0 0.0
    %4128 = vmatpush1.msra.mxu0 0.0
    %4129 = vmatprep.subr.mxu0 0.0
    %4130 = vmatpush1.msra.mxu0 0.0
    %4131 = vmatprep.mubr.f32.mxu0 0.0
    %4132 = vmatmul.mubr.f32.gmra.mrb[0].mxu0 %v4062
    %v4133 = vpop.f32.mrb[0].mxu0
    %v4134 = vadd.f32 0.0, %v4133
    %v4135 = vpop.f32.mrb[0].mxu0
    %4136 = vmatprep.mubr.f32.mxu0 0.0
    %4137 = vmatmul.mubr.f32.gmra.mrb[0].mxu0 %v4065
    %v4138 = vpop.f32.mrb[0].mxu0
    %v4139 = vadd.f32 0.0, %v4138
    %v4140 = vpop.f32.mrb[0].mxu0
    %4141 = vdwg.mxu0
    %s4142 = scalar_lea.vmem %s7, 28
    %v4143 = vld [vmem:[%s4142] sm:$0xf]
    %v4145 = vsel %vm414, %v4053, 0
    %v4148 = vsel %vm414, %v4058, 0
    %v4151 = vsel %vm414, %v4134, 0
    %v4154 = vsel %vm414, %v4139, 0
    %v4157 = vsel %vm809, %v4143, 0
    %4159 = vmatprep.subr.mxu0 0.0
    %4160 = vmatpush1.msra.mxu0 %v4157
    %4161 = vmatprep.subr.mxu0 0.0
    %4162 = vmatpush1.msra.mxu0 0.0
    %4163 = vmatprep.subr.mxu0 0.0
    %4164 = vmatpush1.msra.mxu0 0.0
    %4165 = vmatprep.subr.mxu0 0.0
    %4166 = vmatpush1.msra.mxu0 0.0
    %4167 = vmatprep.subr.mxu0 0.0
    %4168 = vmatpush1.msra.mxu0 0.0
    %4169 = vmatprep.subr.mxu0 0.0
    %4170 = vmatpush1.msra.mxu0 0.0
    %4171 = vmatprep.subr.mxu0 0.0
    %4172 = vmatpush1.msra.mxu0 0.0
    %4173 = vmatprep.subr.mxu0 0.0
    %4174 = vmatpush1.msra.mxu0 0.0
    %4175 = vmatprep.subr.mxu0 0.0
    %4176 = vmatpush1.msra.mxu0 0.0
    %4177 = vmatprep.subr.mxu0 0.0
    %4178 = vmatpush1.msra.mxu0 0.0
    %4179 = vmatprep.subr.mxu0 0.0
    %4180 = vmatpush1.msra.mxu0 0.0
    %4181 = vmatprep.subr.mxu0 0.0
    %4182 = vmatpush1.msra.mxu0 0.0
    %4183 = vmatprep.subr.mxu0 0.0
    %4184 = vmatpush1.msra.mxu0 0.0
    %4185 = vmatprep.subr.mxu0 0.0
    %4186 = vmatpush1.msra.mxu0 0.0
    %4187 = vmatprep.subr.mxu0 0.0
    %4188 = vmatpush1.msra.mxu0 0.0
    %4189 = vmatprep.subr.mxu0 0.0
    %4190 = vmatpush1.msra.mxu0 0.0
    %4191 = vmatprep.subr.mxu0 0.0
    %4192 = vmatpush1.msra.mxu0 0.0
    %4193 = vmatprep.subr.mxu0 0.0
    %4194 = vmatpush1.msra.mxu0 0.0
    %4195 = vmatprep.subr.mxu0 0.0
    %4196 = vmatpush1.msra.mxu0 0.0
    %4197 = vmatprep.subr.mxu0 0.0
    %4198 = vmatpush1.msra.mxu0 0.0
    %4199 = vmatprep.subr.mxu0 0.0
    %4200 = vmatpush1.msra.mxu0 0.0
    %4201 = vmatprep.subr.mxu0 0.0
    %4202 = vmatpush1.msra.mxu0 0.0
    %4203 = vmatprep.subr.mxu0 0.0
    %4204 = vmatpush1.msra.mxu0 0.0
    %4205 = vmatprep.subr.mxu0 0.0
    %4206 = vmatpush1.msra.mxu0 0.0
    %4207 = vmatprep.subr.mxu0 0.0
    %4208 = vmatpush1.msra.mxu0 0.0
    %4209 = vmatprep.subr.mxu0 0.0
    %4210 = vmatpush1.msra.mxu0 0.0
    %4211 = vmatprep.subr.mxu0 0.0
    %4212 = vmatpush1.msra.mxu0 0.0
    %4213 = vmatprep.subr.mxu0 0.0
    %4214 = vmatpush1.msra.mxu0 0.0
    %4215 = vmatprep.subr.mxu0 0.0
    %4216 = vmatpush1.msra.mxu0 0.0
    %4217 = vmatprep.subr.mxu0 0.0
    %4218 = vmatpush1.msra.mxu0 0.0
    %4219 = vmatprep.subr.mxu0 0.0
    %4220 = vmatpush1.msra.mxu0 0.0
    %4221 = vmatprep.subr.mxu0 0.0
    %4222 = vmatpush1.msra.mxu0 0.0
    %4223 = vmatprep.mubr.f32.mxu0 0.0
    %4224 = vmatmul.mubr.f32.gmra.mrb[0].mxu0 %v4145
    %v4225 = vpop.f32.mrb[0].mxu0
    %v4226 = vadd.f32 0.0, %v4225
    %v4227 = vpop.f32.mrb[0].mxu0
    %4228 = vmatprep.mubr.f32.mxu0 0.0
    %4229 = vmatmul.mubr.f32.gmra.mrb[0].mxu0 %v4148
    %v4230 = vpop.f32.mrb[0].mxu0
    %v4231 = vadd.f32 0.0, %v4230
    %v4232 = vpop.f32.mrb[0].mxu0
    %4233 = vmatprep.mubr.f32.mxu0 0.0
    %4234 = vmatmul.mubr.f32.gmra.mrb[0].mxu0 %v4151
    %v4235 = vpop.f32.mrb[0].mxu0
    %v4236 = vadd.f32 0.0, %v4235
    %v4237 = vpop.f32.mrb[0].mxu0
    %4238 = vmatprep.mubr.f32.mxu0 0.0
    %4239 = vmatmul.mubr.f32.gmra.mrb[0].mxu0 %v4154
    %v4240 = vpop.f32.mrb[0].mxu0
    %v4241 = vadd.f32 0.0, %v4240
    %v4242 = vpop.f32.mrb[0].mxu0
    %4243 = vdwg.mxu0
    %v4244 = vadd.f32 %v3766, %v4226
    %v4245 = vadd.f32 %v3767, %v4231
    %v4246 = vadd.f32 %v3768, %v4236
    %v4247 = vadd.f32 %v3769, %v4241
    %v4248 = vsel %vm49, %v4244, 0.0
    %4249 = vadd.xlane.f32.xlu0 %v4248
    %v4250 = vpop.xlane.xlu0 %4249
    %v4251 = vsel %vm49, %v4245, 0.0
    %4252 = vadd.xlane.f32.xlu0 %v4251
    %v4253 = vpop.xlane.xlu0 %4252
    %v4254 = vsel %vm49, %v4246, 0.0
    %4255 = vadd.xlane.f32.xlu0 %v4254
    %v4256 = vpop.xlane.xlu0 %4255
    %v4257 = vsel %vm49, %v4247, 0.0
    %4258 = vadd.xlane.f32.xlu0 %v4257
    %v4259 = vpop.xlane.xlu0 %4258
    %v4260 = vmul.f32 %v4250, %v62
    %v4261 = vmul.f32 %v4253, %v62
    %v4262 = vmul.f32 %v4256, %v62
    %v4263 = vmul.f32 %v4259, %v62
    %v4264 = vsub.f32 %v4244, %v4260
    %v4265 = vsub.f32 %v4245, %v4261
    %v4266 = vsub.f32 %v4246, %v4262
    %v4267 = vsub.f32 %v4247, %v4263
    %v4268 = vmul.f32 %v4264, %v4264
    %v4269 = vmul.f32 %v4265, %v4265
    %v4270 = vmul.f32 %v4266, %v4266
    %v4271 = vmul.f32 %v4267, %v4267
    %v4272 = vsel %vm49, %v4268, 0.0
    %4273 = vadd.xlane.f32.xlu0 %v4272
    %v4274 = vpop.xlane.xlu0 %4273
    %v4275 = vsel %vm49, %v4269, 0.0
    %4276 = vadd.xlane.f32.xlu0 %v4275
    %v4277 = vpop.xlane.xlu0 %4276
    %v4278 = vsel %vm49, %v4270, 0.0
    %4279 = vadd.xlane.f32.xlu0 %v4278
    %v4280 = vpop.xlane.xlu0 %4279
    %v4281 = vsel %vm49, %v4271, 0.0
    %4282 = vadd.xlane.f32.xlu0 %v4281
    %v4283 = vpop.xlane.xlu0 %4282
    %v4284 = vmul.f32 %v4274, %v62
    %v4285 = vmul.f32 %v4277, %v62
    %v4286 = vmul.f32 %v4280, %v62
    %v4287 = vmul.f32 %v4283, %v62
    %v4288 = vadd.f32 %v4284, 1e-05
    %v4289 = vadd.f32 %v4285, 1e-05
    %v4290 = vadd.f32 %v4286, 1e-05
    %v4291 = vadd.f32 %v4287, 1e-05
    %v4292 = vrsqrt.pop %v4288
    %v4293 = vrsqrt.pop %v4289
    %v4294 = vrsqrt.pop %v4290
    %v4295 = vrsqrt.pop %v4291
    %v4296 = vmul.f32 %v4264, %v4292
    %v4297 = vmul.f32 %v4265, %v4293
    %v4298 = vmul.f32 %v4266, %v4294
    %v4299 = vmul.f32 %v4267, %v4295
    %v4300 = vld [vmem:[%s9] sm:$0xff]
    %v4301 = vld [vmem:[%s9 + $0x8] sm:$0xff]
    %v4302 = vld [vmem:[%s9 + $0x10] sm:$0xff]
    %v4303 = vld [vmem:[%s9 + $0x18] sm:$0xff]
    %v4304 = vld [vmem:[%s10] sm:$0x1]
    %v4306 = vlaneseq
    %v4307 = vshrl.u32 %v4306, 7
    %v4308 = vsub.s32 0, %v4307
    %v4309 = vrot.slane %v4304, %v4308
    %v4312 = vsel %vm49, %v4296, 0
    %v4315 = vsel %vm49, %v4297, 0
    %v4318 = vsel %vm49, %v4298, 0
    %v4321 = vsel %vm49, %v4299, 0
    %4323 = vmatprep.subr.mxu0 0.0
    %4324 = vmatpush1.msra.mxu0 %v4300
    %4325 = vmatprep.subr.mxu0 0.0
    %4326 = vmatpush1.msra.mxu0 %v4301
    %4327 = vmatprep.subr.mxu0 0.0
    %4328 = vmatpush1.msra.mxu0 %v4302
    %4329 = vmatprep.subr.mxu0 0.0
    %4330 = vmatpush1.msra.mxu0 %v4303
    %4331 = vmatprep.subr.mxu0 0.0
    %4332 = vmatpush1.msra.mxu0 0.0
    %4333 = vmatprep.subr.mxu0 0.0
    %4334 = vmatpush1.msra.mxu0 0.0
    %4335 = vmatprep.subr.mxu0 0.0
    %4336 = vmatpush1.msra.mxu0 0.0
    %4337 = vmatprep.subr.mxu0 0.0
    %4338 = vmatpush1.msra.mxu0 0.0
    %4339 = vmatprep.subr.mxu0 0.0
    %4340 = vmatpush1.msra.mxu0 0.0
    %4341 = vmatprep.subr.mxu0 0.0
    %4342 = vmatpush1.msra.mxu0 0.0
    %4343 = vmatprep.subr.mxu0 0.0
    %4344 = vmatpush1.msra.mxu0 0.0
    %4345 = vmatprep.subr.mxu0 0.0
    %4346 = vmatpush1.msra.mxu0 0.0
    %4347 = vmatprep.subr.mxu0 0.0
    %4348 = vmatpush1.msra.mxu0 0.0
    %4349 = vmatprep.subr.mxu0 0.0
    %4350 = vmatpush1.msra.mxu0 0.0
    %4351 = vmatprep.subr.mxu0 0.0
    %4352 = vmatpush1.msra.mxu0 0.0
    %4353 = vmatprep.subr.mxu0 0.0
    %4354 = vmatpush1.msra.mxu0 0.0
    %4355 = vmatprep.subr.mxu0 0.0
    %4356 = vmatpush1.msra.mxu0 0.0
    %4357 = vmatprep.subr.mxu0 0.0
    %4358 = vmatpush1.msra.mxu0 0.0
    %4359 = vmatprep.subr.mxu0 0.0
    %4360 = vmatpush1.msra.mxu0 0.0
    %4361 = vmatprep.subr.mxu0 0.0
    %4362 = vmatpush1.msra.mxu0 0.0
    %4363 = vmatprep.subr.mxu0 0.0
    %4364 = vmatpush1.msra.mxu0 0.0
    %4365 = vmatprep.subr.mxu0 0.0
    %4366 = vmatpush1.msra.mxu0 0.0
    %4367 = vmatprep.subr.mxu0 0.0
    %4368 = vmatpush1.msra.mxu0 0.0
    %4369 = vmatprep.subr.mxu0 0.0
    %4370 = vmatpush1.msra.mxu0 0.0
    %4371 = vmatprep.subr.mxu0 0.0
    %4372 = vmatpush1.msra.mxu0 0.0
    %4373 = vmatprep.subr.mxu0 0.0
    %4374 = vmatpush1.msra.mxu0 0.0
    %4375 = vmatprep.subr.mxu0 0.0
    %4376 = vmatpush1.msra.mxu0 0.0
    %4377 = vmatprep.subr.mxu0 0.0
    %4378 = vmatpush1.msra.mxu0 0.0
    %4379 = vmatprep.subr.mxu0 0.0
    %4380 = vmatpush1.msra.mxu0 0.0
    %4381 = vmatprep.subr.mxu0 0.0
    %4382 = vmatpush1.msra.mxu0 0.0
    %4383 = vmatprep.subr.mxu0 0.0
    %4384 = vmatpush1.msra.mxu0 0.0
    %4385 = vmatprep.subr.mxu0 0.0
    %4386 = vmatpush1.msra.mxu0 0.0
    %4387 = vmatprep.mubr.f32.mxu0 0.0
    %4388 = vmatmul.mubr.f32.gmra.mrb[0].mxu0 %v4312
    %v4389 = vpop.f32.mrb[0].mxu0
    %v4390 = vadd.f32 %v4309, %v4389
    %v4391 = vpop.f32.mrb[0].mxu0
    %4392 = vmatprep.mubr.f32.mxu0 0.0
    %4393 = vmatmul.mubr.f32.gmra.mrb[0].mxu0 %v4315
    %v4394 = vpop.f32.mrb[0].mxu0
    %v4395 = vadd.f32 %v4309, %v4394
    %v4396 = vpop.f32.mrb[0].mxu0
    %4397 = vmatprep.mubr.f32.mxu0 0.0
    %4398 = vmatmul.mubr.f32.gmra.mrb[0].mxu0 %v4318
    %v4399 = vpop.f32.mrb[0].mxu0
    %v4400 = vadd.f32 %v4309, %v4399
    %v4401 = vpop.f32.mrb[0].mxu0
    %4402 = vmatprep.mubr.f32.mxu0 0.0
    %4403 = vmatmul.mubr.f32.gmra.mrb[0].mxu0 %v4321
    %v4404 = vpop.f32.mrb[0].mxu0
    %v4405 = vadd.f32 %v4309, %v4404
    %v4406 = vpop.f32.mrb[0].mxu0
    %4407 = vdwg.mxu0
    %v4408 = vmul.f32 %v4390, 0.5
    %v4409 = vmul.f32 %v4395, 0.5
    %v4410 = vmul.f32 %v4400, 0.5
    %v4411 = vmul.f32 %v4405, 0.5
    %v4412 = vmul.f32 %v4390, 0.70710677
    %v4413 = vmul.f32 %v4395, 0.70710677
    %v4414 = vmul.f32 %v4400, 0.70710677
    %v4415 = vmul.f32 %v4405, 0.70710677
    %vm4416 = vcmp.ge.f32.partialorder %v4412, 0.0
    %vm4417 = vcmp.ge.f32.partialorder %v4413, 0.0
    %vm4418 = vcmp.ge.f32.partialorder %v4414, 0.0
    %vm4419 = vcmp.ge.f32.partialorder %v4415, 0.0
    %v4420 = vsel %vm4416, 1.0, -1.0
    %v4421 = vsel %vm4417, 1.0, -1.0
    %v4422 = vsel %vm4418, 1.0, -1.0
    %v4423 = vsel %vm4419, 1.0, -1.0
    %v4424 = vand.u32 2147483647, %v4412
    %v4425 = vand.u32 2147483647, %v4413
    %v4426 = vand.u32 2147483647, %v4414
    %v4427 = vand.u32 2147483647, %v4415
    %v4428 = vmul.f32 %v4424, 0.3275911
    %v4429 = vmul.f32 %v4425, 0.3275911
    %v4430 = vmul.f32 %v4426, 0.3275911
    %v4431 = vmul.f32 %v4427, 0.3275911
    %v4432 = vadd.f32 %v4428, 1.0
    %v4433 = vadd.f32 %v4429, 1.0
    %v4434 = vadd.f32 %v4430, 1.0
    %v4435 = vadd.f32 %v4431, 1.0
    %v4436 = vrcp.pop %v4432
    %v4437 = vrcp.pop %v4433
    %v4438 = vrcp.pop %v4434
    %v4439 = vrcp.pop %v4435
    %v4440 = vmul.f32 %v4436, 1.0614054
    %v4441 = vmul.f32 %v4437, 1.0614054
    %v4442 = vmul.f32 %v4438, 1.0614054
    %v4443 = vmul.f32 %v4439, 1.0614054
    %v4444 = vadd.f32 %v4440, -1.4531521
    %v4445 = vadd.f32 %v4441, -1.4531521
    %v4446 = vadd.f32 %v4442, -1.4531521
    %v4447 = vadd.f32 %v4443, -1.4531521
    %v4448 = vmul.f32 %v4436, %v4444
    %v4449 = vmul.f32 %v4437, %v4445
    %v4450 = vmul.f32 %v4438, %v4446
    %v4451 = vmul.f32 %v4439, %v4447
    %v4452 = vadd.f32 %v4448, 1.4214138
    %v4453 = vadd.f32 %v4449, 1.4214138
    %v4454 = vadd.f32 %v4450, 1.4214138
    %v4455 = vadd.f32 %v4451, 1.4214138
    %v4456 = vmul.f32 %v4436, %v4452
    %v4457 = vmul.f32 %v4437, %v4453
    %v4458 = vmul.f32 %v4438, %v4454
    %v4459 = vmul.f32 %v4439, %v4455
    %v4460 = vadd.f32 %v4456, -0.28449672
    %v4461 = vadd.f32 %v4457, -0.28449672
    %v4462 = vadd.f32 %v4458, -0.28449672
    %v4463 = vadd.f32 %v4459, -0.28449672
    %v4464 = vmul.f32 %v4436, %v4460
    %v4465 = vmul.f32 %v4437, %v4461
    %v4466 = vmul.f32 %v4438, %v4462
    %v4467 = vmul.f32 %v4439, %v4463
    %v4468 = vadd.f32 %v4464, 0.2548296
    %v4469 = vadd.f32 %v4465, 0.2548296
    %v4470 = vadd.f32 %v4466, 0.2548296
    %v4471 = vadd.f32 %v4467, 0.2548296
    %v4472 = vmul.f32 %v4436, %v4468
    %v4473 = vmul.f32 %v4437, %v4469
    %v4474 = vmul.f32 %v4438, %v4470
    %v4475 = vmul.f32 %v4439, %v4471
    %v4476 = vsub.f32 0.0, %v4424
    %v4477 = vsub.f32 0.0, %v4425
    %v4478 = vsub.f32 0.0, %v4426
    %v4479 = vsub.f32 0.0, %v4427
    %v4480 = vmul.f32 %v4476, %v4424
    %v4481 = vmul.f32 %v4477, %v4425
    %v4482 = vmul.f32 %v4478, %v4426
    %v4483 = vmul.f32 %v4479, %v4427
    %v4484 = vmul.f32 %v4480, 1.442695
    %v4485 = vpow.pop %v4484
    %v4486 = vmul.f32 %v4481, 1.442695
    %v4487 = vpow.pop %v4486
    %v4488 = vmul.f32 %v4482, 1.442695
    %v4489 = vpow.pop %v4488
    %v4490 = vmul.f32 %v4483, 1.442695
    %v4491 = vpow.pop %v4490
    %v4492 = vmul.f32 %v4472, %v4485
    %v4493 = vmul.f32 %v4473, %v4487
    %v4494 = vmul.f32 %v4474, %v4489
    %v4495 = vmul.f32 %v4475, %v4491
    %v4496 = vsub.f32 1.0, %v4492
    %v4497 = vsub.f32 1.0, %v4493
    %v4498 = vsub.f32 1.0, %v4494
    %v4499 = vsub.f32 1.0, %v4495
    %v4500 = vmul.f32 %v4420, %v4496
    %v4501 = vmul.f32 %v4421, %v4497
    %v4502 = vmul.f32 %v4422, %v4498
    %v4503 = vmul.f32 %v4423, %v4499
    %v4504 = vadd.f32 %v4500, 1.0
    %v4505 = vadd.f32 %v4501, 1.0
    %v4506 = vadd.f32 %v4502, 1.0
    %v4507 = vadd.f32 %v4503, 1.0
    %v4508 = vmul.f32 %v4408, %v4504
    %v4509 = vmul.f32 %v4409, %v4505
    %v4510 = vmul.f32 %v4410, %v4506
    %v4511 = vmul.f32 %v4411, %v4507
    %v4512 = vld [vmem:[%s11] sm:$0xff]
    %v4513 = vld [vmem:[%s11 + $0x8] sm:$0xff]
    %v4514 = vld [vmem:[%s11 + $0x10] sm:$0xff]
    %v4515 = vld [vmem:[%s11 + $0x18] sm:$0xff]
    %v4516 = vld [vmem:[%s11 + $0x20] sm:$0xff]
    %v4517 = vld [vmem:[%s11 + $0x28] sm:$0xff]
    %v4518 = vld [vmem:[%s11 + $0x30] sm:$0xff]
    %v4519 = vld [vmem:[%s11 + $0x38] sm:$0xff]
    %v4520 = vld [vmem:[%s12] sm:$0x1]
    %v4522 = vlaneseq
    %v4523 = vshrl.u32 %v4522, 7
    %v4524 = vsub.s32 0, %v4523
    %v4525 = vrot.slane %v4520, %v4524
    %vm4527 = vcmask 523264
    %v4529 = vsel %vm4527, %v4508, 0
    %v4532 = vsel %vm4527, %v4509, 0
    %v4535 = vsel %vm4527, %v4510, 0
    %v4538 = vsel %vm4527, %v4511, 0
    %4540 = vmatprep.subr.mxu0 0.0
    %4541 = vmatpush1.msra.mxu0 %v4512
    %4542 = vmatprep.subr.mxu0 0.0
    %4543 = vmatpush1.msra.mxu0 %v4513
    %4544 = vmatprep.subr.mxu0 0.0
    %4545 = vmatpush1.msra.mxu0 %v4514
    %4546 = vmatprep.subr.mxu0 0.0
    %4547 = vmatpush1.msra.mxu0 %v4515
    %4548 = vmatprep.subr.mxu0 0.0
    %4549 = vmatpush1.msra.mxu0 %v4516
    %4550 = vmatprep.subr.mxu0 0.0
    %4551 = vmatpush1.msra.mxu0 %v4517
    %4552 = vmatprep.subr.mxu0 0.0
    %4553 = vmatpush1.msra.mxu0 %v4518
    %4554 = vmatprep.subr.mxu0 0.0
    %4555 = vmatpush1.msra.mxu0 %v4519
    %4556 = vmatprep.subr.mxu0 0.0
    %4557 = vmatpush1.msra.mxu0 0.0
    %4558 = vmatprep.subr.mxu0 0.0
    %4559 = vmatpush1.msra.mxu0 0.0
    %4560 = vmatprep.subr.mxu0 0.0
    %4561 = vmatpush1.msra.mxu0 0.0
    %4562 = vmatprep.subr.mxu0 0.0
    %4563 = vmatpush1.msra.mxu0 0.0
    %4564 = vmatprep.subr.mxu0 0.0
    %4565 = vmatpush1.msra.mxu0 0.0
    %4566 = vmatprep.subr.mxu0 0.0
    %4567 = vmatpush1.msra.mxu0 0.0
    %4568 = vmatprep.subr.mxu0 0.0
    %4569 = vmatpush1.msra.mxu0 0.0
    %4570 = vmatprep.subr.mxu0 0.0
    %4571 = vmatpush1.msra.mxu0 0.0
    %4572 = vmatprep.subr.mxu0 0.0
    %4573 = vmatpush1.msra.mxu0 0.0
    %4574 = vmatprep.subr.mxu0 0.0
    %4575 = vmatpush1.msra.mxu0 0.0
    %4576 = vmatprep.subr.mxu0 0.0
    %4577 = vmatpush1.msra.mxu0 0.0
    %4578 = vmatprep.subr.mxu0 0.0
    %4579 = vmatpush1.msra.mxu0 0.0
    %4580 = vmatprep.subr.mxu0 0.0
    %4581 = vmatpush1.msra.mxu0 0.0
    %4582 = vmatprep.subr.mxu0 0.0
    %4583 = vmatpush1.msra.mxu0 0.0
    %4584 = vmatprep.subr.mxu0 0.0
    %4585 = vmatpush1.msra.mxu0 0.0
    %4586 = vmatprep.subr.mxu0 0.0
    %4587 = vmatpush1.msra.mxu0 0.0
    %4588 = vmatprep.subr.mxu0 0.0
    %4589 = vmatpush1.msra.mxu0 0.0
    %4590 = vmatprep.subr.mxu0 0.0
    %4591 = vmatpush1.msra.mxu0 0.0
    %4592 = vmatprep.subr.mxu0 0.0
    %4593 = vmatpush1.msra.mxu0 0.0
    %4594 = vmatprep.subr.mxu0 0.0
    %4595 = vmatpush1.msra.mxu0 0.0
    %4596 = vmatprep.subr.mxu0 0.0
    %4597 = vmatpush1.msra.mxu0 0.0
    %4598 = vmatprep.subr.mxu0 0.0
    %4599 = vmatpush1.msra.mxu0 0.0
    %4600 = vmatprep.subr.mxu0 0.0
    %4601 = vmatpush1.msra.mxu0 0.0
    %4602 = vmatprep.subr.mxu0 0.0
    %4603 = vmatpush1.msra.mxu0 0.0
    %4604 = vmatprep.mubr.f32.mxu0 0.0
    %4605 = vmatmul.mubr.f32.gmra.mrb[0].mxu0 %v4529
    %v4606 = vpop.f32.mrb[0].mxu0
    %v4607 = vadd.f32 %v4525, %v4606
    %v4608 = vpop.f32.mrb[0].mxu0
    %4609 = vmatprep.mubr.f32.mxu0 0.0
    %4610 = vmatmul.mubr.f32.gmra.mrb[0].mxu0 %v4532
    %v4611 = vpop.f32.mrb[0].mxu0
    %v4612 = vadd.f32 %v4525, %v4611
    %v4613 = vpop.f32.mrb[0].mxu0
    %4614 = vmatprep.mubr.f32.mxu0 0.0
    %4615 = vmatmul.mubr.f32.gmra.mrb[0].mxu0 %v4535
    %v4616 = vpop.f32.mrb[0].mxu0
    %v4617 = vadd.f32 %v4525, %v4616
    %v4618 = vpop.f32.mrb[0].mxu0
    %4619 = vmatprep.mubr.f32.mxu0 0.0
    %4620 = vmatmul.mubr.f32.gmra.mrb[0].mxu0 %v4538
    %v4621 = vpop.f32.mrb[0].mxu0
    %v4622 = vadd.f32 %v4525, %v4621
    %v4623 = vpop.f32.mrb[0].mxu0
    %4624 = vdwg.mxu0
    %v4625 = vadd.f32 %v4244, %v4607
    %v4626 = vadd.f32 %v4245, %v4612
    %v4627 = vadd.f32 %v4246, %v4617
    %v4628 = vadd.f32 %v4247, %v4622
    %4629 = vst.msk [vmem:[#allocation2] sm:$0xff] %vm49, %v4625
    %4630 = vst.msk [vmem:[#allocation2 + $0x8] sm:$0xff] %vm49, %v4626
    %4631 = vst.msk [vmem:[#allocation2 + $0x10] sm:$0xff] %vm49, %v4627
    %4632 = vst.msk [vmem:[#allocation2 + $0x18] sm:$0xff] %vm49, %v4628
    // Predicated region
    $region54: #{tpu_custom_call.1} parent=1 // pred_check
      _
    $region55: #{tpu_custom_call.1} parent=1 // pred_check_branch
      %4634 = sbr.rel (0) target = $region57
    $region56: #{tpu_custom_call.1} parent=1 // pred_region
      %s4636 = ssub.s32 512, 512
      %4637 = vsyncadd [#allocation3], %s4636
      %s4638 = sshll.u32 [#allocation2], 4
      %s4639 = int_to_ptr.vmem [resolvable:$true] %s4638
      %4644 = dma.vmem_to_hbm [thread:$0]  %s4639, 512, %s13, [#allocation3], 128, 128, 8
    $region57: #{tpu_custom_call.1} parent=1 // pred_fallthru
      _
    // Predicated region
    $region58: #{tpu_custom_call.1} parent=1 // pred_check
      _
    $region59: #{tpu_custom_call.1} parent=1 // pred_check_branch
      %4646 = sbr.rel (0) target = $region61
    $region60: #{tpu_custom_call.1} parent=1 // pred_region
      %4647 = dma.done [#allocation3], 512
    $region61: #{tpu_custom_call.1} parent=1 // pred_fallthru
      _
    %4648 = vsyncpa [#allocation3], 1

</llo_original>
